<compile_context>
chip_gen: v6e
topology: v6e:2x2x1
jax: 0.10.0
libtpu: 0.0.40
codegen_flags: <defaults>
</compile_context>

<pallas_src>
import numpy as np
import jax
import jax.numpy as jnp
from jax.experimental import pallas as pl
from jax.experimental.pallas import tpu as pltpu

BN_EPS = 1e-5


def _make_deepfm_kernel(TB, F, FVP):
    def kernel(idx_ref,      # (TB, F)    int32   streamed per grid step
               c_ref,        # (1, FVP)   f32     lin_table - 0.5*rowsum(emb^2), tiled per field
               et_ref,       # (FVP, E)   bf16    embedding table tiled per field
               w0_ref,       # (FVP, H0)  bf16    emb-table x (BN-folded) layer-0 weight
               b0_ref,       # (1, H0)    f32
               w1_ref,       # (H0, H1)   bf16    BN-folded layer-1 weight
               b1_ref,       # (1, H1)    f32
               w2_ref,       # (1, H1)    f32     output projection as a row vector
               b2_ref,       # (1, 1)     f32
               out_ref):     # (TB, 1)    f32
        gidx = idx_ref[...]                                           # (TB, F)

        # One-hot over the per-field-padded vocabulary (lane-aligned, no 16-lane slicing).
        col = jax.lax.broadcasted_iota(jnp.int32, (TB, FVP), 1)
        oh = jnp.zeros((TB, FVP), jnp.float32)
        for f in range(F):                                            # F is small & static
            oh = oh + (col == gidx[:, f:f + 1]).astype(jnp.float32)
        oh_bf = oh.astype(jnp.bfloat16)                               # exact 0/1 values

        # FM linear term minus 0.5*sum_of_square, fused into one row-vector reduce.
        lin_m_hssq = jnp.sum(oh * c_ref[...], axis=1, keepdims=True)  # (TB, 1)

        # FM 2nd-order: s = sum_f e_f via MXU, then 0.5*rowsum(s*s).
        s = jnp.dot(oh_bf, et_ref[...], preferred_element_type=jnp.float32)   # (TB, E)
        fm = lin_m_hssq + 0.5 * jnp.sum(s * s, axis=1, keepdims=True)          # (TB, 1)

        # Deep MLP (BN folded into weights; embedding gather folded into w0).
        # TODO(synk): Dropout is identity at inference; training-mode BN not supported here.
        h = jnp.dot(oh_bf, w0_ref[...], preferred_element_type=jnp.float32) + b0_ref[...]
        h = jnp.maximum(h, 0.0)
        h = jnp.dot(h.astype(jnp.bfloat16), w1_ref[...],
                    preferred_element_type=jnp.float32) + b1_ref[...]
        h = jnp.maximum(h, 0.0)
        mlp = jnp.sum(h * w2_ref[...], axis=1, keepdims=True) + b2_ref[...]    # (TB, 1)

        out_ref[...] = jax.nn.sigmoid(fm + mlp)

    return kernel


def deepfm_forward(x, params, field_dims, embed_dim, *, tile_b=128):
    """x: (B, F) int32 per-field indices. Returns (B,) predicted ratings."""
    B, F = x.shape
    E = embed_dim
    VOCAB = int(sum(field_dims))
    VP = ((VOCAB + 127) // 128) * 128            # per-field lane-padded vocab
    FVP = F * VP
    # TODO(synk): in-VMEM table lookup assumes sum(field_dims) fits VMEM; for huge
    # vocabularies keep an XLA gather (or scalar-prefetch DMA gather) instead.

    # Global (offset + per-field shift) indices; only this streams from HBM.
    offsets = np.array((0, *np.cumsum(field_dims)[:-1]), dtype=np.int32)
    shift = offsets + np.arange(F, dtype=np.int32) * VP
    gidx = x.astype(jnp.int32) + jnp.asarray(shift)[None, :]          # (B, F)

    Bp = ((B + tile_b - 1) // tile_b) * tile_b
    if Bp != B:
        gidx = jnp.pad(gidx, ((0, Bp - B), (0, 0)))                   # pad rows are harmless

    # ---- tiny one-time constant prep (plain JAX) ----
    emb = params["emb_table"].astype(jnp.float32)                     # (VOCAB, E)
    lin_t = params["lin_table"].astype(jnp.float32)[:, 0]             # (VOCAB,)
    emb_p = jnp.pad(emb, ((0, VP - VOCAB), (0, 0)))                   # (VP, E)
    lin_p = jnp.pad(lin_t, (0, VP - VOCAB))                           # (VP,)
    esq_p = jnp.sum(emb_p * emb_p, axis=1)                            # (VP,)

    emb_tiled = jnp.tile(emb_p, (F, 1)).astype(jnp.bfloat16)          # (FVP, E)
    c_row = (jnp.tile(lin_p, (F,)) - 0.5 * jnp.tile(esq_p, (F,)))[None, :]  # (1, FVP) f32

    def fold_bn(w, b, g, bt, m, v):
        sc = g * jax.lax.rsqrt(v + BN_EPS)
        return w * sc, (b - m) * sc + bt

    w0f, b0f = fold_bn(params["w0"], params["b0"], params["g0"],
                       params["bt0"], params["m0"], params["v0"])
    w1f, b1f = fold_bn(params["w1"], params["b1"], params["g1"],
                       params["bt1"], params["m1"], params["v1"])

    # Fold the embedding gather into layer-0: onehot @ (emb_p @ w0_field).
    w0_fused = jnp.concatenate(
        [emb_p @ w0f[f * E:(f + 1) * E, :] for f in range(F)], axis=0
    ).astype(jnp.bfloat16)                                            # (FVP, H0)
    w1_bf = w1f.astype(jnp.bfloat16)                                  # (H0, H1)
    w2_row = params["w2"][:, 0][None, :].astype(jnp.float32)          # (1, H1)
    b2 = params["b2"].astype(jnp.float32)                             # (1, 1)

    H0 = w0_fused.shape[1]
    H1 = w1_bf.shape[1]

    kernel = _make_deepfm_kernel(tile_b, F, FVP)
    const = lambda i: (0, 0)

    out = pl.pallas_call(
        kernel,
        out_shape=jax.ShapeDtypeStruct((Bp, 1), jnp.float32),
        grid_spec=pltpu.PrefetchScalarGridSpec(
            num_scalar_prefetch=0,
            grid=(Bp // tile_b,),
            in_specs=[
                pl.BlockSpec((tile_b, F), lambda i: (i, 0)),   # streamed indices
                pl.BlockSpec((1, FVP), const),                 # lin - 0.5*sumsq row
                pl.BlockSpec((FVP, E), const),                 # tiled emb table (bf16)
                pl.BlockSpec((FVP, H0), const),                # fused layer-0 weight
                pl.BlockSpec((1, H0), const),
                pl.BlockSpec((H0, H1), const),
                pl.BlockSpec((1, H1), const),
                pl.BlockSpec((1, H1), const),                  # w2 as row vector
                pl.BlockSpec((1, 1), const),
            ],
            out_specs=pl.BlockSpec((tile_b, 1), lambda i: (i, 0)),
        ),
        compiler_params=pltpu.CompilerParams(
            dimension_semantics=("parallel",)),
    )(gidx, c_row, emb_tiled, w0_fused, b0f, w1_bf, b1f, w2_row, b2)

    return out[:B, 0]


def deepfm_reference(x, params, field_dims, embed_dim):
    """Pure-JAX f32 reference mirroring the PyTorch forward (eval mode)."""
    B, F = x.shape
    offsets = jnp.asarray(np.array((0, *np.cumsum(field_dims)[:-1]), dtype=np.int32))
    idx = x + offsets[None, :]
    emb_x = params["emb_table"][idx]                                  # (B, F, E)
    lin = jnp.sum(params["lin_table"][idx], axis=1)                   # (B, 1)

    sq_of_sum = jnp.sum(emb_x, axis=1) ** 2
    sum_of_sq = jnp.sum(emb_x ** 2, axis=1)
    ix = 0.5 * jnp.sum(sq_of_sum - sum_of_sq, axis=1, keepdims=True)

    h = emb_x.reshape(B, F * embed_dim)
    for i in (0, 1):
        h = h @ params[f"w{i}"] + params[f"b{i}"]
        h = params[f"g{i}"] * (h - params[f"m{i}"]) * jax.lax.rsqrt(
            params[f"v{i}"] + BN_EPS) + params[f"bt{i}"]
        h = jnp.maximum(h, 0.0)
    mlp_out = h @ params["w2"] + params["b2"]
    return jax.nn.sigmoid((lin + ix + mlp_out)[:, 0])


def init_params(key, field_dims, embed_dim, mlp_dims):
    total = int(sum(field_dims))
    F = len(field_dims)
    d_in = F * embed_dim
    ks = jax.random.split(key, 8)
    params = {
        "emb_table": 0.01 * jax.random.normal(ks[0], (total, embed_dim), jnp.float32),
        "lin_table": 0.01 * jax.random.normal(ks[1], (total, 1), jnp.float32),
    }
    dims = [d_in] + list(mlp_dims)
    for i in range(len(mlp_dims)):
        params[f"w{i}"] = 0.01 * jax.random.normal(ks[2 + i], (dims[i], dims[i + 1]), jnp.float32)
        params[f"b{i}"] = jnp.zeros((1, dims[i + 1]), jnp.float32)
        params[f"g{i}"] = jnp.ones((1, dims[i + 1]), jnp.float32)
        params[f"bt{i}"] = jnp.zeros((1, dims[i + 1]), jnp.float32)
        params[f"m{i}"] = jnp.zeros((1, dims[i + 1]), jnp.float32)
        params[f"v{i}"] = jnp.ones((1, dims[i + 1]), jnp.float32)
    params["w2"] = 0.01 * jax.random.normal(ks[6], (dims[-1], 1), jnp.float32)
    params["b2"] = jnp.zeros((1, 1), jnp.float32)
    return params


if __name__ == "__main__":
    field_dims = [10, 20, 30, 40]     # 4 fields, total vocab = 100
    embed_dim = 16
    mlp_dims = [64, 32]
    B = 200                           # exercises batch padding (tile = 128 -> 2 grid steps)

    key = jax.random.PRNGKey(0)
    kp, kx = jax.random.split(key)
    params = init_params(kp, field_dims, embed_dim, mlp_dims)

    cols = []
    kxs = jax.random.split(kx, len(field_dims))
    for f, fd in enumerate(field_dims):
        cols.append(jax.random.randint(kxs[f], (B,), 0, fd, dtype=jnp.int32))
    x = jnp.stack(cols, axis=1)       # (B, F) int32

    out = deepfm_forward(x, params, field_dims, embed_dim, tile_b=128)
    out = jax.block_until_ready(out)

    ref = deepfm_reference(x, params, field_dims, embed_dim)
    np.testing.assert_allclose(np.asarray(out), np.asarray(ref), rtol=2e-3, atol=2e-4)

    print("KERNEL_OK")
</pallas_src>

<mosaic_0001>
module attributes {stable_mosaic.version = 11 : i64} {
  func.func @kernel(%arg0: i32, %arg1: memref<128x4xi32, #tpu.memory_space<vmem>>, %arg2: memref<1x512xf32, #tpu.memory_space<vmem>>, %arg3: memref<512x16xbf16, #tpu.memory_space<vmem>>, %arg4: memref<512x64xbf16, #tpu.memory_space<vmem>>, %arg5: memref<1x64xf32, #tpu.memory_space<vmem>>, %arg6: memref<64x32xbf16, #tpu.memory_space<vmem>>, %arg7: memref<1x32xf32, #tpu.memory_space<vmem>>, %arg8: memref<1x32xf32, #tpu.memory_space<vmem>>, %arg9: memref<1x1xf32, #tpu.memory_space<vmem>>, %arg10: memref<128x1xf32, #tpu.memory_space<vmem>>) attributes {dimension_semantics = [#tpu.dimension_semantics<parallel>], iteration_bounds = array<i64: 2>, scalar_prefetch = 0 : i64, scratch_operands = 0 : i64, tpu.core_type = #tpu.core_type<tc>, window_params = [{transform_indices = @transform_0, window_bounds = array<i64: 128, 4>}, {pipeline_mode = #tpu.pipeline_mode<synchronous>, transform_indices = @transform_1, window_bounds = array<i64: 1, 512>}, {pipeline_mode = #tpu.pipeline_mode<synchronous>, transform_indices = @transform_2, window_bounds = array<i64: 512, 16>}, {pipeline_mode = #tpu.pipeline_mode<synchronous>, transform_indices = @transform_3, window_bounds = array<i64: 512, 64>}, {pipeline_mode = #tpu.pipeline_mode<synchronous>, transform_indices = @transform_4, window_bounds = array<i64: 1, 64>}, {pipeline_mode = #tpu.pipeline_mode<synchronous>, transform_indices = @transform_5, window_bounds = array<i64: 64, 32>}, {pipeline_mode = #tpu.pipeline_mode<synchronous>, transform_indices = @transform_6, window_bounds = array<i64: 1, 32>}, {pipeline_mode = #tpu.pipeline_mode<synchronous>, transform_indices = @transform_7, window_bounds = array<i64: 1, 32>}, {pipeline_mode = #tpu.pipeline_mode<synchronous>, transform_indices = @transform_8, window_bounds = array<i64: 1, 1>}, {transform_indices = @transform_9, window_bounds = array<i64: 128, 1>}]} {
    %c0 = arith.constant 0 : index
    %c0_0 = arith.constant 0 : index
    %0 = vector.load %arg1[%c0, %c0_0] : memref<128x4xi32, #tpu.memory_space<vmem>>, vector<128x4xi32>
    %1 = tpu.iota {dimensions = array<i32: 1>} : vector<128x512xi32>
    %cst = arith.constant 0.000000e+00 : f32
    %2 = vector.broadcast %cst : f32 to vector<128x512xf32>
    %3 = vector.extract_strided_slice %0 {offsets = [0, 0], sizes = [128, 1], strides = [1, 1]} : vector<128x4xi32> to vector<128x1xi32>
    %4 = vector.broadcast %3 : vector<128x1xi32> to vector<128x512xi32>
    %5 = arith.cmpi eq, %1, %4 : vector<128x512xi32>
    %6 = arith.extui %5 : vector<128x512xi1> to vector<128x512xi32>
    %7 = arith.sitofp %6 : vector<128x512xi32> to vector<128x512xf32>
    %8 = arith.addf %2, %7 : vector<128x512xf32>
    %9 = vector.extract_strided_slice %0 {offsets = [0, 1], sizes = [128, 1], strides = [1, 1]} : vector<128x4xi32> to vector<128x1xi32>
    %10 = vector.broadcast %9 : vector<128x1xi32> to vector<128x512xi32>
    %11 = arith.cmpi eq, %1, %10 : vector<128x512xi32>
    %12 = arith.extui %11 : vector<128x512xi1> to vector<128x512xi32>
    %13 = arith.sitofp %12 : vector<128x512xi32> to vector<128x512xf32>
    %14 = arith.addf %8, %13 : vector<128x512xf32>
    %15 = vector.extract_strided_slice %0 {offsets = [0, 2], sizes = [128, 1], strides = [1, 1]} : vector<128x4xi32> to vector<128x1xi32>
    %16 = vector.broadcast %15 : vector<128x1xi32> to vector<128x512xi32>
    %17 = arith.cmpi eq, %1, %16 : vector<128x512xi32>
    %18 = arith.extui %17 : vector<128x512xi1> to vector<128x512xi32>
    %19 = arith.sitofp %18 : vector<128x512xi32> to vector<128x512xf32>
    %20 = arith.addf %14, %19 : vector<128x512xf32>
    %21 = vector.extract_strided_slice %0 {offsets = [0, 3], sizes = [128, 1], strides = [1, 1]} : vector<128x4xi32> to vector<128x1xi32>
    %22 = vector.broadcast %21 : vector<128x1xi32> to vector<128x512xi32>
    %23 = arith.cmpi eq, %1, %22 : vector<128x512xi32>
    %24 = arith.extui %23 : vector<128x512xi1> to vector<128x512xi32>
    %25 = arith.sitofp %24 : vector<128x512xi32> to vector<128x512xf32>
    %26 = arith.addf %20, %25 : vector<128x512xf32>
    %27 = arith.truncf %26 : vector<128x512xf32> to vector<128x512xbf16>
    %c0_1 = arith.constant 0 : index
    %c0_2 = arith.constant 0 : index
    %28 = vector.load %arg2[%c0_1, %c0_2] : memref<1x512xf32, #tpu.memory_space<vmem>>, vector<1x512xf32>
    %29 = vector.broadcast %28 : vector<1x512xf32> to vector<128x512xf32>
    %30 = arith.mulf %26, %29 : vector<128x512xf32>
    %cst_3 = arith.constant dense<0.000000e+00> : vector<128xf32>
    %31 = vector.multi_reduction <add>, %30, %cst_3 [1] : vector<128x512xf32> to vector<128xf32>
    %32 = vector.shape_cast %31 : vector<128xf32> to vector<128x1xf32>
    %c0_4 = arith.constant 0 : index
    %c0_5 = arith.constant 0 : index
    %33 = vector.load %arg3[%c0_4, %c0_5] : memref<512x16xbf16, #tpu.memory_space<vmem>>, vector<512x16xbf16>
    %cst_6 = arith.constant dense<0.000000e+00> : vector<128x16xf32>
    %34 = tpu.matmul %27, %33, %cst_6 {dimension_numbers = #tpu.dot_dimension_numbers<[1], [0], [0], [1], [0, 0, 1, 1], [], []>} : vector<128x512xbf16>, vector<512x16xbf16>, vector<128x16xf32> -> vector<128x16xf32>
    %35 = arith.mulf %34, %34 : vector<128x16xf32>
    %cst_7 = arith.constant dense<0.000000e+00> : vector<128xf32>
    %36 = vector.multi_reduction <add>, %35, %cst_7 [1] : vector<128x16xf32> to vector<128xf32>
    %37 = vector.shape_cast %36 : vector<128xf32> to vector<128x1xf32>
    %cst_8 = arith.constant 5.000000e-01 : f32
    %38 = vector.broadcast %cst_8 : f32 to vector<128x1xf32>
    %39 = arith.mulf %38, %37 : vector<128x1xf32>
    %40 = arith.addf %32, %39 : vector<128x1xf32>
    %c0_9 = arith.constant 0 : index
    %c0_10 = arith.constant 0 : index
    %41 = vector.load %arg4[%c0_9, %c0_10] : memref<512x64xbf16, #tpu.memory_space<vmem>>, vector<512x64xbf16>
    %cst_11 = arith.constant dense<0.000000e+00> : vector<128x64xf32>
    %42 = tpu.matmul %27, %41, %cst_11 {dimension_numbers = #tpu.dot_dimension_numbers<[1], [0], [0], [1], [0, 0, 1, 1], [], []>} : vector<128x512xbf16>, vector<512x64xbf16>, vector<128x64xf32> -> vector<128x64xf32>
    %c0_12 = arith.constant 0 : index
    %c0_13 = arith.constant 0 : index
    %43 = vector.load %arg5[%c0_12, %c0_13] : memref<1x64xf32, #tpu.memory_space<vmem>>, vector<1x64xf32>
    %44 = vector.broadcast %43 : vector<1x64xf32> to vector<128x64xf32>
    %45 = arith.addf %42, %44 : vector<128x64xf32>
    %cst_14 = arith.constant 0.000000e+00 : f32
    %46 = vector.broadcast %cst_14 : f32 to vector<128x64xf32>
    %47 = arith.maximumf %45, %46 : vector<128x64xf32>
    %48 = arith.truncf %47 : vector<128x64xf32> to vector<128x64xbf16>
    %c0_15 = arith.constant 0 : index
    %c0_16 = arith.constant 0 : index
    %49 = vector.load %arg6[%c0_15, %c0_16] : memref<64x32xbf16, #tpu.memory_space<vmem>>, vector<64x32xbf16>
    %cst_17 = arith.constant dense<0.000000e+00> : vector<128x32xf32>
    %50 = tpu.matmul %48, %49, %cst_17 {dimension_numbers = #tpu.dot_dimension_numbers<[1], [0], [0], [1], [0, 0, 1, 1], [], []>} : vector<128x64xbf16>, vector<64x32xbf16>, vector<128x32xf32> -> vector<128x32xf32>
    %c0_18 = arith.constant 0 : index
    %c0_19 = arith.constant 0 : index
    %51 = vector.load %arg7[%c0_18, %c0_19] : memref<1x32xf32, #tpu.memory_space<vmem>>, vector<1x32xf32>
    %52 = vector.broadcast %51 : vector<1x32xf32> to vector<128x32xf32>
    %53 = arith.addf %50, %52 : vector<128x32xf32>
    %cst_20 = arith.constant 0.000000e+00 : f32
    %54 = vector.broadcast %cst_20 : f32 to vector<128x32xf32>
    %55 = arith.maximumf %53, %54 : vector<128x32xf32>
    %c0_21 = arith.constant 0 : index
    %c0_22 = arith.constant 0 : index
    %56 = vector.load %arg8[%c0_21, %c0_22] : memref<1x32xf32, #tpu.memory_space<vmem>>, vector<1x32xf32>
    %57 = vector.broadcast %56 : vector<1x32xf32> to vector<128x32xf32>
    %58 = arith.mulf %55, %57 : vector<128x32xf32>
    %cst_23 = arith.constant dense<0.000000e+00> : vector<128xf32>
    %59 = vector.multi_reduction <add>, %58, %cst_23 [1] : vector<128x32xf32> to vector<128xf32>
    %60 = vector.shape_cast %59 : vector<128xf32> to vector<128x1xf32>
    %c0_24 = arith.constant 0 : index
    %c0_25 = arith.constant 0 : index
    %61 = vector.load %arg9[%c0_24, %c0_25] : memref<1x1xf32, #tpu.memory_space<vmem>>, vector<1x1xf32>
    %62 = vector.broadcast %61 : vector<1x1xf32> to vector<128x1xf32>
    %63 = arith.addf %60, %62 : vector<128x1xf32>
    %64 = arith.addf %40, %63 : vector<128x1xf32>
    %65 = arith.negf %64 : vector<128x1xf32>
    %66 = math.exp %65 : vector<128x1xf32>
    %cst_26 = arith.constant 1.000000e+00 : f32
    %67 = vector.broadcast %cst_26 : f32 to vector<128x1xf32>
    %68 = arith.addf %67, %66 : vector<128x1xf32>
    %69 = arith.divf %67, %68 : vector<128x1xf32>
    %c0_27 = arith.constant 0 : index
    %c0_28 = arith.constant 0 : index
    %70 = vector.load %arg10[%c0_27, %c0_28] : memref<128x1xf32, #tpu.memory_space<vmem>>, vector<128x1xf32>
    tpu.vector_store %arg10[%c0_27, %c0_28], %69 {strides = array<i32>} : memref<128x1xf32, #tpu.memory_space<vmem>>, vector<128x1xf32>,
    return
  }
  func.func @transform_0(%arg0: i32) -> (i32, i32) {
    %c0_i32 = arith.constant 0 : i32
    %c0_i32_0 = arith.constant 0 : i32
    return %arg0, %c0_i32 : i32, i32
  }
  func.func @transform_1(%arg0: i32) -> (i32, i32) {
    %c0_i32 = arith.constant 0 : i32
    %c0_i32_0 = arith.constant 0 : i32
    %c0_i32_1 = arith.constant 0 : i32
    return %c0_i32, %c0_i32_0 : i32, i32
  }
  func.func @transform_2(%arg0: i32) -> (i32, i32) {
    %c0_i32 = arith.constant 0 : i32
    %c0_i32_0 = arith.constant 0 : i32
    %c0_i32_1 = arith.constant 0 : i32
    return %c0_i32, %c0_i32_0 : i32, i32
  }
  func.func @transform_3(%arg0: i32) -> (i32, i32) {
    %c0_i32 = arith.constant 0 : i32
    %c0_i32_0 = arith.constant 0 : i32
    %c0_i32_1 = arith.constant 0 : i32
    return %c0_i32, %c0_i32_0 : i32, i32
  }
  func.func @transform_4(%arg0: i32) -> (i32, i32) {
    %c0_i32 = arith.constant 0 : i32
    %c0_i32_0 = arith.constant 0 : i32
    %c0_i32_1 = arith.constant 0 : i32
    return %c0_i32, %c0_i32_0 : i32, i32
  }
  func.func @transform_5(%arg0: i32) -> (i32, i32) {
    %c0_i32 = arith.constant 0 : i32
    %c0_i32_0 = arith.constant 0 : i32
    %c0_i32_1 = arith.constant 0 : i32
    return %c0_i32, %c0_i32_0 : i32, i32
  }
  func.func @transform_6(%arg0: i32) -> (i32, i32) {
    %c0_i32 = arith.constant 0 : i32
    %c0_i32_0 = arith.constant 0 : i32
    %c0_i32_1 = arith.constant 0 : i32
    return %c0_i32, %c0_i32_0 : i32, i32
  }
  func.func @transform_7(%arg0: i32) -> (i32, i32) {
    %c0_i32 = arith.constant 0 : i32
    %c0_i32_0 = arith.constant 0 : i32
    %c0_i32_1 = arith.constant 0 : i32
    return %c0_i32, %c0_i32_0 : i32, i32
  }
  func.func @transform_8(%arg0: i32) -> (i32, i32) {
    %c0_i32 = arith.constant 0 : i32
    %c0_i32_0 = arith.constant 0 : i32
    %c0_i32_1 = arith.constant 0 : i32
    return %c0_i32, %c0_i32_0 : i32, i32
  }
  func.func @transform_9(%arg0: i32) -> (i32, i32) {
    %c0_i32 = arith.constant 0 : i32
    %c0_i32_0 = arith.constant 0 : i32
    return %arg0, %c0_i32 : i32, i32
  }
}

</mosaic_0001>

<llo_original>
// kernel: tpu_custom_call.1
$region0: #{tpu_custom_call.1}
  #allocation0 [shape = 'u32[]', space=smem, size = 0x4, offset = 0x4, fixed_abs, tag = 'smem constant byte address 0x4 - core index']
  #allocation1 [shape = 'u32[144,128]{1,0:T(1,128)}', space=vmem, size = 0x12000, scoped, tag = 'internal scratch']
  #allocation2 [shape = 'f32[1,1]{1,0:T(1,128)S(1)}', space=vmem, size = 0x200, scoped, tag = 'scoped memory for tpu_custom_call.1']
  %s0 = inlined_call_operand.vmem [shape: s32[256,4], index: 0, kind: input, shape index: {}]
  %s1 = inlined_call_operand.vmem [shape: f32[1,512], index: 1, kind: input, shape index: {}]
  %s2 = inlined_call_operand.vmem [shape: bf16[512,16], index: 2, kind: input, shape index: {}]
  %s3 = inlined_call_operand.vmem [shape: bf16[512,64], index: 3, kind: input, shape index: {}]
  %s4 = inlined_call_operand.vmem [shape: f32[1,64], index: 4, kind: input, shape index: {}]
  %s5 = inlined_call_operand.vmem [shape: bf16[64,32], index: 5, kind: input, shape index: {}]
  %s6 = inlined_call_operand.vmem [shape: f32[1,32], index: 6, kind: input, shape index: {}]
  %s7 = inlined_call_operand.vmem [shape: f32[1,32], index: 7, kind: input, shape index: {}]
  %s8 = inlined_call_operand.<no memory space> [shape: f32[1,1], index: 8, kind: input, shape index: {}]
  %s9 = inlined_call_operand.vmem [shape: f32[256,1], index: 9, kind: output, shape index: {}]
  %s10 = sld [smem:[#allocation0]]
  $region69: #{tpu_custom_call.1} parent=0
    _
  %s12 = ssub.s32 1, %s10
  %s13 = scalar_select 0, %s12, %s10
  %v14 = vstv %s8
  %15 = vst [vmem:[#allocation2] sm:$0x1] %v14
  loop: start=0, step=1, limit=4
  $region2: #{tpu_custom_call.1} parent=0 // loop_pre_header
    _
  $region3: #{tpu_custom_call.1} parent=0 // loop_header
    %s17 = sphi 0, %s21
    %p18 = scmp.ge.s32.totalorder %s17, 4
    %s27 = sphi 0, %s29
    %s30 = sphi 0, %s27
    %s31 = sphi 0, %s30
    %s47 = sphi 0, %s31
    %s51 = sphi 0, %s51
    %s53 = sphi 0, %s51
    %s54 = sphi 0, %s53
    %s68 = sphi 0, %s54
    %s72 = sphi 0, %s72
    %s74 = sphi 0, %s72
    %s75 = sphi 0, %s74
    %s89 = sphi 0, %s75
    %s93 = sphi 0, %s93
    %s95 = sphi 0, %s93
    %s96 = sphi 0, %s95
    %s110 = sphi 0, %s96
    %s114 = sphi 0, %s114
    %s116 = sphi 0, %s114
    %s117 = sphi 0, %s116
    %s131 = sphi 0, %s117
    %s135 = sphi 0, %s135
    %s137 = sphi 0, %s135
    %s138 = sphi 0, %s137
    %s152 = sphi 0, %s138
    %s156 = sphi 0, %s156
    %s158 = sphi 0, %s156
    %s159 = sphi 0, %s158
    %s173 = sphi 0, %s159
    %s177 = sphi 0, %s177
    %s179 = sphi 0, %s177
    %s180 = sphi 0, %s179
    %s194 = sphi 0, %s180
    %s198 = sphi 0, %s198
    %s200 = sphi 0, %s198
    %s201 = sphi 0, %s200
    %s215 = sphi 0, %s201
    %s221 = sphi 0, %s223
    %s224 = sphi 0, %s221
    %s225 = sphi 0, %s224
    %s241 = sphi 0, %s225
  $region4: #{tpu_custom_call.1} parent=0 // loop_header_branch
    %20 = sbr.rel (%p18) target = $region8
  $region5: #{tpu_custom_call.1} parent=0 // loop_body
    %s22 = ssub.s32 %s17, 1
    %s23 = ssub.s32 %s17, 2
    %s24 = sadd.s32 %s17, 1
    %s25 = ssub.s32 %s17, %s24
    %p26 = scmp.eq.s32.totalorder %s25, 0
    %s28 = sadd.s32 %s27, 1
    %s29 = scalar_select %p26, %s27, %s28
    %p32 = pneg %p26
    %p33 = scmp.eq.s32.totalorder %s17, 1
    %p34 = por %p32, %p33
    %p35 = scmp.ne.s32.totalorder %s27, %s30
    %p36 = scmp.eq.s32.totalorder %s17, 0
    %p37 = por %p35, %p36
    %p38 = scmp.ne.s32.totalorder %s27, %s30
    %p39 = scmp.eq.s32.totalorder %s22, 1
    %p40 = por %p38, %p39
    %p41 = scmp.ne.s32.totalorder %s30, %s31
    %p42 = scmp.eq.s32.totalorder %s22, 0
    %p43 = por %p41, %p42
    %p44 = scmp.ne.s32.totalorder %s30, %s31
    %p45 = scmp.eq.s32.totalorder %s23, 1
    %p46 = por %p44, %p45
    %p48 = scmp.ne.s32.totalorder %s31, %s47
    %p49 = scmp.eq.s32.totalorder %s23, 0
    %p50 = por %p48, %p49
    %s52 = sadd.s32 %s51, 1
    %p55 = scmp.eq.s32.totalorder %s17, 1
    %p56 = scmp.ne.s32.totalorder %s51, %s53
    %p57 = scmp.eq.s32.totalorder %s17, 0
    %p58 = por %p56, %p57
    %p59 = scmp.ne.s32.totalorder %s51, %s53
    %p60 = scmp.eq.s32.totalorder %s22, 1
    %p61 = por %p59, %p60
    %p62 = scmp.ne.s32.totalorder %s53, %s54
    %p63 = scmp.eq.s32.totalorder %s22, 0
    %p64 = por %p62, %p63
    %p65 = scmp.ne.s32.totalorder %s53, %s54
    %p66 = scmp.eq.s32.totalorder %s23, 1
    %p67 = por %p65, %p66
    %p69 = scmp.ne.s32.totalorder %s54, %s68
    %p70 = scmp.eq.s32.totalorder %s23, 0
    %p71 = por %p69, %p70
    %s73 = sadd.s32 %s72, 1
    %p76 = scmp.eq.s32.totalorder %s17, 1
    %p77 = scmp.ne.s32.totalorder %s72, %s74
    %p78 = scmp.eq.s32.totalorder %s17, 0
    %p79 = por %p77, %p78
    %p80 = scmp.ne.s32.totalorder %s72, %s74
    %p81 = scmp.eq.s32.totalorder %s22, 1
    %p82 = por %p80, %p81
    %p83 = scmp.ne.s32.totalorder %s74, %s75
    %p84 = scmp.eq.s32.totalorder %s22, 0
    %p85 = por %p83, %p84
    %p86 = scmp.ne.s32.totalorder %s74, %s75
    %p87 = scmp.eq.s32.totalorder %s23, 1
    %p88 = por %p86, %p87
    %p90 = scmp.ne.s32.totalorder %s75, %s89
    %p91 = scmp.eq.s32.totalorder %s23, 0
    %p92 = por %p90, %p91
    %s94 = sadd.s32 %s93, 1
    %p97 = scmp.eq.s32.totalorder %s17, 1
    %p98 = scmp.ne.s32.totalorder %s93, %s95
    %p99 = scmp.eq.s32.totalorder %s17, 0
    %p100 = por %p98, %p99
    %p101 = scmp.ne.s32.totalorder %s93, %s95
    %p102 = scmp.eq.s32.totalorder %s22, 1
    %p103 = por %p101, %p102
    %p104 = scmp.ne.s32.totalorder %s95, %s96
    %p105 = scmp.eq.s32.totalorder %s22, 0
    %p106 = por %p104, %p105
    %p107 = scmp.ne.s32.totalorder %s95, %s96
    %p108 = scmp.eq.s32.totalorder %s23, 1
    %p109 = por %p107, %p108
    %p111 = scmp.ne.s32.totalorder %s96, %s110
    %p112 = scmp.eq.s32.totalorder %s23, 0
    %p113 = por %p111, %p112
    %s115 = sadd.s32 %s114, 1
    %p118 = scmp.eq.s32.totalorder %s17, 1
    %p119 = scmp.ne.s32.totalorder %s114, %s116
    %p120 = scmp.eq.s32.totalorder %s17, 0
    %p121 = por %p119, %p120
    %p122 = scmp.ne.s32.totalorder %s114, %s116
    %p123 = scmp.eq.s32.totalorder %s22, 1
    %p124 = por %p122, %p123
    %p125 = scmp.ne.s32.totalorder %s116, %s117
    %p126 = scmp.eq.s32.totalorder %s22, 0
    %p127 = por %p125, %p126
    %p128 = scmp.ne.s32.totalorder %s116, %s117
    %p129 = scmp.eq.s32.totalorder %s23, 1
    %p130 = por %p128, %p129
    %p132 = scmp.ne.s32.totalorder %s117, %s131
    %p133 = scmp.eq.s32.totalorder %s23, 0
    %p134 = por %p132, %p133
    %s136 = sadd.s32 %s135, 1
    %p139 = scmp.eq.s32.totalorder %s17, 1
    %p140 = scmp.ne.s32.totalorder %s135, %s137
    %p141 = scmp.eq.s32.totalorder %s17, 0
    %p142 = por %p140, %p141
    %p143 = scmp.ne.s32.totalorder %s135, %s137
    %p144 = scmp.eq.s32.totalorder %s22, 1
    %p145 = por %p143, %p144
    %p146 = scmp.ne.s32.totalorder %s137, %s138
    %p147 = scmp.eq.s32.totalorder %s22, 0
    %p148 = por %p146, %p147
    %p149 = scmp.ne.s32.totalorder %s137, %s138
    %p150 = scmp.eq.s32.totalorder %s23, 1
    %p151 = por %p149, %p150
    %p153 = scmp.ne.s32.totalorder %s138, %s152
    %p154 = scmp.eq.s32.totalorder %s23, 0
    %p155 = por %p153, %p154
    %s157 = sadd.s32 %s156, 1
    %p160 = scmp.eq.s32.totalorder %s17, 1
    %p161 = scmp.ne.s32.totalorder %s156, %s158
    %p162 = scmp.eq.s32.totalorder %s17, 0
    %p163 = por %p161, %p162
    %p164 = scmp.ne.s32.totalorder %s156, %s158
    %p165 = scmp.eq.s32.totalorder %s22, 1
    %p166 = por %p164, %p165
    %p167 = scmp.ne.s32.totalorder %s158, %s159
    %p168 = scmp.eq.s32.totalorder %s22, 0
    %p169 = por %p167, %p168
    %p170 = scmp.ne.s32.totalorder %s158, %s159
    %p171 = scmp.eq.s32.totalorder %s23, 1
    %p172 = por %p170, %p171
    %p174 = scmp.ne.s32.totalorder %s159, %s173
    %p175 = scmp.eq.s32.totalorder %s23, 0
    %p176 = por %p174, %p175
    %s178 = sadd.s32 %s177, 1
    %p181 = scmp.eq.s32.totalorder %s17, 1
    %p182 = scmp.ne.s32.totalorder %s177, %s179
    %p183 = scmp.eq.s32.totalorder %s17, 0
    %p184 = por %p182, %p183
    %p185 = scmp.ne.s32.totalorder %s177, %s179
    %p186 = scmp.eq.s32.totalorder %s22, 1
    %p187 = por %p185, %p186
    %p188 = scmp.ne.s32.totalorder %s179, %s180
    %p189 = scmp.eq.s32.totalorder %s22, 0
    %p190 = por %p188, %p189
    %p191 = scmp.ne.s32.totalorder %s179, %s180
    %p192 = scmp.eq.s32.totalorder %s23, 1
    %p193 = por %p191, %p192
    %p195 = scmp.ne.s32.totalorder %s180, %s194
    %p196 = scmp.eq.s32.totalorder %s23, 0
    %p197 = por %p195, %p196
    %s199 = sadd.s32 %s198, 1
    %p202 = scmp.eq.s32.totalorder %s17, 1
    %p203 = scmp.ne.s32.totalorder %s198, %s200
    %p204 = scmp.eq.s32.totalorder %s17, 0
    %p205 = por %p203, %p204
    %p206 = scmp.ne.s32.totalorder %s198, %s200
    %p207 = scmp.eq.s32.totalorder %s22, 1
    %p208 = por %p206, %p207
    %p209 = scmp.ne.s32.totalorder %s200, %s201
    %p210 = scmp.eq.s32.totalorder %s22, 0
    %p211 = por %p209, %p210
    %p212 = scmp.ne.s32.totalorder %s200, %s201
    %p213 = scmp.eq.s32.totalorder %s23, 1
    %p214 = por %p212, %p213
    %p216 = scmp.ne.s32.totalorder %s201, %s215
    %p217 = scmp.eq.s32.totalorder %s23, 0
    %p218 = por %p216, %p217
    %s219 = ssub.s32 %s17, %s24
    %p220 = scmp.eq.s32.totalorder %s219, 0
    %s222 = sadd.s32 %s221, 1
    %s223 = scalar_select %p220, %s221, %s222
    %p226 = pneg %p220
    %p227 = scmp.eq.s32.totalorder %s17, 1
    %p228 = por %p226, %p227
    %p229 = scmp.ne.s32.totalorder %s221, %s224
    %p230 = scmp.eq.s32.totalorder %s17, 0
    %p231 = por %p229, %p230
    %p232 = scmp.ne.s32.totalorder %s221, %s224
    %p233 = scmp.eq.s32.totalorder %s22, 1
    %p234 = por %p232, %p233
    %p235 = scmp.ne.s32.totalorder %s224, %s225
    %p236 = scmp.eq.s32.totalorder %s22, 0
    %p237 = por %p235, %p236
    %p238 = scmp.ne.s32.totalorder %s224, %s225
    %p239 = scmp.eq.s32.totalorder %s23, 1
    %p240 = por %p238, %p239
    %p242 = scmp.ne.s32.totalorder %s225, %s241
    %p243 = scmp.eq.s32.totalorder %s23, 0
    %p244 = por %p242, %p243
    %p245 = scmp.le.s32.totalorder 1, %s17
    %p246 = scmp.lt.s32.totalorder %s17, 3
    %p247 = pnand %p245, %p246
    %p248 = pneg %p247
    // Predicated region
    $region9: #{tpu_custom_call.1} parent=5 // pred_check
      _
    $region10: #{tpu_custom_call.1} parent=5 // pred_check_branch
      %250 = sbr.rel (%p247) target = $region12
    $region11: #{tpu_custom_call.1} parent=5 // pred_region
      %s251 = ssub.s32 %s17, 1
      // Predicated region
      $region13: #{tpu_custom_call.1} parent=11 // pred_check
        %p252 = pneg %p64
      $region14: #{tpu_custom_call.1} parent=11 // pred_check_branch
        %254 = sbr.rel (%p252) target = $region16
      $region15: #{tpu_custom_call.1} parent=11 // pred_region
        _
      $region16: #{tpu_custom_call.1} parent=11 // pred_fallthru
        _
      // Predicated region
      $region17: #{tpu_custom_call.1} parent=11 // pred_check
        %p255 = pneg %p85
      $region18: #{tpu_custom_call.1} parent=11 // pred_check_branch
        %257 = sbr.rel (%p255) target = $region20
      $region19: #{tpu_custom_call.1} parent=11 // pred_region
        _
      $region20: #{tpu_custom_call.1} parent=11 // pred_fallthru
        _
      // Predicated region
      $region21: #{tpu_custom_call.1} parent=11 // pred_check
        %p258 = pneg %p106
      $region22: #{tpu_custom_call.1} parent=11 // pred_check_branch
        %260 = sbr.rel (%p258) target = $region24
      $region23: #{tpu_custom_call.1} parent=11 // pred_region
        _
      $region24: #{tpu_custom_call.1} parent=11 // pred_fallthru
        _
      // Predicated region
      $region25: #{tpu_custom_call.1} parent=11 // pred_check
        %p261 = pneg %p127
      $region26: #{tpu_custom_call.1} parent=11 // pred_check_branch
        %263 = sbr.rel (%p261) target = $region28
      $region27: #{tpu_custom_call.1} parent=11 // pred_region
        _
      $region28: #{tpu_custom_call.1} parent=11 // pred_fallthru
        _
      // Predicated region
      $region29: #{tpu_custom_call.1} parent=11 // pred_check
        %p264 = pneg %p148
      $region30: #{tpu_custom_call.1} parent=11 // pred_check_branch
        %266 = sbr.rel (%p264) target = $region32
      $region31: #{tpu_custom_call.1} parent=11 // pred_region
        _
      $region32: #{tpu_custom_call.1} parent=11 // pred_fallthru
        _
      // Predicated region
      $region33: #{tpu_custom_call.1} parent=11 // pred_check
        %p267 = pneg %p169
      $region34: #{tpu_custom_call.1} parent=11 // pred_check_branch
        %269 = sbr.rel (%p267) target = $region36
      $region35: #{tpu_custom_call.1} parent=11 // pred_region
        _
      $region36: #{tpu_custom_call.1} parent=11 // pred_fallthru
        _
      // Predicated region
      $region37: #{tpu_custom_call.1} parent=11 // pred_check
        %p270 = pneg %p190
      $region38: #{tpu_custom_call.1} parent=11 // pred_check_branch
        %272 = sbr.rel (%p270) target = $region40
      $region39: #{tpu_custom_call.1} parent=11 // pred_region
        _
      $region40: #{tpu_custom_call.1} parent=11 // pred_fallthru
        _
      // Predicated region
      $region41: #{tpu_custom_call.1} parent=11 // pred_check
        %p273 = pneg %p211
      $region42: #{tpu_custom_call.1} parent=11 // pred_check_branch
        %275 = sbr.rel (%p273) target = $region44
      $region43: #{tpu_custom_call.1} parent=11 // pred_region
        _
      $region44: #{tpu_custom_call.1} parent=11 // pred_fallthru
        _
    $region12: #{tpu_custom_call.1} parent=5 // pred_fallthru
      _
    %p276 = scmp.lt.s32.totalorder %s17, 2
    // Predicated region
    $region45: #{tpu_custom_call.1} parent=5 // pred_check
      %p277 = pneg %p276
    $region46: #{tpu_custom_call.1} parent=5 // pred_check_branch
      %279 = sbr.rel (%p277) target = $region48
    $region47: #{tpu_custom_call.1} parent=5 // pred_region
      // Predicated region
      $region49: #{tpu_custom_call.1} parent=47 // pred_check
        %p280 = pneg %p37
      $region50: #{tpu_custom_call.1} parent=47 // pred_check_branch
        %282 = sbr.rel (%p280) target = $region52
      $region51: #{tpu_custom_call.1} parent=47 // pred_region
        %s283 = smul.u32 16, %s17
        %p284 = scmp.lt.s32.totalorder %s283, 31
        %s285 = scalar_select %p284, %s283, 31
        %s286 = smul.addr %s285, 8
        %s287 = scalar_lea.vmem %s0, %s286
        %s288 = smul.u32 16, %s17
      $region52: #{tpu_custom_call.1} parent=47 // pred_fallthru
        _
    $region48: #{tpu_custom_call.1} parent=5 // pred_fallthru
      _
    %p289 = scmp.le.s32.totalorder 1, %s17
    %p290 = scmp.lt.s32.totalorder %s17, 3
    %p291 = pnand %p289, %p290
    %p292 = pneg %p291
    // Predicated region
    $region53: #{tpu_custom_call.1} parent=5 // pred_check
      _
    $region54: #{tpu_custom_call.1} parent=5 // pred_check_branch
      %294 = sbr.rel (%p291) target = $region56
    $region55: #{tpu_custom_call.1} parent=5 // pred_region
      %s295 = ssub.s32 %s17, 1
      %s296 = smul.u32 16, %s22
      %p297 = scmp.lt.s32.totalorder %s296, 31
      %s298 = scalar_select %p297, %s296, 31
      %s299 = smul.addr %s298, 8
      %s300 = scalar_lea.vmem %s0, %s299
      %p301 = pneg %p43
      %p302 = pneg %p40
      %p303 = pneg %p64
      %p304 = pneg %p61
      %p305 = pneg %p85
      %p306 = pneg %p82
      %p307 = pneg %p106
      %p308 = pneg %p103
      %p309 = pneg %p127
      %p310 = pneg %p124
      %p311 = pneg %p148
      %p312 = pneg %p145
      %p313 = pneg %p169
      %p314 = pneg %p166
      %p315 = pneg %p190
      %p316 = pneg %p187
      %p317 = pneg %p211
      %p318 = pneg %p208
      %p319 = pneg %p237
      %p320 = pneg %p234
      %s321 = smul.u32 16, %s22
      %p322 = scmp.lt.s32.totalorder %s321, 31
      %s323 = scalar_select %p322, %s321, 31
      %s324 = smul.addr %s323, 8
      %s325 = scalar_lea.vmem %s9, %s324
      %s326 = smul.u32 16, %s22
      %p327 = scmp.lt.s32.totalorder %s326, 31
      %s328 = scalar_select %p327, %s326, 31
      %s329 = smul.addr %s328, 8
      %s330 = scalar_lea.vmem %s0, %s329
      %s331 = smul.u32 16, %s22
      %s332 = smul.u32 16, %s22
      %p333 = scmp.lt.s32.totalorder %s332, 31
      %s334 = scalar_select %p333, %s332, 31
      %s335 = smul.addr %s334, 8
      %s336 = scalar_lea.vmem %s9, %s335
      %s337 = smul.u32 16, %s22
      %v339 = vld [vmem:[%s330] sm:$0xff]
      %v340 = vld [vmem:[%s330 + $0x8] sm:$0xff]
      %v341 = vld [vmem:[%s330 + $0x10] sm:$0xff]
      %v342 = vld [vmem:[%s330 + $0x18] sm:$0xff]
      %v343 = vld [vmem:[%s330 + $0x20] sm:$0xff]
      %v344 = vld [vmem:[%s330 + $0x28] sm:$0xff]
      %v345 = vld [vmem:[%s330 + $0x30] sm:$0xff]
      %v346 = vld [vmem:[%s330 + $0x38] sm:$0xff]
      %v347 = vld [vmem:[%s330 + $0x40] sm:$0xff]
      %v348 = vld [vmem:[%s330 + $0x48] sm:$0xff]
      %v349 = vld [vmem:[%s330 + $0x50] sm:$0xff]
      %v350 = vld [vmem:[%s330 + $0x58] sm:$0xff]
      %v351 = vld [vmem:[%s330 + $0x60] sm:$0xff]
      %v352 = vld [vmem:[%s330 + $0x68] sm:$0xff]
      %v353 = vld [vmem:[%s330 + $0x70] sm:$0xff]
      %v354 = vld [vmem:[%s330 + $0x78] sm:$0xff]
      %v355 = vlaneseq
      %v356 = vand.u32 %v355, 127
      %v357 = vadd.s32 %v356, 128
      %v358 = vadd.s32 %v356, 256
      %v359 = vadd.s32 %v356, 384
      %360 = vset.pattern.permute.xlu0 0
      %361 = vperm.xlu0 %360, %v339
      %v362 = vpop.permute.xlu0 %361
      %363 = vset.pattern.permute.xlu0 0
      %364 = vperm.xlu0 %363, %v340
      %v365 = vpop.permute.xlu0 %364
      %366 = vset.pattern.permute.xlu0 0
      %367 = vperm.xlu0 %366, %v341
      %v368 = vpop.permute.xlu0 %367
      %369 = vset.pattern.permute.xlu0 0
      %370 = vperm.xlu0 %369, %v342
      %v371 = vpop.permute.xlu0 %370
      %372 = vset.pattern.permute.xlu0 0
      %373 = vperm.xlu0 %372, %v343
      %v374 = vpop.permute.xlu0 %373
      %375 = vset.pattern.permute.xlu0 0
      %376 = vperm.xlu0 %375, %v344
      %v377 = vpop.permute.xlu0 %376
      %378 = vset.pattern.permute.xlu0 0
      %379 = vperm.xlu0 %378, %v345
      %v380 = vpop.permute.xlu0 %379
      %381 = vset.pattern.permute.xlu0 0
      %382 = vperm.xlu0 %381, %v346
      %v383 = vpop.permute.xlu0 %382
      %384 = vset.pattern.permute.xlu0 0
      %385 = vperm.xlu0 %384, %v347
      %v386 = vpop.permute.xlu0 %385
      %387 = vset.pattern.permute.xlu0 0
      %388 = vperm.xlu0 %387, %v348
      %v389 = vpop.permute.xlu0 %388
      %390 = vset.pattern.permute.xlu0 0
      %391 = vperm.xlu0 %390, %v349
      %v392 = vpop.permute.xlu0 %391
      %393 = vset.pattern.permute.xlu0 0
      %394 = vperm.xlu0 %393, %v350
      %v395 = vpop.permute.xlu0 %394
      %396 = vset.pattern.permute.xlu0 0
      %397 = vperm.xlu0 %396, %v351
      %v398 = vpop.permute.xlu0 %397
      %399 = vset.pattern.permute.xlu0 0
      %400 = vperm.xlu0 %399, %v352
      %v401 = vpop.permute.xlu0 %400
      %402 = vset.pattern.permute.xlu0 0
      %403 = vperm.xlu0 %402, %v353
      %v404 = vpop.permute.xlu0 %403
      %405 = vset.pattern.permute.xlu0 0
      %406 = vperm.xlu0 %405, %v354
      %v407 = vpop.permute.xlu0 %406
      %vm408 = vcmp.eq.s32.totalorder %v356, %v362
      %vm409 = vcmp.eq.s32.totalorder %v357, %v362
      %vm410 = vcmp.eq.s32.totalorder %v358, %v362
      %vm411 = vcmp.eq.s32.totalorder %v359, %v362
      %vm412 = vcmp.eq.s32.totalorder %v356, %v365
      %vm413 = vcmp.eq.s32.totalorder %v357, %v365
      %vm414 = vcmp.eq.s32.totalorder %v358, %v365
      %vm415 = vcmp.eq.s32.totalorder %v359, %v365
      %vm416 = vcmp.eq.s32.totalorder %v356, %v368
      %vm417 = vcmp.eq.s32.totalorder %v357, %v368
      %vm418 = vcmp.eq.s32.totalorder %v358, %v368
      %vm419 = vcmp.eq.s32.totalorder %v359, %v368
      %vm420 = vcmp.eq.s32.totalorder %v356, %v371
      %vm421 = vcmp.eq.s32.totalorder %v357, %v371
      %vm422 = vcmp.eq.s32.totalorder %v358, %v371
      %vm423 = vcmp.eq.s32.totalorder %v359, %v371
      %vm424 = vcmp.eq.s32.totalorder %v356, %v374
      %vm425 = vcmp.eq.s32.totalorder %v357, %v374
      %vm426 = vcmp.eq.s32.totalorder %v358, %v374
      %vm427 = vcmp.eq.s32.totalorder %v359, %v374
      %vm428 = vcmp.eq.s32.totalorder %v356, %v377
      %vm429 = vcmp.eq.s32.totalorder %v357, %v377
      %vm430 = vcmp.eq.s32.totalorder %v358, %v377
      %vm431 = vcmp.eq.s32.totalorder %v359, %v377
      %vm432 = vcmp.eq.s32.totalorder %v356, %v380
      %vm433 = vcmp.eq.s32.totalorder %v357, %v380
      %vm434 = vcmp.eq.s32.totalorder %v358, %v380
      %vm435 = vcmp.eq.s32.totalorder %v359, %v380
      %vm436 = vcmp.eq.s32.totalorder %v356, %v383
      %vm437 = vcmp.eq.s32.totalorder %v357, %v383
      %vm438 = vcmp.eq.s32.totalorder %v358, %v383
      %vm439 = vcmp.eq.s32.totalorder %v359, %v383
      %vm440 = vcmp.eq.s32.totalorder %v356, %v386
      %vm441 = vcmp.eq.s32.totalorder %v357, %v386
      %vm442 = vcmp.eq.s32.totalorder %v358, %v386
      %vm443 = vcmp.eq.s32.totalorder %v359, %v386
      %vm444 = vcmp.eq.s32.totalorder %v356, %v389
      %vm445 = vcmp.eq.s32.totalorder %v357, %v389
      %vm446 = vcmp.eq.s32.totalorder %v358, %v389
      %vm447 = vcmp.eq.s32.totalorder %v359, %v389
      %vm448 = vcmp.eq.s32.totalorder %v356, %v392
      %vm449 = vcmp.eq.s32.totalorder %v357, %v392
      %vm450 = vcmp.eq.s32.totalorder %v358, %v392
      %vm451 = vcmp.eq.s32.totalorder %v359, %v392
      %vm452 = vcmp.eq.s32.totalorder %v356, %v395
      %vm453 = vcmp.eq.s32.totalorder %v357, %v395
      %vm454 = vcmp.eq.s32.totalorder %v358, %v395
      %vm455 = vcmp.eq.s32.totalorder %v359, %v395
      %vm456 = vcmp.eq.s32.totalorder %v356, %v398
      %vm457 = vcmp.eq.s32.totalorder %v357, %v398
      %vm458 = vcmp.eq.s32.totalorder %v358, %v398
      %vm459 = vcmp.eq.s32.totalorder %v359, %v398
      %vm460 = vcmp.eq.s32.totalorder %v356, %v401
      %vm461 = vcmp.eq.s32.totalorder %v357, %v401
      %vm462 = vcmp.eq.s32.totalorder %v358, %v401
      %vm463 = vcmp.eq.s32.totalorder %v359, %v401
      %vm464 = vcmp.eq.s32.totalorder %v356, %v404
      %vm465 = vcmp.eq.s32.totalorder %v357, %v404
      %vm466 = vcmp.eq.s32.totalorder %v358, %v404
      %vm467 = vcmp.eq.s32.totalorder %v359, %v404
      %vm468 = vcmp.eq.s32.totalorder %v356, %v407
      %vm469 = vcmp.eq.s32.totalorder %v357, %v407
      %vm470 = vcmp.eq.s32.totalorder %v358, %v407
      %vm471 = vcmp.eq.s32.totalorder %v359, %v407
      %v472 = vsel %vm408, 1, 0
      %v473 = vsel %vm409, 1, 0
      %v474 = vsel %vm410, 1, 0
      %v475 = vsel %vm411, 1, 0
      %v476 = vsel %vm412, 1, 0
      %v477 = vsel %vm413, 1, 0
      %v478 = vsel %vm414, 1, 0
      %v479 = vsel %vm415, 1, 0
      %v480 = vsel %vm416, 1, 0
      %v481 = vsel %vm417, 1, 0
      %v482 = vsel %vm418, 1, 0
      %v483 = vsel %vm419, 1, 0
      %v484 = vsel %vm420, 1, 0
      %v485 = vsel %vm421, 1, 0
      %v486 = vsel %vm422, 1, 0
      %v487 = vsel %vm423, 1, 0
      %v488 = vsel %vm424, 1, 0
      %v489 = vsel %vm425, 1, 0
      %v490 = vsel %vm426, 1, 0
      %v491 = vsel %vm427, 1, 0
      %v492 = vsel %vm428, 1, 0
      %v493 = vsel %vm429, 1, 0
      %v494 = vsel %vm430, 1, 0
      %v495 = vsel %vm431, 1, 0
      %v496 = vsel %vm432, 1, 0
      %v497 = vsel %vm433, 1, 0
      %v498 = vsel %vm434, 1, 0
      %v499 = vsel %vm435, 1, 0
      %v500 = vsel %vm436, 1, 0
      %v501 = vsel %vm437, 1, 0
      %v502 = vsel %vm438, 1, 0
      %v503 = vsel %vm439, 1, 0
      %v504 = vsel %vm440, 1, 0
      %v505 = vsel %vm441, 1, 0
      %v506 = vsel %vm442, 1, 0
      %v507 = vsel %vm443, 1, 0
      %v508 = vsel %vm444, 1, 0
      %v509 = vsel %vm445, 1, 0
      %v510 = vsel %vm446, 1, 0
      %v511 = vsel %vm447, 1, 0
      %v512 = vsel %vm448, 1, 0
      %v513 = vsel %vm449, 1, 0
      %v514 = vsel %vm450, 1, 0
      %v515 = vsel %vm451, 1, 0
      %v516 = vsel %vm452, 1, 0
      %v517 = vsel %vm453, 1, 0
      %v518 = vsel %vm454, 1, 0
      %v519 = vsel %vm455, 1, 0
      %v520 = vsel %vm456, 1, 0
      %v521 = vsel %vm457, 1, 0
      %v522 = vsel %vm458, 1, 0
      %v523 = vsel %vm459, 1, 0
      %v524 = vsel %vm460, 1, 0
      %v525 = vsel %vm461, 1, 0
      %v526 = vsel %vm462, 1, 0
      %v527 = vsel %vm463, 1, 0
      %v528 = vsel %vm464, 1, 0
      %v529 = vsel %vm465, 1, 0
      %v530 = vsel %vm466, 1, 0
      %v531 = vsel %vm467, 1, 0
      %v532 = vsel %vm468, 1, 0
      %v533 = vsel %vm469, 1, 0
      %v534 = vsel %vm470, 1, 0
      %v535 = vsel %vm471, 1, 0
      %v536 = vcvt.s32.f32 %v472
      %v537 = vcvt.s32.f32 %v473
      %v538 = vcvt.s32.f32 %v474
      %v539 = vcvt.s32.f32 %v475
      %v540 = vcvt.s32.f32 %v476
      %v541 = vcvt.s32.f32 %v477
      %v542 = vcvt.s32.f32 %v478
      %v543 = vcvt.s32.f32 %v479
      %v544 = vcvt.s32.f32 %v480
      %v545 = vcvt.s32.f32 %v481
      %v546 = vcvt.s32.f32 %v482
      %v547 = vcvt.s32.f32 %v483
      %v548 = vcvt.s32.f32 %v484
      %v549 = vcvt.s32.f32 %v485
      %v550 = vcvt.s32.f32 %v486
      %v551 = vcvt.s32.f32 %v487
      %v552 = vcvt.s32.f32 %v488
      %v553 = vcvt.s32.f32 %v489
      %v554 = vcvt.s32.f32 %v490
      %v555 = vcvt.s32.f32 %v491
      %v556 = vcvt.s32.f32 %v492
      %v557 = vcvt.s32.f32 %v493
      %v558 = vcvt.s32.f32 %v494
      %v559 = vcvt.s32.f32 %v495
      %v560 = vcvt.s32.f32 %v496
      %v561 = vcvt.s32.f32 %v497
      %v562 = vcvt.s32.f32 %v498
      %v563 = vcvt.s32.f32 %v499
      %v564 = vcvt.s32.f32 %v500
      %v565 = vcvt.s32.f32 %v501
      %v566 = vcvt.s32.f32 %v502
      %v567 = vcvt.s32.f32 %v503
      %v568 = vcvt.s32.f32 %v504
      %v569 = vcvt.s32.f32 %v505
      %v570 = vcvt.s32.f32 %v506
      %v571 = vcvt.s32.f32 %v507
      %v572 = vcvt.s32.f32 %v508
      %v573 = vcvt.s32.f32 %v509
      %v574 = vcvt.s32.f32 %v510
      %v575 = vcvt.s32.f32 %v511
      %v576 = vcvt.s32.f32 %v512
      %v577 = vcvt.s32.f32 %v513
      %v578 = vcvt.s32.f32 %v514
      %v579 = vcvt.s32.f32 %v515
      %v580 = vcvt.s32.f32 %v516
      %v581 = vcvt.s32.f32 %v517
      %v582 = vcvt.s32.f32 %v518
      %v583 = vcvt.s32.f32 %v519
      %v584 = vcvt.s32.f32 %v520
      %v585 = vcvt.s32.f32 %v521
      %v586 = vcvt.s32.f32 %v522
      %v587 = vcvt.s32.f32 %v523
      %v588 = vcvt.s32.f32 %v524
      %v589 = vcvt.s32.f32 %v525
      %v590 = vcvt.s32.f32 %v526
      %v591 = vcvt.s32.f32 %v527
      %v592 = vcvt.s32.f32 %v528
      %v593 = vcvt.s32.f32 %v529
      %v594 = vcvt.s32.f32 %v530
      %v595 = vcvt.s32.f32 %v531
      %v596 = vcvt.s32.f32 %v532
      %v597 = vcvt.s32.f32 %v533
      %v598 = vcvt.s32.f32 %v534
      %v599 = vcvt.s32.f32 %v535
      %v600 = vadd.f32 %v536, 0.0
      %v601 = vadd.f32 %v537, 0.0
      %v602 = vadd.f32 %v538, 0.0
      %v603 = vadd.f32 %v539, 0.0
      %v604 = vadd.f32 %v540, 0.0
      %v605 = vadd.f32 %v541, 0.0
      %v606 = vadd.f32 %v542, 0.0
      %v607 = vadd.f32 %v543, 0.0
      %v608 = vadd.f32 %v544, 0.0
      %v609 = vadd.f32 %v545, 0.0
      %v610 = vadd.f32 %v546, 0.0
      %v611 = vadd.f32 %v547, 0.0
      %v612 = vadd.f32 %v548, 0.0
      %v613 = vadd.f32 %v549, 0.0
      %v614 = vadd.f32 %v550, 0.0
      %v615 = vadd.f32 %v551, 0.0
      %v616 = vadd.f32 %v552, 0.0
      %v617 = vadd.f32 %v553, 0.0
      %v618 = vadd.f32 %v554, 0.0
      %v619 = vadd.f32 %v555, 0.0
      %v620 = vadd.f32 %v556, 0.0
      %v621 = vadd.f32 %v557, 0.0
      %v622 = vadd.f32 %v558, 0.0
      %v623 = vadd.f32 %v559, 0.0
      %v624 = vadd.f32 %v560, 0.0
      %v625 = vadd.f32 %v561, 0.0
      %v626 = vadd.f32 %v562, 0.0
      %v627 = vadd.f32 %v563, 0.0
      %v628 = vadd.f32 %v564, 0.0
      %v629 = vadd.f32 %v565, 0.0
      %v630 = vadd.f32 %v566, 0.0
      %v631 = vadd.f32 %v567, 0.0
      %v632 = vadd.f32 %v568, 0.0
      %v633 = vadd.f32 %v569, 0.0
      %v634 = vadd.f32 %v570, 0.0
      %v635 = vadd.f32 %v571, 0.0
      %v636 = vadd.f32 %v572, 0.0
      %v637 = vadd.f32 %v573, 0.0
      %v638 = vadd.f32 %v574, 0.0
      %v639 = vadd.f32 %v575, 0.0
      %v640 = vadd.f32 %v576, 0.0
      %v641 = vadd.f32 %v577, 0.0
      %v642 = vadd.f32 %v578, 0.0
      %v643 = vadd.f32 %v579, 0.0
      %v644 = vadd.f32 %v580, 0.0
      %v645 = vadd.f32 %v581, 0.0
      %v646 = vadd.f32 %v582, 0.0
      %v647 = vadd.f32 %v583, 0.0
      %v648 = vadd.f32 %v584, 0.0
      %v649 = vadd.f32 %v585, 0.0
      %v650 = vadd.f32 %v586, 0.0
      %v651 = vadd.f32 %v587, 0.0
      %v652 = vadd.f32 %v588, 0.0
      %v653 = vadd.f32 %v589, 0.0
      %v654 = vadd.f32 %v590, 0.0
      %v655 = vadd.f32 %v591, 0.0
      %v656 = vadd.f32 %v592, 0.0
      %v657 = vadd.f32 %v593, 0.0
      %v658 = vadd.f32 %v594, 0.0
      %v659 = vadd.f32 %v595, 0.0
      %v660 = vadd.f32 %v596, 0.0
      %v661 = vadd.f32 %v597, 0.0
      %v662 = vadd.f32 %v598, 0.0
      %v663 = vadd.f32 %v599, 0.0
      %664 = vset.pattern.permute.xlu0 1
      %665 = vperm.xlu0 %664, %v339
      %v666 = vpop.permute.xlu0 %665
      %667 = vset.pattern.permute.xlu0 1
      %668 = vperm.xlu0 %667, %v340
      %v669 = vpop.permute.xlu0 %668
      %670 = vset.pattern.permute.xlu0 1
      %671 = vperm.xlu0 %670, %v341
      %v672 = vpop.permute.xlu0 %671
      %673 = vset.pattern.permute.xlu0 1
      %674 = vperm.xlu0 %673, %v342
      %v675 = vpop.permute.xlu0 %674
      %676 = vset.pattern.permute.xlu0 1
      %677 = vperm.xlu0 %676, %v343
      %v678 = vpop.permute.xlu0 %677
      %679 = vset.pattern.permute.xlu0 1
      %680 = vperm.xlu0 %679, %v344
      %v681 = vpop.permute.xlu0 %680
      %682 = vset.pattern.permute.xlu0 1
      %683 = vperm.xlu0 %682, %v345
      %v684 = vpop.permute.xlu0 %683
      %685 = vset.pattern.permute.xlu0 1
      %686 = vperm.xlu0 %685, %v346
      %v687 = vpop.permute.xlu0 %686
      %688 = vset.pattern.permute.xlu0 1
      %689 = vperm.xlu0 %688, %v347
      %v690 = vpop.permute.xlu0 %689
      %691 = vset.pattern.permute.xlu0 1
      %692 = vperm.xlu0 %691, %v348
      %v693 = vpop.permute.xlu0 %692
      %694 = vset.pattern.permute.xlu0 1
      %695 = vperm.xlu0 %694, %v349
      %v696 = vpop.permute.xlu0 %695
      %697 = vset.pattern.permute.xlu0 1
      %698 = vperm.xlu0 %697, %v350
      %v699 = vpop.permute.xlu0 %698
      %700 = vset.pattern.permute.xlu0 1
      %701 = vperm.xlu0 %700, %v351
      %v702 = vpop.permute.xlu0 %701
      %703 = vset.pattern.permute.xlu0 1
      %704 = vperm.xlu0 %703, %v352
      %v705 = vpop.permute.xlu0 %704
      %706 = vset.pattern.permute.xlu0 1
      %707 = vperm.xlu0 %706, %v353
      %v708 = vpop.permute.xlu0 %707
      %709 = vset.pattern.permute.xlu0 1
      %710 = vperm.xlu0 %709, %v354
      %v711 = vpop.permute.xlu0 %710
      %vm712 = vcmp.eq.s32.totalorder %v356, %v666
      %vm713 = vcmp.eq.s32.totalorder %v357, %v666
      %vm714 = vcmp.eq.s32.totalorder %v358, %v666
      %vm715 = vcmp.eq.s32.totalorder %v359, %v666
      %vm716 = vcmp.eq.s32.totalorder %v356, %v669
      %vm717 = vcmp.eq.s32.totalorder %v357, %v669
      %vm718 = vcmp.eq.s32.totalorder %v358, %v669
      %vm719 = vcmp.eq.s32.totalorder %v359, %v669
      %vm720 = vcmp.eq.s32.totalorder %v356, %v672
      %vm721 = vcmp.eq.s32.totalorder %v357, %v672
      %vm722 = vcmp.eq.s32.totalorder %v358, %v672
      %vm723 = vcmp.eq.s32.totalorder %v359, %v672
      %vm724 = vcmp.eq.s32.totalorder %v356, %v675
      %vm725 = vcmp.eq.s32.totalorder %v357, %v675
      %vm726 = vcmp.eq.s32.totalorder %v358, %v675
      %vm727 = vcmp.eq.s32.totalorder %v359, %v675
      %vm728 = vcmp.eq.s32.totalorder %v356, %v678
      %vm729 = vcmp.eq.s32.totalorder %v357, %v678
      %vm730 = vcmp.eq.s32.totalorder %v358, %v678
      %vm731 = vcmp.eq.s32.totalorder %v359, %v678
      %vm732 = vcmp.eq.s32.totalorder %v356, %v681
      %vm733 = vcmp.eq.s32.totalorder %v357, %v681
      %vm734 = vcmp.eq.s32.totalorder %v358, %v681
      %vm735 = vcmp.eq.s32.totalorder %v359, %v681
      %vm736 = vcmp.eq.s32.totalorder %v356, %v684
      %vm737 = vcmp.eq.s32.totalorder %v357, %v684
      %vm738 = vcmp.eq.s32.totalorder %v358, %v684
      %vm739 = vcmp.eq.s32.totalorder %v359, %v684
      %vm740 = vcmp.eq.s32.totalorder %v356, %v687
      %vm741 = vcmp.eq.s32.totalorder %v357, %v687
      %vm742 = vcmp.eq.s32.totalorder %v358, %v687
      %vm743 = vcmp.eq.s32.totalorder %v359, %v687
      %vm744 = vcmp.eq.s32.totalorder %v356, %v690
      %vm745 = vcmp.eq.s32.totalorder %v357, %v690
      %vm746 = vcmp.eq.s32.totalorder %v358, %v690
      %vm747 = vcmp.eq.s32.totalorder %v359, %v690
      %vm748 = vcmp.eq.s32.totalorder %v356, %v693
      %vm749 = vcmp.eq.s32.totalorder %v357, %v693
      %vm750 = vcmp.eq.s32.totalorder %v358, %v693
      %vm751 = vcmp.eq.s32.totalorder %v359, %v693
      %vm752 = vcmp.eq.s32.totalorder %v356, %v696
      %vm753 = vcmp.eq.s32.totalorder %v357, %v696
      %vm754 = vcmp.eq.s32.totalorder %v358, %v696
      %vm755 = vcmp.eq.s32.totalorder %v359, %v696
      %vm756 = vcmp.eq.s32.totalorder %v356, %v699
      %vm757 = vcmp.eq.s32.totalorder %v357, %v699
      %vm758 = vcmp.eq.s32.totalorder %v358, %v699
      %vm759 = vcmp.eq.s32.totalorder %v359, %v699
      %vm760 = vcmp.eq.s32.totalorder %v356, %v702
      %vm761 = vcmp.eq.s32.totalorder %v357, %v702
      %vm762 = vcmp.eq.s32.totalorder %v358, %v702
      %vm763 = vcmp.eq.s32.totalorder %v359, %v702
      %vm764 = vcmp.eq.s32.totalorder %v356, %v705
      %vm765 = vcmp.eq.s32.totalorder %v357, %v705
      %vm766 = vcmp.eq.s32.totalorder %v358, %v705
      %vm767 = vcmp.eq.s32.totalorder %v359, %v705
      %vm768 = vcmp.eq.s32.totalorder %v356, %v708
      %vm769 = vcmp.eq.s32.totalorder %v357, %v708
      %vm770 = vcmp.eq.s32.totalorder %v358, %v708
      %vm771 = vcmp.eq.s32.totalorder %v359, %v708
      %vm772 = vcmp.eq.s32.totalorder %v356, %v711
      %vm773 = vcmp.eq.s32.totalorder %v357, %v711
      %vm774 = vcmp.eq.s32.totalorder %v358, %v711
      %vm775 = vcmp.eq.s32.totalorder %v359, %v711
      %v776 = vsel %vm712, 1, 0
      %v777 = vsel %vm713, 1, 0
      %v778 = vsel %vm714, 1, 0
      %v779 = vsel %vm715, 1, 0
      %v780 = vsel %vm716, 1, 0
      %v781 = vsel %vm717, 1, 0
      %v782 = vsel %vm718, 1, 0
      %v783 = vsel %vm719, 1, 0
      %v784 = vsel %vm720, 1, 0
      %v785 = vsel %vm721, 1, 0
      %v786 = vsel %vm722, 1, 0
      %v787 = vsel %vm723, 1, 0
      %v788 = vsel %vm724, 1, 0
      %v789 = vsel %vm725, 1, 0
      %v790 = vsel %vm726, 1, 0
      %v791 = vsel %vm727, 1, 0
      %v792 = vsel %vm728, 1, 0
      %v793 = vsel %vm729, 1, 0
      %v794 = vsel %vm730, 1, 0
      %v795 = vsel %vm731, 1, 0
      %v796 = vsel %vm732, 1, 0
      %v797 = vsel %vm733, 1, 0
      %v798 = vsel %vm734, 1, 0
      %v799 = vsel %vm735, 1, 0
      %v800 = vsel %vm736, 1, 0
      %v801 = vsel %vm737, 1, 0
      %v802 = vsel %vm738, 1, 0
      %v803 = vsel %vm739, 1, 0
      %v804 = vsel %vm740, 1, 0
      %v805 = vsel %vm741, 1, 0
      %v806 = vsel %vm742, 1, 0
      %v807 = vsel %vm743, 1, 0
      %v808 = vsel %vm744, 1, 0
      %v809 = vsel %vm745, 1, 0
      %v810 = vsel %vm746, 1, 0
      %v811 = vsel %vm747, 1, 0
      %v812 = vsel %vm748, 1, 0
      %v813 = vsel %vm749, 1, 0
      %v814 = vsel %vm750, 1, 0
      %v815 = vsel %vm751, 1, 0
      %v816 = vsel %vm752, 1, 0
      %v817 = vsel %vm753, 1, 0
      %v818 = vsel %vm754, 1, 0
      %v819 = vsel %vm755, 1, 0
      %v820 = vsel %vm756, 1, 0
      %v821 = vsel %vm757, 1, 0
      %v822 = vsel %vm758, 1, 0
      %v823 = vsel %vm759, 1, 0
      %v824 = vsel %vm760, 1, 0
      %v825 = vsel %vm761, 1, 0
      %v826 = vsel %vm762, 1, 0
      %v827 = vsel %vm763, 1, 0
      %v828 = vsel %vm764, 1, 0
      %v829 = vsel %vm765, 1, 0
      %v830 = vsel %vm766, 1, 0
      %v831 = vsel %vm767, 1, 0
      %v832 = vsel %vm768, 1, 0
      %v833 = vsel %vm769, 1, 0
      %v834 = vsel %vm770, 1, 0
      %v835 = vsel %vm771, 1, 0
      %v836 = vsel %vm772, 1, 0
      %v837 = vsel %vm773, 1, 0
      %v838 = vsel %vm774, 1, 0
      %v839 = vsel %vm775, 1, 0
      %v840 = vcvt.s32.f32 %v776
      %v841 = vcvt.s32.f32 %v777
      %v842 = vcvt.s32.f32 %v778
      %v843 = vcvt.s32.f32 %v779
      %v844 = vcvt.s32.f32 %v780
      %v845 = vcvt.s32.f32 %v781
      %v846 = vcvt.s32.f32 %v782
      %v847 = vcvt.s32.f32 %v783
      %v848 = vcvt.s32.f32 %v784
      %v849 = vcvt.s32.f32 %v785
      %v850 = vcvt.s32.f32 %v786
      %v851 = vcvt.s32.f32 %v787
      %v852 = vcvt.s32.f32 %v788
      %v853 = vcvt.s32.f32 %v789
      %v854 = vcvt.s32.f32 %v790
      %v855 = vcvt.s32.f32 %v791
      %v856 = vcvt.s32.f32 %v792
      %v857 = vcvt.s32.f32 %v793
      %v858 = vcvt.s32.f32 %v794
      %v859 = vcvt.s32.f32 %v795
      %v860 = vcvt.s32.f32 %v796
      %v861 = vcvt.s32.f32 %v797
      %v862 = vcvt.s32.f32 %v798
      %v863 = vcvt.s32.f32 %v799
      %v864 = vcvt.s32.f32 %v800
      %v865 = vcvt.s32.f32 %v801
      %v866 = vcvt.s32.f32 %v802
      %v867 = vcvt.s32.f32 %v803
      %v868 = vcvt.s32.f32 %v804
      %v869 = vcvt.s32.f32 %v805
      %v870 = vcvt.s32.f32 %v806
      %v871 = vcvt.s32.f32 %v807
      %v872 = vcvt.s32.f32 %v808
      %v873 = vcvt.s32.f32 %v809
      %v874 = vcvt.s32.f32 %v810
      %v875 = vcvt.s32.f32 %v811
      %v876 = vcvt.s32.f32 %v812
      %v877 = vcvt.s32.f32 %v813
      %v878 = vcvt.s32.f32 %v814
      %v879 = vcvt.s32.f32 %v815
      %v880 = vcvt.s32.f32 %v816
      %v881 = vcvt.s32.f32 %v817
      %v882 = vcvt.s32.f32 %v818
      %v883 = vcvt.s32.f32 %v819
      %v884 = vcvt.s32.f32 %v820
      %v885 = vcvt.s32.f32 %v821
      %v886 = vcvt.s32.f32 %v822
      %v887 = vcvt.s32.f32 %v823
      %v888 = vcvt.s32.f32 %v824
      %v889 = vcvt.s32.f32 %v825
      %v890 = vcvt.s32.f32 %v826
      %v891 = vcvt.s32.f32 %v827
      %v892 = vcvt.s32.f32 %v828
      %v893 = vcvt.s32.f32 %v829
      %v894 = vcvt.s32.f32 %v830
      %v895 = vcvt.s32.f32 %v831
      %v896 = vcvt.s32.f32 %v832
      %v897 = vcvt.s32.f32 %v833
      %v898 = vcvt.s32.f32 %v834
      %v899 = vcvt.s32.f32 %v835
      %v900 = vcvt.s32.f32 %v836
      %v901 = vcvt.s32.f32 %v837
      %v902 = vcvt.s32.f32 %v838
      %v903 = vcvt.s32.f32 %v839
      %v904 = vadd.f32 %v600, %v840
      %v905 = vadd.f32 %v601, %v841
      %v906 = vadd.f32 %v602, %v842
      %v907 = vadd.f32 %v603, %v843
      %v908 = vadd.f32 %v604, %v844
      %v909 = vadd.f32 %v605, %v845
      %v910 = vadd.f32 %v606, %v846
      %v911 = vadd.f32 %v607, %v847
      %v912 = vadd.f32 %v608, %v848
      %v913 = vadd.f32 %v609, %v849
      %v914 = vadd.f32 %v610, %v850
      %v915 = vadd.f32 %v611, %v851
      %v916 = vadd.f32 %v612, %v852
      %v917 = vadd.f32 %v613, %v853
      %v918 = vadd.f32 %v614, %v854
      %v919 = vadd.f32 %v615, %v855
      %v920 = vadd.f32 %v616, %v856
      %v921 = vadd.f32 %v617, %v857
      %v922 = vadd.f32 %v618, %v858
      %v923 = vadd.f32 %v619, %v859
      %v924 = vadd.f32 %v620, %v860
      %v925 = vadd.f32 %v621, %v861
      %v926 = vadd.f32 %v622, %v862
      %v927 = vadd.f32 %v623, %v863
      %v928 = vadd.f32 %v624, %v864
      %v929 = vadd.f32 %v625, %v865
      %v930 = vadd.f32 %v626, %v866
      %v931 = vadd.f32 %v627, %v867
      %v932 = vadd.f32 %v628, %v868
      %v933 = vadd.f32 %v629, %v869
      %v934 = vadd.f32 %v630, %v870
      %v935 = vadd.f32 %v631, %v871
      %v936 = vadd.f32 %v632, %v872
      %v937 = vadd.f32 %v633, %v873
      %v938 = vadd.f32 %v634, %v874
      %v939 = vadd.f32 %v635, %v875
      %v940 = vadd.f32 %v636, %v876
      %v941 = vadd.f32 %v637, %v877
      %v942 = vadd.f32 %v638, %v878
      %v943 = vadd.f32 %v639, %v879
      %v944 = vadd.f32 %v640, %v880
      %v945 = vadd.f32 %v641, %v881
      %v946 = vadd.f32 %v642, %v882
      %v947 = vadd.f32 %v643, %v883
      %v948 = vadd.f32 %v644, %v884
      %v949 = vadd.f32 %v645, %v885
      %v950 = vadd.f32 %v646, %v886
      %v951 = vadd.f32 %v647, %v887
      %v952 = vadd.f32 %v648, %v888
      %v953 = vadd.f32 %v649, %v889
      %v954 = vadd.f32 %v650, %v890
      %v955 = vadd.f32 %v651, %v891
      %v956 = vadd.f32 %v652, %v892
      %v957 = vadd.f32 %v653, %v893
      %v958 = vadd.f32 %v654, %v894
      %v959 = vadd.f32 %v655, %v895
      %v960 = vadd.f32 %v656, %v896
      %v961 = vadd.f32 %v657, %v897
      %v962 = vadd.f32 %v658, %v898
      %v963 = vadd.f32 %v659, %v899
      %v964 = vadd.f32 %v660, %v900
      %v965 = vadd.f32 %v661, %v901
      %v966 = vadd.f32 %v662, %v902
      %v967 = vadd.f32 %v663, %v903
      %968 = vset.pattern.permute.xlu0 2
      %969 = vperm.xlu0 %968, %v339
      %v970 = vpop.permute.xlu0 %969
      %971 = vset.pattern.permute.xlu0 2
      %972 = vperm.xlu0 %971, %v340
      %v973 = vpop.permute.xlu0 %972
      %974 = vset.pattern.permute.xlu0 2
      %975 = vperm.xlu0 %974, %v341
      %v976 = vpop.permute.xlu0 %975
      %977 = vset.pattern.permute.xlu0 2
      %978 = vperm.xlu0 %977, %v342
      %v979 = vpop.permute.xlu0 %978
      %980 = vset.pattern.permute.xlu0 2
      %981 = vperm.xlu0 %980, %v343
      %v982 = vpop.permute.xlu0 %981
      %983 = vset.pattern.permute.xlu0 2
      %984 = vperm.xlu0 %983, %v344
      %v985 = vpop.permute.xlu0 %984
      %986 = vset.pattern.permute.xlu0 2
      %987 = vperm.xlu0 %986, %v345
      %v988 = vpop.permute.xlu0 %987
      %989 = vset.pattern.permute.xlu0 2
      %990 = vperm.xlu0 %989, %v346
      %v991 = vpop.permute.xlu0 %990
      %992 = vset.pattern.permute.xlu0 2
      %993 = vperm.xlu0 %992, %v347
      %v994 = vpop.permute.xlu0 %993
      %995 = vset.pattern.permute.xlu0 2
      %996 = vperm.xlu0 %995, %v348
      %v997 = vpop.permute.xlu0 %996
      %998 = vset.pattern.permute.xlu0 2
      %999 = vperm.xlu0 %998, %v349
      %v1000 = vpop.permute.xlu0 %999
      %1001 = vset.pattern.permute.xlu0 2
      %1002 = vperm.xlu0 %1001, %v350
      %v1003 = vpop.permute.xlu0 %1002
      %1004 = vset.pattern.permute.xlu0 2
      %1005 = vperm.xlu0 %1004, %v351
      %v1006 = vpop.permute.xlu0 %1005
      %1007 = vset.pattern.permute.xlu0 2
      %1008 = vperm.xlu0 %1007, %v352
      %v1009 = vpop.permute.xlu0 %1008
      %1010 = vset.pattern.permute.xlu0 2
      %1011 = vperm.xlu0 %1010, %v353
      %v1012 = vpop.permute.xlu0 %1011
      %1013 = vset.pattern.permute.xlu0 2
      %1014 = vperm.xlu0 %1013, %v354
      %v1015 = vpop.permute.xlu0 %1014
      %vm1016 = vcmp.eq.s32.totalorder %v356, %v970
      %vm1017 = vcmp.eq.s32.totalorder %v357, %v970
      %vm1018 = vcmp.eq.s32.totalorder %v358, %v970
      %vm1019 = vcmp.eq.s32.totalorder %v359, %v970
      %vm1020 = vcmp.eq.s32.totalorder %v356, %v973
      %vm1021 = vcmp.eq.s32.totalorder %v357, %v973
      %vm1022 = vcmp.eq.s32.totalorder %v358, %v973
      %vm1023 = vcmp.eq.s32.totalorder %v359, %v973
      %vm1024 = vcmp.eq.s32.totalorder %v356, %v976
      %vm1025 = vcmp.eq.s32.totalorder %v357, %v976
      %vm1026 = vcmp.eq.s32.totalorder %v358, %v976
      %vm1027 = vcmp.eq.s32.totalorder %v359, %v976
      %vm1028 = vcmp.eq.s32.totalorder %v356, %v979
      %vm1029 = vcmp.eq.s32.totalorder %v357, %v979
      %vm1030 = vcmp.eq.s32.totalorder %v358, %v979
      %vm1031 = vcmp.eq.s32.totalorder %v359, %v979
      %vm1032 = vcmp.eq.s32.totalorder %v356, %v982
      %vm1033 = vcmp.eq.s32.totalorder %v357, %v982
      %vm1034 = vcmp.eq.s32.totalorder %v358, %v982
      %vm1035 = vcmp.eq.s32.totalorder %v359, %v982
      %vm1036 = vcmp.eq.s32.totalorder %v356, %v985
      %vm1037 = vcmp.eq.s32.totalorder %v357, %v985
      %vm1038 = vcmp.eq.s32.totalorder %v358, %v985
      %vm1039 = vcmp.eq.s32.totalorder %v359, %v985
      %vm1040 = vcmp.eq.s32.totalorder %v356, %v988
      %vm1041 = vcmp.eq.s32.totalorder %v357, %v988
      %vm1042 = vcmp.eq.s32.totalorder %v358, %v988
      %vm1043 = vcmp.eq.s32.totalorder %v359, %v988
      %vm1044 = vcmp.eq.s32.totalorder %v356, %v991
      %vm1045 = vcmp.eq.s32.totalorder %v357, %v991
      %vm1046 = vcmp.eq.s32.totalorder %v358, %v991
      %vm1047 = vcmp.eq.s32.totalorder %v359, %v991
      %vm1048 = vcmp.eq.s32.totalorder %v356, %v994
      %vm1049 = vcmp.eq.s32.totalorder %v357, %v994
      %vm1050 = vcmp.eq.s32.totalorder %v358, %v994
      %vm1051 = vcmp.eq.s32.totalorder %v359, %v994
      %vm1052 = vcmp.eq.s32.totalorder %v356, %v997
      %vm1053 = vcmp.eq.s32.totalorder %v357, %v997
      %vm1054 = vcmp.eq.s32.totalorder %v358, %v997
      %vm1055 = vcmp.eq.s32.totalorder %v359, %v997
      %vm1056 = vcmp.eq.s32.totalorder %v356, %v1000
      %vm1057 = vcmp.eq.s32.totalorder %v357, %v1000
      %vm1058 = vcmp.eq.s32.totalorder %v358, %v1000
      %vm1059 = vcmp.eq.s32.totalorder %v359, %v1000
      %vm1060 = vcmp.eq.s32.totalorder %v356, %v1003
      %vm1061 = vcmp.eq.s32.totalorder %v357, %v1003
      %vm1062 = vcmp.eq.s32.totalorder %v358, %v1003
      %vm1063 = vcmp.eq.s32.totalorder %v359, %v1003
      %vm1064 = vcmp.eq.s32.totalorder %v356, %v1006
      %vm1065 = vcmp.eq.s32.totalorder %v357, %v1006
      %vm1066 = vcmp.eq.s32.totalorder %v358, %v1006
      %vm1067 = vcmp.eq.s32.totalorder %v359, %v1006
      %vm1068 = vcmp.eq.s32.totalorder %v356, %v1009
      %vm1069 = vcmp.eq.s32.totalorder %v357, %v1009
      %vm1070 = vcmp.eq.s32.totalorder %v358, %v1009
      %vm1071 = vcmp.eq.s32.totalorder %v359, %v1009
      %vm1072 = vcmp.eq.s32.totalorder %v356, %v1012
      %vm1073 = vcmp.eq.s32.totalorder %v357, %v1012
      %vm1074 = vcmp.eq.s32.totalorder %v358, %v1012
      %vm1075 = vcmp.eq.s32.totalorder %v359, %v1012
      %vm1076 = vcmp.eq.s32.totalorder %v356, %v1015
      %vm1077 = vcmp.eq.s32.totalorder %v357, %v1015
      %vm1078 = vcmp.eq.s32.totalorder %v358, %v1015
      %vm1079 = vcmp.eq.s32.totalorder %v359, %v1015
      %v1080 = vsel %vm1016, 1, 0
      %v1081 = vsel %vm1017, 1, 0
      %v1082 = vsel %vm1018, 1, 0
      %v1083 = vsel %vm1019, 1, 0
      %v1084 = vsel %vm1020, 1, 0
      %v1085 = vsel %vm1021, 1, 0
      %v1086 = vsel %vm1022, 1, 0
      %v1087 = vsel %vm1023, 1, 0
      %v1088 = vsel %vm1024, 1, 0
      %v1089 = vsel %vm1025, 1, 0
      %v1090 = vsel %vm1026, 1, 0
      %v1091 = vsel %vm1027, 1, 0
      %v1092 = vsel %vm1028, 1, 0
      %v1093 = vsel %vm1029, 1, 0
      %v1094 = vsel %vm1030, 1, 0
      %v1095 = vsel %vm1031, 1, 0
      %v1096 = vsel %vm1032, 1, 0
      %v1097 = vsel %vm1033, 1, 0
      %v1098 = vsel %vm1034, 1, 0
      %v1099 = vsel %vm1035, 1, 0
      %v1100 = vsel %vm1036, 1, 0
      %v1101 = vsel %vm1037, 1, 0
      %v1102 = vsel %vm1038, 1, 0
      %v1103 = vsel %vm1039, 1, 0
      %v1104 = vsel %vm1040, 1, 0
      %v1105 = vsel %vm1041, 1, 0
      %v1106 = vsel %vm1042, 1, 0
      %v1107 = vsel %vm1043, 1, 0
      %v1108 = vsel %vm1044, 1, 0
      %v1109 = vsel %vm1045, 1, 0
      %v1110 = vsel %vm1046, 1, 0
      %v1111 = vsel %vm1047, 1, 0
      %v1112 = vsel %vm1048, 1, 0
      %v1113 = vsel %vm1049, 1, 0
      %v1114 = vsel %vm1050, 1, 0
      %v1115 = vsel %vm1051, 1, 0
      %v1116 = vsel %vm1052, 1, 0
      %v1117 = vsel %vm1053, 1, 0
      %v1118 = vsel %vm1054, 1, 0
      %v1119 = vsel %vm1055, 1, 0
      %v1120 = vsel %vm1056, 1, 0
      %v1121 = vsel %vm1057, 1, 0
      %v1122 = vsel %vm1058, 1, 0
      %v1123 = vsel %vm1059, 1, 0
      %v1124 = vsel %vm1060, 1, 0
      %v1125 = vsel %vm1061, 1, 0
      %v1126 = vsel %vm1062, 1, 0
      %v1127 = vsel %vm1063, 1, 0
      %v1128 = vsel %vm1064, 1, 0
      %v1129 = vsel %vm1065, 1, 0
      %v1130 = vsel %vm1066, 1, 0
      %v1131 = vsel %vm1067, 1, 0
      %v1132 = vsel %vm1068, 1, 0
      %v1133 = vsel %vm1069, 1, 0
      %v1134 = vsel %vm1070, 1, 0
      %v1135 = vsel %vm1071, 1, 0
      %v1136 = vsel %vm1072, 1, 0
      %v1137 = vsel %vm1073, 1, 0
      %v1138 = vsel %vm1074, 1, 0
      %v1139 = vsel %vm1075, 1, 0
      %v1140 = vsel %vm1076, 1, 0
      %v1141 = vsel %vm1077, 1, 0
      %v1142 = vsel %vm1078, 1, 0
      %v1143 = vsel %vm1079, 1, 0
      %v1144 = vcvt.s32.f32 %v1080
      %v1145 = vcvt.s32.f32 %v1081
      %v1146 = vcvt.s32.f32 %v1082
      %v1147 = vcvt.s32.f32 %v1083
      %v1148 = vcvt.s32.f32 %v1084
      %v1149 = vcvt.s32.f32 %v1085
      %v1150 = vcvt.s32.f32 %v1086
      %v1151 = vcvt.s32.f32 %v1087
      %v1152 = vcvt.s32.f32 %v1088
      %v1153 = vcvt.s32.f32 %v1089
      %v1154 = vcvt.s32.f32 %v1090
      %v1155 = vcvt.s32.f32 %v1091
      %v1156 = vcvt.s32.f32 %v1092
      %v1157 = vcvt.s32.f32 %v1093
      %v1158 = vcvt.s32.f32 %v1094
      %v1159 = vcvt.s32.f32 %v1095
      %v1160 = vcvt.s32.f32 %v1096
      %v1161 = vcvt.s32.f32 %v1097
      %v1162 = vcvt.s32.f32 %v1098
      %v1163 = vcvt.s32.f32 %v1099
      %v1164 = vcvt.s32.f32 %v1100
      %v1165 = vcvt.s32.f32 %v1101
      %v1166 = vcvt.s32.f32 %v1102
      %v1167 = vcvt.s32.f32 %v1103
      %v1168 = vcvt.s32.f32 %v1104
      %v1169 = vcvt.s32.f32 %v1105
      %v1170 = vcvt.s32.f32 %v1106
      %v1171 = vcvt.s32.f32 %v1107
      %v1172 = vcvt.s32.f32 %v1108
      %v1173 = vcvt.s32.f32 %v1109
      %v1174 = vcvt.s32.f32 %v1110
      %v1175 = vcvt.s32.f32 %v1111
      %v1176 = vcvt.s32.f32 %v1112
      %v1177 = vcvt.s32.f32 %v1113
      %v1178 = vcvt.s32.f32 %v1114
      %v1179 = vcvt.s32.f32 %v1115
      %v1180 = vcvt.s32.f32 %v1116
      %v1181 = vcvt.s32.f32 %v1117
      %v1182 = vcvt.s32.f32 %v1118
      %v1183 = vcvt.s32.f32 %v1119
      %v1184 = vcvt.s32.f32 %v1120
      %v1185 = vcvt.s32.f32 %v1121
      %v1186 = vcvt.s32.f32 %v1122
      %v1187 = vcvt.s32.f32 %v1123
      %v1188 = vcvt.s32.f32 %v1124
      %v1189 = vcvt.s32.f32 %v1125
      %v1190 = vcvt.s32.f32 %v1126
      %v1191 = vcvt.s32.f32 %v1127
      %v1192 = vcvt.s32.f32 %v1128
      %v1193 = vcvt.s32.f32 %v1129
      %v1194 = vcvt.s32.f32 %v1130
      %v1195 = vcvt.s32.f32 %v1131
      %v1196 = vcvt.s32.f32 %v1132
      %v1197 = vcvt.s32.f32 %v1133
      %v1198 = vcvt.s32.f32 %v1134
      %v1199 = vcvt.s32.f32 %v1135
      %v1200 = vcvt.s32.f32 %v1136
      %v1201 = vcvt.s32.f32 %v1137
      %v1202 = vcvt.s32.f32 %v1138
      %v1203 = vcvt.s32.f32 %v1139
      %v1204 = vcvt.s32.f32 %v1140
      %v1205 = vcvt.s32.f32 %v1141
      %v1206 = vcvt.s32.f32 %v1142
      %v1207 = vcvt.s32.f32 %v1143
      %v1208 = vadd.f32 %v904, %v1144
      %v1209 = vadd.f32 %v905, %v1145
      %v1210 = vadd.f32 %v906, %v1146
      %v1211 = vadd.f32 %v907, %v1147
      %v1212 = vadd.f32 %v908, %v1148
      %v1213 = vadd.f32 %v909, %v1149
      %v1214 = vadd.f32 %v910, %v1150
      %v1215 = vadd.f32 %v911, %v1151
      %v1216 = vadd.f32 %v912, %v1152
      %v1217 = vadd.f32 %v913, %v1153
      %v1218 = vadd.f32 %v914, %v1154
      %v1219 = vadd.f32 %v915, %v1155
      %v1220 = vadd.f32 %v916, %v1156
      %v1221 = vadd.f32 %v917, %v1157
      %v1222 = vadd.f32 %v918, %v1158
      %v1223 = vadd.f32 %v919, %v1159
      %v1224 = vadd.f32 %v920, %v1160
      %v1225 = vadd.f32 %v921, %v1161
      %v1226 = vadd.f32 %v922, %v1162
      %v1227 = vadd.f32 %v923, %v1163
      %v1228 = vadd.f32 %v924, %v1164
      %v1229 = vadd.f32 %v925, %v1165
      %v1230 = vadd.f32 %v926, %v1166
      %v1231 = vadd.f32 %v927, %v1167
      %v1232 = vadd.f32 %v928, %v1168
      %v1233 = vadd.f32 %v929, %v1169
      %v1234 = vadd.f32 %v930, %v1170
      %v1235 = vadd.f32 %v931, %v1171
      %v1236 = vadd.f32 %v932, %v1172
      %v1237 = vadd.f32 %v933, %v1173
      %v1238 = vadd.f32 %v934, %v1174
      %v1239 = vadd.f32 %v935, %v1175
      %v1240 = vadd.f32 %v936, %v1176
      %v1241 = vadd.f32 %v937, %v1177
      %v1242 = vadd.f32 %v938, %v1178
      %v1243 = vadd.f32 %v939, %v1179
      %v1244 = vadd.f32 %v940, %v1180
      %v1245 = vadd.f32 %v941, %v1181
      %v1246 = vadd.f32 %v942, %v1182
      %v1247 = vadd.f32 %v943, %v1183
      %v1248 = vadd.f32 %v944, %v1184
      %v1249 = vadd.f32 %v945, %v1185
      %v1250 = vadd.f32 %v946, %v1186
      %v1251 = vadd.f32 %v947, %v1187
      %v1252 = vadd.f32 %v948, %v1188
      %v1253 = vadd.f32 %v949, %v1189
      %v1254 = vadd.f32 %v950, %v1190
      %v1255 = vadd.f32 %v951, %v1191
      %v1256 = vadd.f32 %v952, %v1192
      %v1257 = vadd.f32 %v953, %v1193
      %v1258 = vadd.f32 %v954, %v1194
      %v1259 = vadd.f32 %v955, %v1195
      %v1260 = vadd.f32 %v956, %v1196
      %v1261 = vadd.f32 %v957, %v1197
      %v1262 = vadd.f32 %v958, %v1198
      %v1263 = vadd.f32 %v959, %v1199
      %v1264 = vadd.f32 %v960, %v1200
      %v1265 = vadd.f32 %v961, %v1201
      %v1266 = vadd.f32 %v962, %v1202
      %v1267 = vadd.f32 %v963, %v1203
      %v1268 = vadd.f32 %v964, %v1204
      %v1269 = vadd.f32 %v965, %v1205
      %v1270 = vadd.f32 %v966, %v1206
      %v1271 = vadd.f32 %v967, %v1207
      %1272 = vset.pattern.permute.xlu0 3
      %1273 = vperm.xlu0 %1272, %v339
      %v1274 = vpop.permute.xlu0 %1273
      %1275 = vset.pattern.permute.xlu0 3
      %1276 = vperm.xlu0 %1275, %v340
      %v1277 = vpop.permute.xlu0 %1276
      %1278 = vset.pattern.permute.xlu0 3
      %1279 = vperm.xlu0 %1278, %v341
      %v1280 = vpop.permute.xlu0 %1279
      %1281 = vset.pattern.permute.xlu0 3
      %1282 = vperm.xlu0 %1281, %v342
      %v1283 = vpop.permute.xlu0 %1282
      %1284 = vset.pattern.permute.xlu0 3
      %1285 = vperm.xlu0 %1284, %v343
      %v1286 = vpop.permute.xlu0 %1285
      %1287 = vset.pattern.permute.xlu0 3
      %1288 = vperm.xlu0 %1287, %v344
      %v1289 = vpop.permute.xlu0 %1288
      %1290 = vset.pattern.permute.xlu0 3
      %1291 = vperm.xlu0 %1290, %v345
      %v1292 = vpop.permute.xlu0 %1291
      %1293 = vset.pattern.permute.xlu0 3
      %1294 = vperm.xlu0 %1293, %v346
      %v1295 = vpop.permute.xlu0 %1294
      %1296 = vset.pattern.permute.xlu0 3
      %1297 = vperm.xlu0 %1296, %v347
      %v1298 = vpop.permute.xlu0 %1297
      %1299 = vset.pattern.permute.xlu0 3
      %1300 = vperm.xlu0 %1299, %v348
      %v1301 = vpop.permute.xlu0 %1300
      %1302 = vset.pattern.permute.xlu0 3
      %1303 = vperm.xlu0 %1302, %v349
      %v1304 = vpop.permute.xlu0 %1303
      %1305 = vset.pattern.permute.xlu0 3
      %1306 = vperm.xlu0 %1305, %v350
      %v1307 = vpop.permute.xlu0 %1306
      %1308 = vset.pattern.permute.xlu0 3
      %1309 = vperm.xlu0 %1308, %v351
      %v1310 = vpop.permute.xlu0 %1309
      %1311 = vset.pattern.permute.xlu0 3
      %1312 = vperm.xlu0 %1311, %v352
      %v1313 = vpop.permute.xlu0 %1312
      %1314 = vset.pattern.permute.xlu0 3
      %1315 = vperm.xlu0 %1314, %v353
      %v1316 = vpop.permute.xlu0 %1315
      %1317 = vset.pattern.permute.xlu0 3
      %1318 = vperm.xlu0 %1317, %v354
      %v1319 = vpop.permute.xlu0 %1318
      %vm1320 = vcmp.eq.s32.totalorder %v356, %v1274
      %vm1321 = vcmp.eq.s32.totalorder %v357, %v1274
      %vm1322 = vcmp.eq.s32.totalorder %v358, %v1274
      %vm1323 = vcmp.eq.s32.totalorder %v359, %v1274
      %vm1324 = vcmp.eq.s32.totalorder %v356, %v1277
      %vm1325 = vcmp.eq.s32.totalorder %v357, %v1277
      %vm1326 = vcmp.eq.s32.totalorder %v358, %v1277
      %vm1327 = vcmp.eq.s32.totalorder %v359, %v1277
      %vm1328 = vcmp.eq.s32.totalorder %v356, %v1280
      %vm1329 = vcmp.eq.s32.totalorder %v357, %v1280
      %vm1330 = vcmp.eq.s32.totalorder %v358, %v1280
      %vm1331 = vcmp.eq.s32.totalorder %v359, %v1280
      %vm1332 = vcmp.eq.s32.totalorder %v356, %v1283
      %vm1333 = vcmp.eq.s32.totalorder %v357, %v1283
      %vm1334 = vcmp.eq.s32.totalorder %v358, %v1283
      %vm1335 = vcmp.eq.s32.totalorder %v359, %v1283
      %vm1336 = vcmp.eq.s32.totalorder %v356, %v1286
      %vm1337 = vcmp.eq.s32.totalorder %v357, %v1286
      %vm1338 = vcmp.eq.s32.totalorder %v358, %v1286
      %vm1339 = vcmp.eq.s32.totalorder %v359, %v1286
      %vm1340 = vcmp.eq.s32.totalorder %v356, %v1289
      %vm1341 = vcmp.eq.s32.totalorder %v357, %v1289
      %vm1342 = vcmp.eq.s32.totalorder %v358, %v1289
      %vm1343 = vcmp.eq.s32.totalorder %v359, %v1289
      %vm1344 = vcmp.eq.s32.totalorder %v356, %v1292
      %vm1345 = vcmp.eq.s32.totalorder %v357, %v1292
      %vm1346 = vcmp.eq.s32.totalorder %v358, %v1292
      %vm1347 = vcmp.eq.s32.totalorder %v359, %v1292
      %vm1348 = vcmp.eq.s32.totalorder %v356, %v1295
      %vm1349 = vcmp.eq.s32.totalorder %v357, %v1295
      %vm1350 = vcmp.eq.s32.totalorder %v358, %v1295
      %vm1351 = vcmp.eq.s32.totalorder %v359, %v1295
      %vm1352 = vcmp.eq.s32.totalorder %v356, %v1298
      %vm1353 = vcmp.eq.s32.totalorder %v357, %v1298
      %vm1354 = vcmp.eq.s32.totalorder %v358, %v1298
      %vm1355 = vcmp.eq.s32.totalorder %v359, %v1298
      %vm1356 = vcmp.eq.s32.totalorder %v356, %v1301
      %vm1357 = vcmp.eq.s32.totalorder %v357, %v1301
      %vm1358 = vcmp.eq.s32.totalorder %v358, %v1301
      %vm1359 = vcmp.eq.s32.totalorder %v359, %v1301
      %vm1360 = vcmp.eq.s32.totalorder %v356, %v1304
      %vm1361 = vcmp.eq.s32.totalorder %v357, %v1304
      %vm1362 = vcmp.eq.s32.totalorder %v358, %v1304
      %vm1363 = vcmp.eq.s32.totalorder %v359, %v1304
      %vm1364 = vcmp.eq.s32.totalorder %v356, %v1307
      %vm1365 = vcmp.eq.s32.totalorder %v357, %v1307
      %vm1366 = vcmp.eq.s32.totalorder %v358, %v1307
      %vm1367 = vcmp.eq.s32.totalorder %v359, %v1307
      %vm1368 = vcmp.eq.s32.totalorder %v356, %v1310
      %vm1369 = vcmp.eq.s32.totalorder %v357, %v1310
      %vm1370 = vcmp.eq.s32.totalorder %v358, %v1310
      %vm1371 = vcmp.eq.s32.totalorder %v359, %v1310
      %vm1372 = vcmp.eq.s32.totalorder %v356, %v1313
      %vm1373 = vcmp.eq.s32.totalorder %v357, %v1313
      %vm1374 = vcmp.eq.s32.totalorder %v358, %v1313
      %vm1375 = vcmp.eq.s32.totalorder %v359, %v1313
      %vm1376 = vcmp.eq.s32.totalorder %v356, %v1316
      %vm1377 = vcmp.eq.s32.totalorder %v357, %v1316
      %vm1378 = vcmp.eq.s32.totalorder %v358, %v1316
      %vm1379 = vcmp.eq.s32.totalorder %v359, %v1316
      %vm1380 = vcmp.eq.s32.totalorder %v356, %v1319
      %vm1381 = vcmp.eq.s32.totalorder %v357, %v1319
      %vm1382 = vcmp.eq.s32.totalorder %v358, %v1319
      %vm1383 = vcmp.eq.s32.totalorder %v359, %v1319
      %v1384 = vsel %vm1320, 1, 0
      %v1385 = vsel %vm1321, 1, 0
      %v1386 = vsel %vm1322, 1, 0
      %v1387 = vsel %vm1323, 1, 0
      %v1388 = vsel %vm1324, 1, 0
      %v1389 = vsel %vm1325, 1, 0
      %v1390 = vsel %vm1326, 1, 0
      %v1391 = vsel %vm1327, 1, 0
      %v1392 = vsel %vm1328, 1, 0
      %v1393 = vsel %vm1329, 1, 0
      %v1394 = vsel %vm1330, 1, 0
      %v1395 = vsel %vm1331, 1, 0
      %v1396 = vsel %vm1332, 1, 0
      %v1397 = vsel %vm1333, 1, 0
      %v1398 = vsel %vm1334, 1, 0
      %v1399 = vsel %vm1335, 1, 0
      %v1400 = vsel %vm1336, 1, 0
      %v1401 = vsel %vm1337, 1, 0
      %v1402 = vsel %vm1338, 1, 0
      %v1403 = vsel %vm1339, 1, 0
      %v1404 = vsel %vm1340, 1, 0
      %v1405 = vsel %vm1341, 1, 0
      %v1406 = vsel %vm1342, 1, 0
      %v1407 = vsel %vm1343, 1, 0
      %v1408 = vsel %vm1344, 1, 0
      %v1409 = vsel %vm1345, 1, 0
      %v1410 = vsel %vm1346, 1, 0
      %v1411 = vsel %vm1347, 1, 0
      %v1412 = vsel %vm1348, 1, 0
      %v1413 = vsel %vm1349, 1, 0
      %v1414 = vsel %vm1350, 1, 0
      %v1415 = vsel %vm1351, 1, 0
      %v1416 = vsel %vm1352, 1, 0
      %v1417 = vsel %vm1353, 1, 0
      %v1418 = vsel %vm1354, 1, 0
      %v1419 = vsel %vm1355, 1, 0
      %v1420 = vsel %vm1356, 1, 0
      %v1421 = vsel %vm1357, 1, 0
      %v1422 = vsel %vm1358, 1, 0
      %v1423 = vsel %vm1359, 1, 0
      %v1424 = vsel %vm1360, 1, 0
      %v1425 = vsel %vm1361, 1, 0
      %v1426 = vsel %vm1362, 1, 0
      %v1427 = vsel %vm1363, 1, 0
      %v1428 = vsel %vm1364, 1, 0
      %v1429 = vsel %vm1365, 1, 0
      %v1430 = vsel %vm1366, 1, 0
      %v1431 = vsel %vm1367, 1, 0
      %v1432 = vsel %vm1368, 1, 0
      %v1433 = vsel %vm1369, 1, 0
      %v1434 = vsel %vm1370, 1, 0
      %v1435 = vsel %vm1371, 1, 0
      %v1436 = vsel %vm1372, 1, 0
      %v1437 = vsel %vm1373, 1, 0
      %v1438 = vsel %vm1374, 1, 0
      %v1439 = vsel %vm1375, 1, 0
      %v1440 = vsel %vm1376, 1, 0
      %v1441 = vsel %vm1377, 1, 0
      %v1442 = vsel %vm1378, 1, 0
      %v1443 = vsel %vm1379, 1, 0
      %v1444 = vsel %vm1380, 1, 0
      %v1445 = vsel %vm1381, 1, 0
      %v1446 = vsel %vm1382, 1, 0
      %v1447 = vsel %vm1383, 1, 0
      %v1448 = vcvt.s32.f32 %v1384
      %v1449 = vcvt.s32.f32 %v1385
      %v1450 = vcvt.s32.f32 %v1386
      %v1451 = vcvt.s32.f32 %v1387
      %v1452 = vcvt.s32.f32 %v1388
      %v1453 = vcvt.s32.f32 %v1389
      %v1454 = vcvt.s32.f32 %v1390
      %v1455 = vcvt.s32.f32 %v1391
      %v1456 = vcvt.s32.f32 %v1392
      %v1457 = vcvt.s32.f32 %v1393
      %v1458 = vcvt.s32.f32 %v1394
      %v1459 = vcvt.s32.f32 %v1395
      %v1460 = vcvt.s32.f32 %v1396
      %v1461 = vcvt.s32.f32 %v1397
      %v1462 = vcvt.s32.f32 %v1398
      %v1463 = vcvt.s32.f32 %v1399
      %v1464 = vcvt.s32.f32 %v1400
      %v1465 = vcvt.s32.f32 %v1401
      %v1466 = vcvt.s32.f32 %v1402
      %v1467 = vcvt.s32.f32 %v1403
      %v1468 = vcvt.s32.f32 %v1404
      %v1469 = vcvt.s32.f32 %v1405
      %v1470 = vcvt.s32.f32 %v1406
      %v1471 = vcvt.s32.f32 %v1407
      %v1472 = vcvt.s32.f32 %v1408
      %v1473 = vcvt.s32.f32 %v1409
      %v1474 = vcvt.s32.f32 %v1410
      %v1475 = vcvt.s32.f32 %v1411
      %v1476 = vcvt.s32.f32 %v1412
      %v1477 = vcvt.s32.f32 %v1413
      %v1478 = vcvt.s32.f32 %v1414
      %v1479 = vcvt.s32.f32 %v1415
      %v1480 = vcvt.s32.f32 %v1416
      %v1481 = vcvt.s32.f32 %v1417
      %v1482 = vcvt.s32.f32 %v1418
      %v1483 = vcvt.s32.f32 %v1419
      %v1484 = vcvt.s32.f32 %v1420
      %v1485 = vcvt.s32.f32 %v1421
      %v1486 = vcvt.s32.f32 %v1422
      %v1487 = vcvt.s32.f32 %v1423
      %v1488 = vcvt.s32.f32 %v1424
      %v1489 = vcvt.s32.f32 %v1425
      %v1490 = vcvt.s32.f32 %v1426
      %v1491 = vcvt.s32.f32 %v1427
      %v1492 = vcvt.s32.f32 %v1428
      %v1493 = vcvt.s32.f32 %v1429
      %v1494 = vcvt.s32.f32 %v1430
      %v1495 = vcvt.s32.f32 %v1431
      %v1496 = vcvt.s32.f32 %v1432
      %v1497 = vcvt.s32.f32 %v1433
      %v1498 = vcvt.s32.f32 %v1434
      %v1499 = vcvt.s32.f32 %v1435
      %v1500 = vcvt.s32.f32 %v1436
      %v1501 = vcvt.s32.f32 %v1437
      %v1502 = vcvt.s32.f32 %v1438
      %v1503 = vcvt.s32.f32 %v1439
      %v1504 = vcvt.s32.f32 %v1440
      %v1505 = vcvt.s32.f32 %v1441
      %v1506 = vcvt.s32.f32 %v1442
      %v1507 = vcvt.s32.f32 %v1443
      %v1508 = vcvt.s32.f32 %v1444
      %v1509 = vcvt.s32.f32 %v1445
      %v1510 = vcvt.s32.f32 %v1446
      %v1511 = vcvt.s32.f32 %v1447
      %v1512 = vadd.f32 %v1208, %v1448
      %v1513 = vadd.f32 %v1209, %v1449
      %v1514 = vadd.f32 %v1210, %v1450
      %v1515 = vadd.f32 %v1211, %v1451
      %v1516 = vadd.f32 %v1212, %v1452
      %v1517 = vadd.f32 %v1213, %v1453
      %v1518 = vadd.f32 %v1214, %v1454
      %v1519 = vadd.f32 %v1215, %v1455
      %v1520 = vadd.f32 %v1216, %v1456
      %v1521 = vadd.f32 %v1217, %v1457
      %v1522 = vadd.f32 %v1218, %v1458
      %v1523 = vadd.f32 %v1219, %v1459
      %v1524 = vadd.f32 %v1220, %v1460
      %v1525 = vadd.f32 %v1221, %v1461
      %v1526 = vadd.f32 %v1222, %v1462
      %v1527 = vadd.f32 %v1223, %v1463
      %v1528 = vadd.f32 %v1224, %v1464
      %v1529 = vadd.f32 %v1225, %v1465
      %v1530 = vadd.f32 %v1226, %v1466
      %v1531 = vadd.f32 %v1227, %v1467
      %v1532 = vadd.f32 %v1228, %v1468
      %v1533 = vadd.f32 %v1229, %v1469
      %v1534 = vadd.f32 %v1230, %v1470
      %v1535 = vadd.f32 %v1231, %v1471
      %v1536 = vadd.f32 %v1232, %v1472
      %v1537 = vadd.f32 %v1233, %v1473
      %v1538 = vadd.f32 %v1234, %v1474
      %v1539 = vadd.f32 %v1235, %v1475
      %v1540 = vadd.f32 %v1236, %v1476
      %v1541 = vadd.f32 %v1237, %v1477
      %v1542 = vadd.f32 %v1238, %v1478
      %v1543 = vadd.f32 %v1239, %v1479
      %v1544 = vadd.f32 %v1240, %v1480
      %v1545 = vadd.f32 %v1241, %v1481
      %v1546 = vadd.f32 %v1242, %v1482
      %v1547 = vadd.f32 %v1243, %v1483
      %v1548 = vadd.f32 %v1244, %v1484
      %v1549 = vadd.f32 %v1245, %v1485
      %v1550 = vadd.f32 %v1246, %v1486
      %v1551 = vadd.f32 %v1247, %v1487
      %v1552 = vadd.f32 %v1248, %v1488
      %v1553 = vadd.f32 %v1249, %v1489
      %v1554 = vadd.f32 %v1250, %v1490
      %v1555 = vadd.f32 %v1251, %v1491
      %v1556 = vadd.f32 %v1252, %v1492
      %v1557 = vadd.f32 %v1253, %v1493
      %v1558 = vadd.f32 %v1254, %v1494
      %v1559 = vadd.f32 %v1255, %v1495
      %v1560 = vadd.f32 %v1256, %v1496
      %v1561 = vadd.f32 %v1257, %v1497
      %v1562 = vadd.f32 %v1258, %v1498
      %v1563 = vadd.f32 %v1259, %v1499
      %v1564 = vadd.f32 %v1260, %v1500
      %v1565 = vadd.f32 %v1261, %v1501
      %v1566 = vadd.f32 %v1262, %v1502
      %v1567 = vadd.f32 %v1263, %v1503
      %v1568 = vadd.f32 %v1264, %v1504
      %v1569 = vadd.f32 %v1265, %v1505
      %v1570 = vadd.f32 %v1266, %v1506
      %v1571 = vadd.f32 %v1267, %v1507
      %v1572 = vadd.f32 %v1268, %v1508
      %v1573 = vadd.f32 %v1269, %v1509
      %v1574 = vadd.f32 %v1270, %v1510
      %v1575 = vadd.f32 %v1271, %v1511
      %v1576 = vpack.c.bf16 %v1516, %v1512
      %v1577 = vpack.c.bf16 %v1517, %v1513
      %v1578 = vpack.c.bf16 %v1518, %v1514
      %v1579 = vpack.c.bf16 %v1519, %v1515
      %v1580 = vpack.c.bf16 %v1524, %v1520
      %v1581 = vpack.c.bf16 %v1525, %v1521
      %v1582 = vpack.c.bf16 %v1526, %v1522
      %v1583 = vpack.c.bf16 %v1527, %v1523
      %v1584 = vpack.c.bf16 %v1532, %v1528
      %v1585 = vpack.c.bf16 %v1533, %v1529
      %v1586 = vpack.c.bf16 %v1534, %v1530
      %v1587 = vpack.c.bf16 %v1535, %v1531
      %v1588 = vpack.c.bf16 %v1540, %v1536
      %v1589 = vpack.c.bf16 %v1541, %v1537
      %v1590 = vpack.c.bf16 %v1542, %v1538
      %v1591 = vpack.c.bf16 %v1543, %v1539
      %v1592 = vpack.c.bf16 %v1548, %v1544
      %v1593 = vpack.c.bf16 %v1549, %v1545
      %v1594 = vpack.c.bf16 %v1550, %v1546
      %v1595 = vpack.c.bf16 %v1551, %v1547
      %v1596 = vpack.c.bf16 %v1556, %v1552
      %v1597 = vpack.c.bf16 %v1557, %v1553
      %v1598 = vpack.c.bf16 %v1558, %v1554
      %v1599 = vpack.c.bf16 %v1559, %v1555
      %v1600 = vpack.c.bf16 %v1564, %v1560
      %v1601 = vpack.c.bf16 %v1565, %v1561
      %v1602 = vpack.c.bf16 %v1566, %v1562
      %v1603 = vpack.c.bf16 %v1567, %v1563
      %v1604 = vpack.c.bf16 %v1572, %v1568
      %v1605 = vpack.c.bf16 %v1573, %v1569
      %v1606 = vpack.c.bf16 %v1574, %v1570
      %v1607 = vpack.c.bf16 %v1575, %v1571
      %v1608 = vld [vmem:[%s1] sm:$0xf]
      %v1610 = vlaneseq
      %v1611 = vshrl.u32 %v1610, 7
      %v1612 = vsub.s32 0, %v1611
      %v1613 = vrot.slane %v1608, %v1612
      %v1614 = vlaneseq
      %v1615 = vshrl.u32 %v1614, 7
      %v1616 = vsub.s32 1, %v1615
      %v1617 = vrot.slane %v1608, %v1616
      %v1618 = vlaneseq
      %v1619 = vshrl.u32 %v1618, 7
      %v1620 = vsub.s32 2, %v1619
      %v1621 = vrot.slane %v1608, %v1620
      %v1622 = vlaneseq
      %v1623 = vshrl.u32 %v1622, 7
      %v1624 = vsub.s32 3, %v1623
      %v1625 = vrot.slane %v1608, %v1624
      %v1630 = vmul.f32 %v1512, %v1613
      %v1631 = vmul.f32 %v1513, %v1617
      %v1632 = vmul.f32 %v1514, %v1621
      %v1633 = vmul.f32 %v1515, %v1625
      %v1634 = vmul.f32 %v1516, %v1613
      %v1635 = vmul.f32 %v1517, %v1617
      %v1636 = vmul.f32 %v1518, %v1621
      %v1637 = vmul.f32 %v1519, %v1625
      %v1638 = vmul.f32 %v1520, %v1613
      %v1639 = vmul.f32 %v1521, %v1617
      %v1640 = vmul.f32 %v1522, %v1621
      %v1641 = vmul.f32 %v1523, %v1625
      %v1642 = vmul.f32 %v1524, %v1613
      %v1643 = vmul.f32 %v1525, %v1617
      %v1644 = vmul.f32 %v1526, %v1621
      %v1645 = vmul.f32 %v1527, %v1625
      %v1646 = vmul.f32 %v1528, %v1613
      %v1647 = vmul.f32 %v1529, %v1617
      %v1648 = vmul.f32 %v1530, %v1621
      %v1649 = vmul.f32 %v1531, %v1625
      %v1650 = vmul.f32 %v1532, %v1613
      %v1651 = vmul.f32 %v1533, %v1617
      %v1652 = vmul.f32 %v1534, %v1621
      %v1653 = vmul.f32 %v1535, %v1625
      %v1654 = vmul.f32 %v1536, %v1613
      %v1655 = vmul.f32 %v1537, %v1617
      %v1656 = vmul.f32 %v1538, %v1621
      %v1657 = vmul.f32 %v1539, %v1625
      %v1658 = vmul.f32 %v1540, %v1613
      %v1659 = vmul.f32 %v1541, %v1617
      %v1660 = vmul.f32 %v1542, %v1621
      %v1661 = vmul.f32 %v1543, %v1625
      %v1662 = vmul.f32 %v1544, %v1613
      %v1663 = vmul.f32 %v1545, %v1617
      %v1664 = vmul.f32 %v1546, %v1621
      %v1665 = vmul.f32 %v1547, %v1625
      %v1666 = vmul.f32 %v1548, %v1613
      %v1667 = vmul.f32 %v1549, %v1617
      %v1668 = vmul.f32 %v1550, %v1621
      %v1669 = vmul.f32 %v1551, %v1625
      %v1670 = vmul.f32 %v1552, %v1613
      %v1671 = vmul.f32 %v1553, %v1617
      %v1672 = vmul.f32 %v1554, %v1621
      %v1673 = vmul.f32 %v1555, %v1625
      %v1674 = vmul.f32 %v1556, %v1613
      %v1675 = vmul.f32 %v1557, %v1617
      %v1676 = vmul.f32 %v1558, %v1621
      %v1677 = vmul.f32 %v1559, %v1625
      %v1678 = vmul.f32 %v1560, %v1613
      %v1679 = vmul.f32 %v1561, %v1617
      %v1680 = vmul.f32 %v1562, %v1621
      %v1681 = vmul.f32 %v1563, %v1625
      %v1682 = vmul.f32 %v1564, %v1613
      %v1683 = vmul.f32 %v1565, %v1617
      %v1684 = vmul.f32 %v1566, %v1621
      %v1685 = vmul.f32 %v1567, %v1625
      %v1686 = vmul.f32 %v1568, %v1613
      %v1687 = vmul.f32 %v1569, %v1617
      %v1688 = vmul.f32 %v1570, %v1621
      %v1689 = vmul.f32 %v1571, %v1625
      %v1690 = vmul.f32 %v1572, %v1613
      %v1691 = vmul.f32 %v1573, %v1617
      %v1692 = vmul.f32 %v1574, %v1621
      %v1693 = vmul.f32 %v1575, %v1625
      %v1694 = vadd.f32 %v1630, %v1631
      %v1695 = vadd.f32 %v1694, %v1632
      %v1696 = vadd.f32 %v1695, %v1633
      %1697 = vadd.xlane.f32.xlu0 %v1696
      %v1698 = vpop.xlane.xlu0 %1697
      %v1699 = vadd.f32 %v1634, %v1635
      %v1700 = vadd.f32 %v1699, %v1636
      %v1701 = vadd.f32 %v1700, %v1637
      %1702 = vadd.xlane.f32.xlu0 %v1701
      %v1703 = vpop.xlane.xlu0 %1702
      %v1704 = vadd.f32 %v1638, %v1639
      %v1705 = vadd.f32 %v1704, %v1640
      %v1706 = vadd.f32 %v1705, %v1641
      %1707 = vadd.xlane.f32.xlu0 %v1706
      %v1708 = vpop.xlane.xlu0 %1707
      %v1709 = vadd.f32 %v1642, %v1643
      %v1710 = vadd.f32 %v1709, %v1644
      %v1711 = vadd.f32 %v1710, %v1645
      %1712 = vadd.xlane.f32.xlu0 %v1711
      %v1713 = vpop.xlane.xlu0 %1712
      %v1714 = vadd.f32 %v1646, %v1647
      %v1715 = vadd.f32 %v1714, %v1648
      %v1716 = vadd.f32 %v1715, %v1649
      %1717 = vadd.xlane.f32.xlu0 %v1716
      %v1718 = vpop.xlane.xlu0 %1717
      %v1719 = vadd.f32 %v1650, %v1651
      %v1720 = vadd.f32 %v1719, %v1652
      %v1721 = vadd.f32 %v1720, %v1653
      %1722 = vadd.xlane.f32.xlu0 %v1721
      %v1723 = vpop.xlane.xlu0 %1722
      %v1724 = vadd.f32 %v1654, %v1655
      %v1725 = vadd.f32 %v1724, %v1656
      %v1726 = vadd.f32 %v1725, %v1657
      %1727 = vadd.xlane.f32.xlu0 %v1726
      %v1728 = vpop.xlane.xlu0 %1727
      %v1729 = vadd.f32 %v1658, %v1659
      %v1730 = vadd.f32 %v1729, %v1660
      %v1731 = vadd.f32 %v1730, %v1661
      %1732 = vadd.xlane.f32.xlu0 %v1731
      %v1733 = vpop.xlane.xlu0 %1732
      %v1734 = vadd.f32 %v1662, %v1663
      %v1735 = vadd.f32 %v1734, %v1664
      %v1736 = vadd.f32 %v1735, %v1665
      %1737 = vadd.xlane.f32.xlu0 %v1736
      %v1738 = vpop.xlane.xlu0 %1737
      %v1739 = vadd.f32 %v1666, %v1667
      %v1740 = vadd.f32 %v1739, %v1668
      %v1741 = vadd.f32 %v1740, %v1669
      %1742 = vadd.xlane.f32.xlu0 %v1741
      %v1743 = vpop.xlane.xlu0 %1742
      %v1744 = vadd.f32 %v1670, %v1671
      %v1745 = vadd.f32 %v1744, %v1672
      %v1746 = vadd.f32 %v1745, %v1673
      %1747 = vadd.xlane.f32.xlu0 %v1746
      %v1748 = vpop.xlane.xlu0 %1747
      %v1749 = vadd.f32 %v1674, %v1675
      %v1750 = vadd.f32 %v1749, %v1676
      %v1751 = vadd.f32 %v1750, %v1677
      %1752 = vadd.xlane.f32.xlu0 %v1751
      %v1753 = vpop.xlane.xlu0 %1752
      %v1754 = vadd.f32 %v1678, %v1679
      %v1755 = vadd.f32 %v1754, %v1680
      %v1756 = vadd.f32 %v1755, %v1681
      %1757 = vadd.xlane.f32.xlu0 %v1756
      %v1758 = vpop.xlane.xlu0 %1757
      %v1759 = vadd.f32 %v1682, %v1683
      %v1760 = vadd.f32 %v1759, %v1684
      %v1761 = vadd.f32 %v1760, %v1685
      %1762 = vadd.xlane.f32.xlu0 %v1761
      %v1763 = vpop.xlane.xlu0 %1762
      %v1764 = vadd.f32 %v1686, %v1687
      %v1765 = vadd.f32 %v1764, %v1688
      %v1766 = vadd.f32 %v1765, %v1689
      %1767 = vadd.xlane.f32.xlu0 %v1766
      %v1768 = vpop.xlane.xlu0 %1767
      %v1769 = vadd.f32 %v1690, %v1691
      %v1770 = vadd.f32 %v1769, %v1692
      %v1771 = vadd.f32 %v1770, %v1693
      %1772 = vadd.xlane.f32.xlu0 %v1771
      %v1773 = vpop.xlane.xlu0 %1772
      %v1774 = vld [vmem:[%s2] sm:$0xf]
      %v1775 = vld [vmem:[%s2 + $0x4] sm:$0xf]
      %v1776 = vld [vmem:[%s2 + $0x8] sm:$0xf]
      %v1777 = vld [vmem:[%s2 + $0xc] sm:$0xf]
      %v1778 = vld [vmem:[%s2 + $0x10] sm:$0xf]
      %v1779 = vld [vmem:[%s2 + $0x14] sm:$0xf]
      %v1780 = vld [vmem:[%s2 + $0x18] sm:$0xf]
      %v1781 = vld [vmem:[%s2 + $0x1c] sm:$0xf]
      %v1782 = vld [vmem:[%s2 + $0x20] sm:$0xf]
      %v1783 = vld [vmem:[%s2 + $0x24] sm:$0xf]
      %v1784 = vld [vmem:[%s2 + $0x28] sm:$0xf]
      %v1785 = vld [vmem:[%s2 + $0x2c] sm:$0xf]
      %v1786 = vld [vmem:[%s2 + $0x30] sm:$0xf]
      %v1787 = vld [vmem:[%s2 + $0x34] sm:$0xf]
      %v1788 = vld [vmem:[%s2 + $0x38] sm:$0xf]
      %v1789 = vld [vmem:[%s2 + $0x3c] sm:$0xf]
      %v1790 = vld [vmem:[%s2 + $0x40] sm:$0xf]
      %v1791 = vld [vmem:[%s2 + $0x44] sm:$0xf]
      %v1792 = vld [vmem:[%s2 + $0x48] sm:$0xf]
      %v1793 = vld [vmem:[%s2 + $0x4c] sm:$0xf]
      %v1794 = vld [vmem:[%s2 + $0x50] sm:$0xf]
      %v1795 = vld [vmem:[%s2 + $0x54] sm:$0xf]
      %v1796 = vld [vmem:[%s2 + $0x58] sm:$0xf]
      %v1797 = vld [vmem:[%s2 + $0x5c] sm:$0xf]
      %v1798 = vld [vmem:[%s2 + $0x60] sm:$0xf]
      %v1799 = vld [vmem:[%s2 + $0x64] sm:$0xf]
      %v1800 = vld [vmem:[%s2 + $0x68] sm:$0xf]
      %v1801 = vld [vmem:[%s2 + $0x6c] sm:$0xf]
      %v1802 = vld [vmem:[%s2 + $0x70] sm:$0xf]
      %v1803 = vld [vmem:[%s2 + $0x74] sm:$0xf]
      %v1804 = vld [vmem:[%s2 + $0x78] sm:$0xf]
      %v1805 = vld [vmem:[%s2 + $0x7c] sm:$0xf]
      %v1806 = vld [vmem:[%s2 + $0x80] sm:$0xf]
      %v1807 = vld [vmem:[%s2 + $0x84] sm:$0xf]
      %v1808 = vld [vmem:[%s2 + $0x88] sm:$0xf]
      %v1809 = vld [vmem:[%s2 + $0x8c] sm:$0xf]
      %v1810 = vld [vmem:[%s2 + $0x90] sm:$0xf]
      %v1811 = vld [vmem:[%s2 + $0x94] sm:$0xf]
      %v1812 = vld [vmem:[%s2 + $0x98] sm:$0xf]
      %v1813 = vld [vmem:[%s2 + $0x9c] sm:$0xf]
      %v1814 = vld [vmem:[%s2 + $0xa0] sm:$0xf]
      %v1815 = vld [vmem:[%s2 + $0xa4] sm:$0xf]
      %v1816 = vld [vmem:[%s2 + $0xa8] sm:$0xf]
      %v1817 = vld [vmem:[%s2 + $0xac] sm:$0xf]
      %v1818 = vld [vmem:[%s2 + $0xb0] sm:$0xf]
      %v1819 = vld [vmem:[%s2 + $0xb4] sm:$0xf]
      %v1820 = vld [vmem:[%s2 + $0xb8] sm:$0xf]
      %v1821 = vld [vmem:[%s2 + $0xbc] sm:$0xf]
      %v1822 = vld [vmem:[%s2 + $0xc0] sm:$0xf]
      %v1823 = vld [vmem:[%s2 + $0xc4] sm:$0xf]
      %v1824 = vld [vmem:[%s2 + $0xc8] sm:$0xf]
      %v1825 = vld [vmem:[%s2 + $0xcc] sm:$0xf]
      %v1826 = vld [vmem:[%s2 + $0xd0] sm:$0xf]
      %v1827 = vld [vmem:[%s2 + $0xd4] sm:$0xf]
      %v1828 = vld [vmem:[%s2 + $0xd8] sm:$0xf]
      %v1829 = vld [vmem:[%s2 + $0xdc] sm:$0xf]
      %v1830 = vld [vmem:[%s2 + $0xe0] sm:$0xf]
      %v1831 = vld [vmem:[%s2 + $0xe4] sm:$0xf]
      %v1832 = vld [vmem:[%s2 + $0xe8] sm:$0xf]
      %v1833 = vld [vmem:[%s2 + $0xec] sm:$0xf]
      %v1834 = vld [vmem:[%s2 + $0xf0] sm:$0xf]
      %v1835 = vld [vmem:[%s2 + $0xf4] sm:$0xf]
      %v1836 = vld [vmem:[%s2 + $0xf8] sm:$0xf]
      %v1837 = vld [vmem:[%s2 + $0xfc] sm:$0xf]
      %v1902 = vunpack.c.l.b16 %v1774
      %v1903 = vunpack.c.l.b16 %v1775
      %v1904 = vunpack.c.l.b16 %v1776
      %v1905 = vunpack.c.l.b16 %v1777
      %v1906 = vunpack.c.l.b16 %v1778
      %v1907 = vunpack.c.l.b16 %v1779
      %v1908 = vunpack.c.l.b16 %v1780
      %v1909 = vunpack.c.l.b16 %v1781
      %v1910 = vunpack.c.l.b16 %v1782
      %v1911 = vunpack.c.l.b16 %v1783
      %v1912 = vunpack.c.l.b16 %v1784
      %v1913 = vunpack.c.l.b16 %v1785
      %v1914 = vunpack.c.l.b16 %v1786
      %v1915 = vunpack.c.l.b16 %v1787
      %v1916 = vunpack.c.l.b16 %v1788
      %v1917 = vunpack.c.l.b16 %v1789
      %v1918 = vunpack.c.l.b16 %v1790
      %v1919 = vunpack.c.l.b16 %v1791
      %v1920 = vunpack.c.l.b16 %v1792
      %v1921 = vunpack.c.l.b16 %v1793
      %v1922 = vunpack.c.l.b16 %v1794
      %v1923 = vunpack.c.l.b16 %v1795
      %v1924 = vunpack.c.l.b16 %v1796
      %v1925 = vunpack.c.l.b16 %v1797
      %v1926 = vunpack.c.l.b16 %v1798
      %v1927 = vunpack.c.l.b16 %v1799
      %v1928 = vunpack.c.l.b16 %v1800
      %v1929 = vunpack.c.l.b16 %v1801
      %v1930 = vunpack.c.l.b16 %v1802
      %v1931 = vunpack.c.l.b16 %v1803
      %v1932 = vunpack.c.l.b16 %v1804
      %v1933 = vunpack.c.l.b16 %v1805
      %v1934 = vunpack.c.l.b16 %v1806
      %v1935 = vunpack.c.l.b16 %v1807
      %v1936 = vunpack.c.l.b16 %v1808
      %v1937 = vunpack.c.l.b16 %v1809
      %v1938 = vunpack.c.l.b16 %v1810
      %v1939 = vunpack.c.l.b16 %v1811
      %v1940 = vunpack.c.l.b16 %v1812
      %v1941 = vunpack.c.l.b16 %v1813
      %v1942 = vunpack.c.l.b16 %v1814
      %v1943 = vunpack.c.l.b16 %v1815
      %v1944 = vunpack.c.l.b16 %v1816
      %v1945 = vunpack.c.l.b16 %v1817
      %v1946 = vunpack.c.l.b16 %v1818
      %v1947 = vunpack.c.l.b16 %v1819
      %v1948 = vunpack.c.l.b16 %v1820
      %v1949 = vunpack.c.l.b16 %v1821
      %v1950 = vunpack.c.l.b16 %v1822
      %v1951 = vunpack.c.l.b16 %v1823
      %v1952 = vunpack.c.l.b16 %v1824
      %v1953 = vunpack.c.l.b16 %v1825
      %v1954 = vunpack.c.l.b16 %v1826
      %v1955 = vunpack.c.l.b16 %v1827
      %v1956 = vunpack.c.l.b16 %v1828
      %v1957 = vunpack.c.l.b16 %v1829
      %v1958 = vunpack.c.l.b16 %v1830
      %v1959 = vunpack.c.l.b16 %v1831
      %v1960 = vunpack.c.l.b16 %v1832
      %v1961 = vunpack.c.l.b16 %v1833
      %v1962 = vunpack.c.l.b16 %v1834
      %v1963 = vunpack.c.l.b16 %v1835
      %v1964 = vunpack.c.l.b16 %v1836
      %v1965 = vunpack.c.l.b16 %v1837
      %v1966 = vpack.c.b16 %v1903, %v1902
      %v1967 = vpack.c.b16 %v1905, %v1904
      %v1968 = vpack.c.b16 %v1907, %v1906
      %v1969 = vpack.c.b16 %v1909, %v1908
      %v1970 = vpack.c.b16 %v1911, %v1910
      %v1971 = vpack.c.b16 %v1913, %v1912
      %v1972 = vpack.c.b16 %v1915, %v1914
      %v1973 = vpack.c.b16 %v1917, %v1916
      %v1974 = vpack.c.b16 %v1919, %v1918
      %v1975 = vpack.c.b16 %v1921, %v1920
      %v1976 = vpack.c.b16 %v1923, %v1922
      %v1977 = vpack.c.b16 %v1925, %v1924
      %v1978 = vpack.c.b16 %v1927, %v1926
      %v1979 = vpack.c.b16 %v1929, %v1928
      %v1980 = vpack.c.b16 %v1931, %v1930
      %v1981 = vpack.c.b16 %v1933, %v1932
      %v1982 = vpack.c.b16 %v1935, %v1934
      %v1983 = vpack.c.b16 %v1937, %v1936
      %v1984 = vpack.c.b16 %v1939, %v1938
      %v1985 = vpack.c.b16 %v1941, %v1940
      %v1986 = vpack.c.b16 %v1943, %v1942
      %v1987 = vpack.c.b16 %v1945, %v1944
      %v1988 = vpack.c.b16 %v1947, %v1946
      %v1989 = vpack.c.b16 %v1949, %v1948
      %v1990 = vpack.c.b16 %v1951, %v1950
      %v1991 = vpack.c.b16 %v1953, %v1952
      %v1992 = vpack.c.b16 %v1955, %v1954
      %v1993 = vpack.c.b16 %v1957, %v1956
      %v1994 = vpack.c.b16 %v1959, %v1958
      %v1995 = vpack.c.b16 %v1961, %v1960
      %v1996 = vpack.c.b16 %v1963, %v1962
      %v1997 = vpack.c.b16 %v1965, %v1964
      %2030 = vmatprep.subr.bf16.mxu0 0
      %2031 = vmatpush1.bf16.msra.mxu0 %v1973
      %2032 = vmatprep.subr.bf16.mxu0 0
      %2033 = vmatpush1.bf16.msra.mxu0 %v1972
      %2034 = vmatprep.subr.bf16.mxu0 0
      %2035 = vmatpush1.bf16.msra.mxu0 %v1971
      %2036 = vmatprep.subr.bf16.mxu0 0
      %2037 = vmatpush1.bf16.msra.mxu0 %v1970
      %2038 = vmatprep.subr.bf16.mxu0 0
      %2039 = vmatpush1.bf16.msra.mxu0 %v1969
      %2040 = vmatprep.subr.bf16.mxu0 0
      %2041 = vmatpush1.bf16.msra.mxu0 %v1968
      %2042 = vmatprep.subr.bf16.mxu0 0
      %2043 = vmatpush1.bf16.msra.mxu0 %v1967
      %2044 = vmatprep.subr.bf16.mxu0 0
      %2045 = vmatpush1.bf16.msra.mxu0 %v1966
      %2046 = vmatprep.subr.bf16.mxu0 0
      %2047 = vmatpush2.bf16.msra.mxu0 %v1981
      %2048 = vmatprep.subr.bf16.mxu0 0
      %2049 = vmatpush2.bf16.msra.mxu0 %v1980
      %2050 = vmatprep.subr.bf16.mxu0 0
      %2051 = vmatpush2.bf16.msra.mxu0 %v1979
      %2052 = vmatprep.subr.bf16.mxu0 0
      %2053 = vmatpush2.bf16.msra.mxu0 %v1978
      %2054 = vmatprep.subr.bf16.mxu0 0
      %2055 = vmatpush2.bf16.msra.mxu0 %v1977
      %2056 = vmatprep.subr.bf16.mxu0 0
      %2057 = vmatpush2.bf16.msra.mxu0 %v1976
      %2058 = vmatprep.subr.bf16.mxu0 0
      %2059 = vmatpush2.bf16.msra.mxu0 %v1975
      %2060 = vmatprep.subr.bf16.mxu0 0
      %2061 = vmatpush2.bf16.msra.mxu0 %v1974
      %2062 = vmatprep.mubr.bf16.mxu0 %v1577
      %2063 = vmatmul.mubr.bf16.gmra.mxu0 %v1576
      %v2064 = vpop.f32.mrf.mxu0
      %v2065 = vadd.f32 0.0, %v2064
      %v2066 = vpop.f32.mrf.mxu0
      %v2067 = vpop.f32.mrf.mxu0
      %v2068 = vadd.f32 0.0, %v2067
      %v2069 = vpop.f32.mrf.mxu0
      %2070 = vmatprep.mubr.bf16.mxu0 %v1581
      %2071 = vmatmul.mubr.bf16.gmra.mxu0 %v1580
      %v2072 = vpop.f32.mrf.mxu0
      %v2073 = vadd.f32 0.0, %v2072
      %v2074 = vpop.f32.mrf.mxu0
      %v2075 = vpop.f32.mrf.mxu0
      %v2076 = vadd.f32 0.0, %v2075
      %v2077 = vpop.f32.mrf.mxu0
      %2078 = vmatprep.mubr.bf16.mxu0 %v1585
      %2079 = vmatmul.mubr.bf16.gmra.mxu0 %v1584
      %v2080 = vpop.f32.mrf.mxu0
      %v2081 = vadd.f32 0.0, %v2080
      %v2082 = vpop.f32.mrf.mxu0
      %v2083 = vpop.f32.mrf.mxu0
      %v2084 = vadd.f32 0.0, %v2083
      %v2085 = vpop.f32.mrf.mxu0
      %2086 = vmatprep.mubr.bf16.mxu0 %v1589
      %2087 = vmatmul.mubr.bf16.gmra.mxu0 %v1588
      %v2088 = vpop.f32.mrf.mxu0
      %v2089 = vadd.f32 0.0, %v2088
      %v2090 = vpop.f32.mrf.mxu0
      %v2091 = vpop.f32.mrf.mxu0
      %v2092 = vadd.f32 0.0, %v2091
      %v2093 = vpop.f32.mrf.mxu0
      %2094 = vmatprep.mubr.bf16.mxu0 %v1593
      %2095 = vmatmul.mubr.bf16.gmra.mxu0 %v1592
      %v2096 = vpop.f32.mrf.mxu0
      %v2097 = vadd.f32 0.0, %v2096
      %v2098 = vpop.f32.mrf.mxu0
      %v2099 = vpop.f32.mrf.mxu0
      %v2100 = vadd.f32 0.0, %v2099
      %v2101 = vpop.f32.mrf.mxu0
      %2102 = vmatprep.mubr.bf16.mxu0 %v1597
      %2103 = vmatmul.mubr.bf16.gmra.mxu0 %v1596
      %v2104 = vpop.f32.mrf.mxu0
      %v2105 = vadd.f32 0.0, %v2104
      %v2106 = vpop.f32.mrf.mxu0
      %v2107 = vpop.f32.mrf.mxu0
      %v2108 = vadd.f32 0.0, %v2107
      %v2109 = vpop.f32.mrf.mxu0
      %2110 = vmatprep.mubr.bf16.mxu0 %v1601
      %2111 = vmatmul.mubr.bf16.gmra.mxu0 %v1600
      %v2112 = vpop.f32.mrf.mxu0
      %v2113 = vadd.f32 0.0, %v2112
      %v2114 = vpop.f32.mrf.mxu0
      %v2115 = vpop.f32.mrf.mxu0
      %v2116 = vadd.f32 0.0, %v2115
      %v2117 = vpop.f32.mrf.mxu0
      %2118 = vmatprep.mubr.bf16.mxu0 %v1605
      %2119 = vmatmul.mubr.bf16.gmra.mxu0 %v1604
      %v2120 = vpop.f32.mrf.mxu0
      %v2121 = vadd.f32 0.0, %v2120
      %v2122 = vpop.f32.mrf.mxu0
      %v2123 = vpop.f32.mrf.mxu0
      %v2124 = vadd.f32 0.0, %v2123
      %v2125 = vpop.f32.mrf.mxu0
      %2126 = vdwg.mxu0
      %2127 = vmatprep.subr.bf16.mxu0 0
      %2128 = vmatpush1.bf16.msra.mxu0 %v1989
      %2129 = vmatprep.subr.bf16.mxu0 0
      %2130 = vmatpush1.bf16.msra.mxu0 %v1988
      %2131 = vmatprep.subr.bf16.mxu0 0
      %2132 = vmatpush1.bf16.msra.mxu0 %v1987
      %2133 = vmatprep.subr.bf16.mxu0 0
      %2134 = vmatpush1.bf16.msra.mxu0 %v1986
      %2135 = vmatprep.subr.bf16.mxu0 0
      %2136 = vmatpush1.bf16.msra.mxu0 %v1985
      %2137 = vmatprep.subr.bf16.mxu0 0
      %2138 = vmatpush1.bf16.msra.mxu0 %v1984
      %2139 = vmatprep.subr.bf16.mxu0 0
      %2140 = vmatpush1.bf16.msra.mxu0 %v1983
      %2141 = vmatprep.subr.bf16.mxu0 0
      %2142 = vmatpush1.bf16.msra.mxu0 %v1982
      %2143 = vmatprep.subr.bf16.mxu0 0
      %2144 = vmatpush2.bf16.msra.mxu0 %v1997
      %2145 = vmatprep.subr.bf16.mxu0 0
      %2146 = vmatpush2.bf16.msra.mxu0 %v1996
      %2147 = vmatprep.subr.bf16.mxu0 0
      %2148 = vmatpush2.bf16.msra.mxu0 %v1995
      %2149 = vmatprep.subr.bf16.mxu0 0
      %2150 = vmatpush2.bf16.msra.mxu0 %v1994
      %2151 = vmatprep.subr.bf16.mxu0 0
      %2152 = vmatpush2.bf16.msra.mxu0 %v1993
      %2153 = vmatprep.subr.bf16.mxu0 0
      %2154 = vmatpush2.bf16.msra.mxu0 %v1992
      %2155 = vmatprep.subr.bf16.mxu0 0
      %2156 = vmatpush2.bf16.msra.mxu0 %v1991
      %2157 = vmatprep.subr.bf16.mxu0 0
      %2158 = vmatpush2.bf16.msra.mxu0 %v1990
      %2159 = vmatprep.mubr.bf16.mxu0 %v1579
      %2160 = vmatmul.mubr.bf16.gmra.mxu0 %v1578
      %v2161 = vpop.f32.mrf.mxu0
      %v2162 = vadd.f32 %v2065, %v2161
      %v2163 = vpop.f32.mrf.mxu0
      %v2164 = vpop.f32.mrf.mxu0
      %v2165 = vadd.f32 %v2068, %v2164
      %v2166 = vpop.f32.mrf.mxu0
      %2167 = vmatprep.mubr.bf16.mxu0 %v1583
      %2168 = vmatmul.mubr.bf16.gmra.mxu0 %v1582
      %v2169 = vpop.f32.mrf.mxu0
      %v2170 = vadd.f32 %v2073, %v2169
      %v2171 = vpop.f32.mrf.mxu0
      %v2172 = vpop.f32.mrf.mxu0
      %v2173 = vadd.f32 %v2076, %v2172
      %v2174 = vpop.f32.mrf.mxu0
      %2175 = vmatprep.mubr.bf16.mxu0 %v1587
      %2176 = vmatmul.mubr.bf16.gmra.mxu0 %v1586
      %v2177 = vpop.f32.mrf.mxu0
      %v2178 = vadd.f32 %v2081, %v2177
      %v2179 = vpop.f32.mrf.mxu0
      %v2180 = vpop.f32.mrf.mxu0
      %v2181 = vadd.f32 %v2084, %v2180
      %v2182 = vpop.f32.mrf.mxu0
      %2183 = vmatprep.mubr.bf16.mxu0 %v1591
      %2184 = vmatmul.mubr.bf16.gmra.mxu0 %v1590
      %v2185 = vpop.f32.mrf.mxu0
      %v2186 = vadd.f32 %v2089, %v2185
      %v2187 = vpop.f32.mrf.mxu0
      %v2188 = vpop.f32.mrf.mxu0
      %v2189 = vadd.f32 %v2092, %v2188
      %v2190 = vpop.f32.mrf.mxu0
      %2191 = vmatprep.mubr.bf16.mxu0 %v1595
      %2192 = vmatmul.mubr.bf16.gmra.mxu0 %v1594
      %v2193 = vpop.f32.mrf.mxu0
      %v2194 = vadd.f32 %v2097, %v2193
      %v2195 = vpop.f32.mrf.mxu0
      %v2196 = vpop.f32.mrf.mxu0
      %v2197 = vadd.f32 %v2100, %v2196
      %v2198 = vpop.f32.mrf.mxu0
      %2199 = vmatprep.mubr.bf16.mxu0 %v1599
      %2200 = vmatmul.mubr.bf16.gmra.mxu0 %v1598
      %v2201 = vpop.f32.mrf.mxu0
      %v2202 = vadd.f32 %v2105, %v2201
      %v2203 = vpop.f32.mrf.mxu0
      %v2204 = vpop.f32.mrf.mxu0
      %v2205 = vadd.f32 %v2108, %v2204
      %v2206 = vpop.f32.mrf.mxu0
      %2207 = vmatprep.mubr.bf16.mxu0 %v1603
      %2208 = vmatmul.mubr.bf16.gmra.mxu0 %v1602
      %v2209 = vpop.f32.mrf.mxu0
      %v2210 = vadd.f32 %v2113, %v2209
      %v2211 = vpop.f32.mrf.mxu0
      %v2212 = vpop.f32.mrf.mxu0
      %v2213 = vadd.f32 %v2116, %v2212
      %v2214 = vpop.f32.mrf.mxu0
      %2215 = vmatprep.mubr.bf16.mxu0 %v1607
      %2216 = vmatmul.mubr.bf16.gmra.mxu0 %v1606
      %v2217 = vpop.f32.mrf.mxu0
      %v2218 = vadd.f32 %v2121, %v2217
      %v2219 = vpop.f32.mrf.mxu0
      %v2220 = vpop.f32.mrf.mxu0
      %v2221 = vadd.f32 %v2124, %v2220
      %v2222 = vpop.f32.mrf.mxu0
      %2223 = vdwg.mxu0
      %v2224 = vmul.f32 %v2162, %v2162
      %v2225 = vmul.f32 %v2165, %v2165
      %v2226 = vmul.f32 %v2170, %v2170
      %v2227 = vmul.f32 %v2173, %v2173
      %v2228 = vmul.f32 %v2178, %v2178
      %v2229 = vmul.f32 %v2181, %v2181
      %v2230 = vmul.f32 %v2186, %v2186
      %v2231 = vmul.f32 %v2189, %v2189
      %v2232 = vmul.f32 %v2194, %v2194
      %v2233 = vmul.f32 %v2197, %v2197
      %v2234 = vmul.f32 %v2202, %v2202
      %v2235 = vmul.f32 %v2205, %v2205
      %v2236 = vmul.f32 %v2210, %v2210
      %v2237 = vmul.f32 %v2213, %v2213
      %v2238 = vmul.f32 %v2218, %v2218
      %v2239 = vmul.f32 %v2221, %v2221
      %vm2240 = vcmask 130048
      %v2241 = vsel %vm2240, %v2224, 0.0
      %2242 = vadd.xlane.f32.xlu0 %v2241
      %v2243 = vpop.xlane.xlu0 %2242
      %v2244 = vsel %vm2240, %v2225, 0.0
      %2245 = vadd.xlane.f32.xlu0 %v2244
      %v2246 = vpop.xlane.xlu0 %2245
      %v2247 = vsel %vm2240, %v2226, 0.0
      %2248 = vadd.xlane.f32.xlu0 %v2247
      %v2249 = vpop.xlane.xlu0 %2248
      %v2250 = vsel %vm2240, %v2227, 0.0
      %2251 = vadd.xlane.f32.xlu0 %v2250
      %v2252 = vpop.xlane.xlu0 %2251
      %v2253 = vsel %vm2240, %v2228, 0.0
      %2254 = vadd.xlane.f32.xlu0 %v2253
      %v2255 = vpop.xlane.xlu0 %2254
      %v2256 = vsel %vm2240, %v2229, 0.0
      %2257 = vadd.xlane.f32.xlu0 %v2256
      %v2258 = vpop.xlane.xlu0 %2257
      %v2259 = vsel %vm2240, %v2230, 0.0
      %2260 = vadd.xlane.f32.xlu0 %v2259
      %v2261 = vpop.xlane.xlu0 %2260
      %v2262 = vsel %vm2240, %v2231, 0.0
      %2263 = vadd.xlane.f32.xlu0 %v2262
      %v2264 = vpop.xlane.xlu0 %2263
      %v2265 = vsel %vm2240, %v2232, 0.0
      %2266 = vadd.xlane.f32.xlu0 %v2265
      %v2267 = vpop.xlane.xlu0 %2266
      %v2268 = vsel %vm2240, %v2233, 0.0
      %2269 = vadd.xlane.f32.xlu0 %v2268
      %v2270 = vpop.xlane.xlu0 %2269
      %v2271 = vsel %vm2240, %v2234, 0.0
      %2272 = vadd.xlane.f32.xlu0 %v2271
      %v2273 = vpop.xlane.xlu0 %2272
      %v2274 = vsel %vm2240, %v2235, 0.0
      %2275 = vadd.xlane.f32.xlu0 %v2274
      %v2276 = vpop.xlane.xlu0 %2275
      %v2277 = vsel %vm2240, %v2236, 0.0
      %2278 = vadd.xlane.f32.xlu0 %v2277
      %v2279 = vpop.xlane.xlu0 %2278
      %v2280 = vsel %vm2240, %v2237, 0.0
      %2281 = vadd.xlane.f32.xlu0 %v2280
      %v2282 = vpop.xlane.xlu0 %2281
      %v2283 = vsel %vm2240, %v2238, 0.0
      %2284 = vadd.xlane.f32.xlu0 %v2283
      %v2285 = vpop.xlane.xlu0 %2284
      %v2286 = vsel %vm2240, %v2239, 0.0
      %2287 = vadd.xlane.f32.xlu0 %v2286
      %v2288 = vpop.xlane.xlu0 %2287
      %v2289 = vmul.f32 %v2243, 0.5
      %v2290 = vmul.f32 %v2246, 0.5
      %v2291 = vmul.f32 %v2249, 0.5
      %v2292 = vmul.f32 %v2252, 0.5
      %v2293 = vmul.f32 %v2255, 0.5
      %v2294 = vmul.f32 %v2258, 0.5
      %v2295 = vmul.f32 %v2261, 0.5
      %v2296 = vmul.f32 %v2264, 0.5
      %v2297 = vmul.f32 %v2267, 0.5
      %v2298 = vmul.f32 %v2270, 0.5
      %v2299 = vmul.f32 %v2273, 0.5
      %v2300 = vmul.f32 %v2276, 0.5
      %v2301 = vmul.f32 %v2279, 0.5
      %v2302 = vmul.f32 %v2282, 0.5
      %v2303 = vmul.f32 %v2285, 0.5
      %v2304 = vmul.f32 %v2288, 0.5
      %v2305 = vadd.f32 %v1698, %v2289
      %v2306 = vadd.f32 %v1703, %v2290
      %v2307 = vadd.f32 %v1708, %v2291
      %v2308 = vadd.f32 %v1713, %v2292
      %v2309 = vadd.f32 %v1718, %v2293
      %v2310 = vadd.f32 %v1723, %v2294
      %v2311 = vadd.f32 %v1728, %v2295
      %v2312 = vadd.f32 %v1733, %v2296
      %v2313 = vadd.f32 %v1738, %v2297
      %v2314 = vadd.f32 %v1743, %v2298
      %v2315 = vadd.f32 %v1748, %v2299
      %v2316 = vadd.f32 %v1753, %v2300
      %v2317 = vadd.f32 %v1758, %v2301
      %v2318 = vadd.f32 %v1763, %v2302
      %v2319 = vadd.f32 %v1768, %v2303
      %v2320 = vadd.f32 %v1773, %v2304
      %v2321 = vld [vmem:[%s3] sm:$0xf]
      %v2322 = vld [vmem:[%s3 + $0x4] sm:$0xf]
      %v2323 = vld [vmem:[%s3 + $0x8] sm:$0xf]
      %v2324 = vld [vmem:[%s3 + $0xc] sm:$0xf]
      %v2325 = vld [vmem:[%s3 + $0x10] sm:$0xf]
      %v2326 = vld [vmem:[%s3 + $0x14] sm:$0xf]
      %v2327 = vld [vmem:[%s3 + $0x18] sm:$0xf]
      %v2328 = vld [vmem:[%s3 + $0x1c] sm:$0xf]
      %v2329 = vld [vmem:[%s3 + $0x20] sm:$0xf]
      %v2330 = vld [vmem:[%s3 + $0x24] sm:$0xf]
      %v2331 = vld [vmem:[%s3 + $0x28] sm:$0xf]
      %v2332 = vld [vmem:[%s3 + $0x2c] sm:$0xf]
      %v2333 = vld [vmem:[%s3 + $0x30] sm:$0xf]
      %v2334 = vld [vmem:[%s3 + $0x34] sm:$0xf]
      %v2335 = vld [vmem:[%s3 + $0x38] sm:$0xf]
      %v2336 = vld [vmem:[%s3 + $0x3c] sm:$0xf]
      %v2337 = vld [vmem:[%s3 + $0x40] sm:$0xf]
      %v2338 = vld [vmem:[%s3 + $0x44] sm:$0xf]
      %v2339 = vld [vmem:[%s3 + $0x48] sm:$0xf]
      %v2340 = vld [vmem:[%s3 + $0x4c] sm:$0xf]
      %v2341 = vld [vmem:[%s3 + $0x50] sm:$0xf]
      %v2342 = vld [vmem:[%s3 + $0x54] sm:$0xf]
      %v2343 = vld [vmem:[%s3 + $0x58] sm:$0xf]
      %v2344 = vld [vmem:[%s3 + $0x5c] sm:$0xf]
      %v2345 = vld [vmem:[%s3 + $0x60] sm:$0xf]
      %v2346 = vld [vmem:[%s3 + $0x64] sm:$0xf]
      %v2347 = vld [vmem:[%s3 + $0x68] sm:$0xf]
      %v2348 = vld [vmem:[%s3 + $0x6c] sm:$0xf]
      %v2349 = vld [vmem:[%s3 + $0x70] sm:$0xf]
      %v2350 = vld [vmem:[%s3 + $0x74] sm:$0xf]
      %v2351 = vld [vmem:[%s3 + $0x78] sm:$0xf]
      %v2352 = vld [vmem:[%s3 + $0x7c] sm:$0xf]
      %v2353 = vld [vmem:[%s3 + $0x80] sm:$0xf]
      %v2354 = vld [vmem:[%s3 + $0x84] sm:$0xf]
      %v2355 = vld [vmem:[%s3 + $0x88] sm:$0xf]
      %v2356 = vld [vmem:[%s3 + $0x8c] sm:$0xf]
      %v2357 = vld [vmem:[%s3 + $0x90] sm:$0xf]
      %v2358 = vld [vmem:[%s3 + $0x94] sm:$0xf]
      %v2359 = vld [vmem:[%s3 + $0x98] sm:$0xf]
      %v2360 = vld [vmem:[%s3 + $0x9c] sm:$0xf]
      %v2361 = vld [vmem:[%s3 + $0xa0] sm:$0xf]
      %v2362 = vld [vmem:[%s3 + $0xa4] sm:$0xf]
      %v2363 = vld [vmem:[%s3 + $0xa8] sm:$0xf]
      %v2364 = vld [vmem:[%s3 + $0xac] sm:$0xf]
      %v2365 = vld [vmem:[%s3 + $0xb0] sm:$0xf]
      %v2366 = vld [vmem:[%s3 + $0xb4] sm:$0xf]
      %v2367 = vld [vmem:[%s3 + $0xb8] sm:$0xf]
      %v2368 = vld [vmem:[%s3 + $0xbc] sm:$0xf]
      %v2369 = vld [vmem:[%s3 + $0xc0] sm:$0xf]
      %v2370 = vld [vmem:[%s3 + $0xc4] sm:$0xf]
      %v2371 = vld [vmem:[%s3 + $0xc8] sm:$0xf]
      %v2372 = vld [vmem:[%s3 + $0xcc] sm:$0xf]
      %v2373 = vld [vmem:[%s3 + $0xd0] sm:$0xf]
      %v2374 = vld [vmem:[%s3 + $0xd4] sm:$0xf]
      %v2375 = vld [vmem:[%s3 + $0xd8] sm:$0xf]
      %v2376 = vld [vmem:[%s3 + $0xdc] sm:$0xf]
      %v2377 = vld [vmem:[%s3 + $0xe0] sm:$0xf]
      %v2378 = vld [vmem:[%s3 + $0xe4] sm:$0xf]
      %v2379 = vld [vmem:[%s3 + $0xe8] sm:$0xf]
      %v2380 = vld [vmem:[%s3 + $0xec] sm:$0xf]
      %v2381 = vld [vmem:[%s3 + $0xf0] sm:$0xf]
      %v2382 = vld [vmem:[%s3 + $0xf4] sm:$0xf]
      %v2383 = vld [vmem:[%s3 + $0xf8] sm:$0xf]
      %v2384 = vld [vmem:[%s3 + $0xfc] sm:$0xf]
      %v2385 = vld [vmem:[%s4] sm:$0x1]
      %v2387 = vlaneseq
      %v2388 = vshrl.u32 %v2387, 7
      %v2389 = vsub.s32 0, %v2388
      %v2390 = vrot.slane %v2385, %v2389
      %v2456 = vunpack.c.l.b16 %v2321
      %v2457 = vunpack.c.l.b16 %v2322
      %v2458 = vunpack.c.l.b16 %v2323
      %v2459 = vunpack.c.l.b16 %v2324
      %v2460 = vunpack.c.l.b16 %v2325
      %v2461 = vunpack.c.l.b16 %v2326
      %v2462 = vunpack.c.l.b16 %v2327
      %v2463 = vunpack.c.l.b16 %v2328
      %v2464 = vunpack.c.l.b16 %v2329
      %v2465 = vunpack.c.l.b16 %v2330
      %v2466 = vunpack.c.l.b16 %v2331
      %v2467 = vunpack.c.l.b16 %v2332
      %v2468 = vunpack.c.l.b16 %v2333
      %v2469 = vunpack.c.l.b16 %v2334
      %v2470 = vunpack.c.l.b16 %v2335
      %v2471 = vunpack.c.l.b16 %v2336
      %v2472 = vunpack.c.l.b16 %v2337
      %v2473 = vunpack.c.l.b16 %v2338
      %v2474 = vunpack.c.l.b16 %v2339
      %v2475 = vunpack.c.l.b16 %v2340
      %v2476 = vunpack.c.l.b16 %v2341
      %v2477 = vunpack.c.l.b16 %v2342
      %v2478 = vunpack.c.l.b16 %v2343
      %v2479 = vunpack.c.l.b16 %v2344
      %v2480 = vunpack.c.l.b16 %v2345
      %v2481 = vunpack.c.l.b16 %v2346
      %v2482 = vunpack.c.l.b16 %v2347
      %v2483 = vunpack.c.l.b16 %v2348
      %v2484 = vunpack.c.l.b16 %v2349
      %v2485 = vunpack.c.l.b16 %v2350
      %v2486 = vunpack.c.l.b16 %v2351
      %v2487 = vunpack.c.l.b16 %v2352
      %v2488 = vunpack.c.l.b16 %v2353
      %v2489 = vunpack.c.l.b16 %v2354
      %v2490 = vunpack.c.l.b16 %v2355
      %v2491 = vunpack.c.l.b16 %v2356
      %v2492 = vunpack.c.l.b16 %v2357
      %v2493 = vunpack.c.l.b16 %v2358
      %v2494 = vunpack.c.l.b16 %v2359
      %v2495 = vunpack.c.l.b16 %v2360
      %v2496 = vunpack.c.l.b16 %v2361
      %v2497 = vunpack.c.l.b16 %v2362
      %v2498 = vunpack.c.l.b16 %v2363
      %v2499 = vunpack.c.l.b16 %v2364
      %v2500 = vunpack.c.l.b16 %v2365
      %v2501 = vunpack.c.l.b16 %v2366
      %v2502 = vunpack.c.l.b16 %v2367
      %v2503 = vunpack.c.l.b16 %v2368
      %v2504 = vunpack.c.l.b16 %v2369
      %v2505 = vunpack.c.l.b16 %v2370
      %v2506 = vunpack.c.l.b16 %v2371
      %v2507 = vunpack.c.l.b16 %v2372
      %v2508 = vunpack.c.l.b16 %v2373
      %v2509 = vunpack.c.l.b16 %v2374
      %v2510 = vunpack.c.l.b16 %v2375
      %v2511 = vunpack.c.l.b16 %v2376
      %v2512 = vunpack.c.l.b16 %v2377
      %v2513 = vunpack.c.l.b16 %v2378
      %v2514 = vunpack.c.l.b16 %v2379
      %v2515 = vunpack.c.l.b16 %v2380
      %v2516 = vunpack.c.l.b16 %v2381
      %v2517 = vunpack.c.l.b16 %v2382
      %v2518 = vunpack.c.l.b16 %v2383
      %v2519 = vunpack.c.l.b16 %v2384
      %v2520 = vpack.c.b16 %v2457, %v2456
      %v2521 = vpack.c.b16 %v2459, %v2458
      %v2522 = vpack.c.b16 %v2461, %v2460
      %v2523 = vpack.c.b16 %v2463, %v2462
      %v2524 = vpack.c.b16 %v2465, %v2464
      %v2525 = vpack.c.b16 %v2467, %v2466
      %v2526 = vpack.c.b16 %v2469, %v2468
      %v2527 = vpack.c.b16 %v2471, %v2470
      %v2528 = vpack.c.b16 %v2473, %v2472
      %v2529 = vpack.c.b16 %v2475, %v2474
      %v2530 = vpack.c.b16 %v2477, %v2476
      %v2531 = vpack.c.b16 %v2479, %v2478
      %v2532 = vpack.c.b16 %v2481, %v2480
      %v2533 = vpack.c.b16 %v2483, %v2482
      %v2534 = vpack.c.b16 %v2485, %v2484
      %v2535 = vpack.c.b16 %v2487, %v2486
      %v2536 = vpack.c.b16 %v2489, %v2488
      %v2537 = vpack.c.b16 %v2491, %v2490
      %v2538 = vpack.c.b16 %v2493, %v2492
      %v2539 = vpack.c.b16 %v2495, %v2494
      %v2540 = vpack.c.b16 %v2497, %v2496
      %v2541 = vpack.c.b16 %v2499, %v2498
      %v2542 = vpack.c.b16 %v2501, %v2500
      %v2543 = vpack.c.b16 %v2503, %v2502
      %v2544 = vpack.c.b16 %v2505, %v2504
      %v2545 = vpack.c.b16 %v2507, %v2506
      %v2546 = vpack.c.b16 %v2509, %v2508
      %v2547 = vpack.c.b16 %v2511, %v2510
      %v2548 = vpack.c.b16 %v2513, %v2512
      %v2549 = vpack.c.b16 %v2515, %v2514
      %v2550 = vpack.c.b16 %v2517, %v2516
      %v2551 = vpack.c.b16 %v2519, %v2518
      %2584 = vmatprep.subr.bf16.mxu0 0
      %2585 = vmatpush1.bf16.msra.mxu0 %v2527
      %2586 = vmatprep.subr.bf16.mxu0 0
      %2587 = vmatpush1.bf16.msra.mxu0 %v2526
      %2588 = vmatprep.subr.bf16.mxu0 0
      %2589 = vmatpush1.bf16.msra.mxu0 %v2525
      %2590 = vmatprep.subr.bf16.mxu0 0
      %2591 = vmatpush1.bf16.msra.mxu0 %v2524
      %2592 = vmatprep.subr.bf16.mxu0 0
      %2593 = vmatpush1.bf16.msra.mxu0 %v2523
      %2594 = vmatprep.subr.bf16.mxu0 0
      %2595 = vmatpush1.bf16.msra.mxu0 %v2522
      %2596 = vmatprep.subr.bf16.mxu0 0
      %2597 = vmatpush1.bf16.msra.mxu0 %v2521
      %2598 = vmatprep.subr.bf16.mxu0 0
      %2599 = vmatpush1.bf16.msra.mxu0 %v2520
      %2600 = vmatprep.subr.bf16.mxu0 0
      %2601 = vmatpush2.bf16.msra.mxu0 %v2535
      %2602 = vmatprep.subr.bf16.mxu0 0
      %2603 = vmatpush2.bf16.msra.mxu0 %v2534
      %2604 = vmatprep.subr.bf16.mxu0 0
      %2605 = vmatpush2.bf16.msra.mxu0 %v2533
      %2606 = vmatprep.subr.bf16.mxu0 0
      %2607 = vmatpush2.bf16.msra.mxu0 %v2532
      %2608 = vmatprep.subr.bf16.mxu0 0
      %2609 = vmatpush2.bf16.msra.mxu0 %v2531
      %2610 = vmatprep.subr.bf16.mxu0 0
      %2611 = vmatpush2.bf16.msra.mxu0 %v2530
      %2612 = vmatprep.subr.bf16.mxu0 0
      %2613 = vmatpush2.bf16.msra.mxu0 %v2529
      %2614 = vmatprep.subr.bf16.mxu0 0
      %2615 = vmatpush2.bf16.msra.mxu0 %v2528
      %2616 = vmatprep.mubr.bf16.mxu0 %v1577
      %2617 = vmatmul.mubr.bf16.gmra.mxu0 %v1576
      %v2618 = vpop.f32.mrf.mxu0
      %v2619 = vadd.f32 %v2390, %v2618
      %v2620 = vpop.f32.mrf.mxu0
      %v2621 = vpop.f32.mrf.mxu0
      %v2622 = vadd.f32 %v2390, %v2621
      %v2623 = vpop.f32.mrf.mxu0
      %2624 = vmatprep.mubr.bf16.mxu0 %v1581
      %2625 = vmatmul.mubr.bf16.gmra.mxu0 %v1580
      %v2626 = vpop.f32.mrf.mxu0
      %v2627 = vadd.f32 %v2390, %v2626
      %v2628 = vpop.f32.mrf.mxu0
      %v2629 = vpop.f32.mrf.mxu0
      %v2630 = vadd.f32 %v2390, %v2629
      %v2631 = vpop.f32.mrf.mxu0
      %2632 = vmatprep.mubr.bf16.mxu0 %v1585
      %2633 = vmatmul.mubr.bf16.gmra.mxu0 %v1584
      %v2634 = vpop.f32.mrf.mxu0
      %v2635 = vadd.f32 %v2390, %v2634
      %v2636 = vpop.f32.mrf.mxu0
      %v2637 = vpop.f32.mrf.mxu0
      %v2638 = vadd.f32 %v2390, %v2637
      %v2639 = vpop.f32.mrf.mxu0
      %2640 = vmatprep.mubr.bf16.mxu0 %v1589
      %2641 = vmatmul.mubr.bf16.gmra.mxu0 %v1588
      %v2642 = vpop.f32.mrf.mxu0
      %v2643 = vadd.f32 %v2390, %v2642
      %v2644 = vpop.f32.mrf.mxu0
      %v2645 = vpop.f32.mrf.mxu0
      %v2646 = vadd.f32 %v2390, %v2645
      %v2647 = vpop.f32.mrf.mxu0
      %2648 = vmatprep.mubr.bf16.mxu0 %v1593
      %2649 = vmatmul.mubr.bf16.gmra.mxu0 %v1592
      %v2650 = vpop.f32.mrf.mxu0
      %v2651 = vadd.f32 %v2390, %v2650
      %v2652 = vpop.f32.mrf.mxu0
      %v2653 = vpop.f32.mrf.mxu0
      %v2654 = vadd.f32 %v2390, %v2653
      %v2655 = vpop.f32.mrf.mxu0
      %2656 = vmatprep.mubr.bf16.mxu0 %v1597
      %2657 = vmatmul.mubr.bf16.gmra.mxu0 %v1596
      %v2658 = vpop.f32.mrf.mxu0
      %v2659 = vadd.f32 %v2390, %v2658
      %v2660 = vpop.f32.mrf.mxu0
      %v2661 = vpop.f32.mrf.mxu0
      %v2662 = vadd.f32 %v2390, %v2661
      %v2663 = vpop.f32.mrf.mxu0
      %2664 = vmatprep.mubr.bf16.mxu0 %v1601
      %2665 = vmatmul.mubr.bf16.gmra.mxu0 %v1600
      %v2666 = vpop.f32.mrf.mxu0
      %v2667 = vadd.f32 %v2390, %v2666
      %v2668 = vpop.f32.mrf.mxu0
      %v2669 = vpop.f32.mrf.mxu0
      %v2670 = vadd.f32 %v2390, %v2669
      %v2671 = vpop.f32.mrf.mxu0
      %2672 = vmatprep.mubr.bf16.mxu0 %v1605
      %2673 = vmatmul.mubr.bf16.gmra.mxu0 %v1604
      %v2674 = vpop.f32.mrf.mxu0
      %v2675 = vadd.f32 %v2390, %v2674
      %v2676 = vpop.f32.mrf.mxu0
      %v2677 = vpop.f32.mrf.mxu0
      %v2678 = vadd.f32 %v2390, %v2677
      %v2679 = vpop.f32.mrf.mxu0
      %2680 = vdwg.mxu0
      %2681 = vmatprep.subr.bf16.mxu0 0
      %2682 = vmatpush1.bf16.msra.mxu0 %v2543
      %2683 = vmatprep.subr.bf16.mxu0 0
      %2684 = vmatpush1.bf16.msra.mxu0 %v2542
      %2685 = vmatprep.subr.bf16.mxu0 0
      %2686 = vmatpush1.bf16.msra.mxu0 %v2541
      %2687 = vmatprep.subr.bf16.mxu0 0
      %2688 = vmatpush1.bf16.msra.mxu0 %v2540
      %2689 = vmatprep.subr.bf16.mxu0 0
      %2690 = vmatpush1.bf16.msra.mxu0 %v2539
      %2691 = vmatprep.subr.bf16.mxu0 0
      %2692 = vmatpush1.bf16.msra.mxu0 %v2538
      %2693 = vmatprep.subr.bf16.mxu0 0
      %2694 = vmatpush1.bf16.msra.mxu0 %v2537
      %2695 = vmatprep.subr.bf16.mxu0 0
      %2696 = vmatpush1.bf16.msra.mxu0 %v2536
      %2697 = vmatprep.subr.bf16.mxu0 0
      %2698 = vmatpush2.bf16.msra.mxu0 %v2551
      %2699 = vmatprep.subr.bf16.mxu0 0
      %2700 = vmatpush2.bf16.msra.mxu0 %v2550
      %2701 = vmatprep.subr.bf16.mxu0 0
      %2702 = vmatpush2.bf16.msra.mxu0 %v2549
      %2703 = vmatprep.subr.bf16.mxu0 0
      %2704 = vmatpush2.bf16.msra.mxu0 %v2548
      %2705 = vmatprep.subr.bf16.mxu0 0
      %2706 = vmatpush2.bf16.msra.mxu0 %v2547
      %2707 = vmatprep.subr.bf16.mxu0 0
      %2708 = vmatpush2.bf16.msra.mxu0 %v2546
      %2709 = vmatprep.subr.bf16.mxu0 0
      %2710 = vmatpush2.bf16.msra.mxu0 %v2545
      %2711 = vmatprep.subr.bf16.mxu0 0
      %2712 = vmatpush2.bf16.msra.mxu0 %v2544
      %2713 = vmatprep.mubr.bf16.mxu0 %v1579
      %2714 = vmatmul.mubr.bf16.gmra.mxu0 %v1578
      %v2715 = vpop.f32.mrf.mxu0
      %v2716 = vadd.f32 %v2619, %v2715
      %v2717 = vpop.f32.mrf.mxu0
      %v2718 = vpop.f32.mrf.mxu0
      %v2719 = vadd.f32 %v2622, %v2718
      %v2720 = vpop.f32.mrf.mxu0
      %2721 = vmatprep.mubr.bf16.mxu0 %v1583
      %2722 = vmatmul.mubr.bf16.gmra.mxu0 %v1582
      %v2723 = vpop.f32.mrf.mxu0
      %v2724 = vadd.f32 %v2627, %v2723
      %v2725 = vpop.f32.mrf.mxu0
      %v2726 = vpop.f32.mrf.mxu0
      %v2727 = vadd.f32 %v2630, %v2726
      %v2728 = vpop.f32.mrf.mxu0
      %2729 = vmatprep.mubr.bf16.mxu0 %v1587
      %2730 = vmatmul.mubr.bf16.gmra.mxu0 %v1586
      %v2731 = vpop.f32.mrf.mxu0
      %v2732 = vadd.f32 %v2635, %v2731
      %v2733 = vpop.f32.mrf.mxu0
      %v2734 = vpop.f32.mrf.mxu0
      %v2735 = vadd.f32 %v2638, %v2734
      %v2736 = vpop.f32.mrf.mxu0
      %2737 = vmatprep.mubr.bf16.mxu0 %v1591
      %2738 = vmatmul.mubr.bf16.gmra.mxu0 %v1590
      %v2739 = vpop.f32.mrf.mxu0
      %v2740 = vadd.f32 %v2643, %v2739
      %v2741 = vpop.f32.mrf.mxu0
      %v2742 = vpop.f32.mrf.mxu0
      %v2743 = vadd.f32 %v2646, %v2742
      %v2744 = vpop.f32.mrf.mxu0
      %2745 = vmatprep.mubr.bf16.mxu0 %v1595
      %2746 = vmatmul.mubr.bf16.gmra.mxu0 %v1594
      %v2747 = vpop.f32.mrf.mxu0
      %v2748 = vadd.f32 %v2651, %v2747
      %v2749 = vpop.f32.mrf.mxu0
      %v2750 = vpop.f32.mrf.mxu0
      %v2751 = vadd.f32 %v2654, %v2750
      %v2752 = vpop.f32.mrf.mxu0
      %2753 = vmatprep.mubr.bf16.mxu0 %v1599
      %2754 = vmatmul.mubr.bf16.gmra.mxu0 %v1598
      %v2755 = vpop.f32.mrf.mxu0
      %v2756 = vadd.f32 %v2659, %v2755
      %v2757 = vpop.f32.mrf.mxu0
      %v2758 = vpop.f32.mrf.mxu0
      %v2759 = vadd.f32 %v2662, %v2758
      %v2760 = vpop.f32.mrf.mxu0
      %2761 = vmatprep.mubr.bf16.mxu0 %v1603
      %2762 = vmatmul.mubr.bf16.gmra.mxu0 %v1602
      %v2763 = vpop.f32.mrf.mxu0
      %v2764 = vadd.f32 %v2667, %v2763
      %v2765 = vpop.f32.mrf.mxu0
      %v2766 = vpop.f32.mrf.mxu0
      %v2767 = vadd.f32 %v2670, %v2766
      %v2768 = vpop.f32.mrf.mxu0
      %2769 = vmatprep.mubr.bf16.mxu0 %v1607
      %2770 = vmatmul.mubr.bf16.gmra.mxu0 %v1606
      %v2771 = vpop.f32.mrf.mxu0
      %v2772 = vadd.f32 %v2675, %v2771
      %v2773 = vpop.f32.mrf.mxu0
      %v2774 = vpop.f32.mrf.mxu0
      %v2775 = vadd.f32 %v2678, %v2774
      %v2776 = vpop.f32.mrf.mxu0
      %2777 = vdwg.mxu0
      %v2778 = vmax.f32 %v2716, 0.0
      %v2779 = vmax.f32 %v2719, 0.0
      %v2780 = vmax.f32 %v2724, 0.0
      %v2781 = vmax.f32 %v2727, 0.0
      %v2782 = vmax.f32 %v2732, 0.0
      %v2783 = vmax.f32 %v2735, 0.0
      %v2784 = vmax.f32 %v2740, 0.0
      %v2785 = vmax.f32 %v2743, 0.0
      %v2786 = vmax.f32 %v2748, 0.0
      %v2787 = vmax.f32 %v2751, 0.0
      %v2788 = vmax.f32 %v2756, 0.0
      %v2789 = vmax.f32 %v2759, 0.0
      %v2790 = vmax.f32 %v2764, 0.0
      %v2791 = vmax.f32 %v2767, 0.0
      %v2792 = vmax.f32 %v2772, 0.0
      %v2793 = vmax.f32 %v2775, 0.0
      %v2794 = vpack.c.bf16 %v2779, %v2778
      %v2795 = vpack.c.bf16 %v2781, %v2780
      %v2796 = vpack.c.bf16 %v2783, %v2782
      %v2797 = vpack.c.bf16 %v2785, %v2784
      %v2798 = vpack.c.bf16 %v2787, %v2786
      %v2799 = vpack.c.bf16 %v2789, %v2788
      %v2800 = vpack.c.bf16 %v2791, %v2790
      %v2801 = vpack.c.bf16 %v2793, %v2792
      %v2802 = vld [vmem:[%s5] sm:$0xf]
      %v2803 = vld [vmem:[%s5 + $0x4] sm:$0xf]
      %v2804 = vld [vmem:[%s5 + $0x8] sm:$0xf]
      %v2805 = vld [vmem:[%s5 + $0xc] sm:$0xf]
      %v2806 = vld [vmem:[%s5 + $0x10] sm:$0xf]
      %v2807 = vld [vmem:[%s5 + $0x14] sm:$0xf]
      %v2808 = vld [vmem:[%s5 + $0x18] sm:$0xf]
      %v2809 = vld [vmem:[%s5 + $0x1c] sm:$0xf]
      %v2810 = vld [vmem:[%s6] sm:$0x1]
      %v2812 = vlaneseq
      %v2813 = vshrl.u32 %v2812, 7
      %v2814 = vsub.s32 0, %v2813
      %v2815 = vrot.slane %v2810, %v2814
      %v2825 = vunpack.c.l.b16 %v2802
      %v2826 = vunpack.c.l.b16 %v2803
      %v2827 = vunpack.c.l.b16 %v2804
      %v2828 = vunpack.c.l.b16 %v2805
      %v2829 = vunpack.c.l.b16 %v2806
      %v2830 = vunpack.c.l.b16 %v2807
      %v2831 = vunpack.c.l.b16 %v2808
      %v2832 = vunpack.c.l.b16 %v2809
      %v2833 = vpack.c.b16 %v2826, %v2825
      %v2834 = vpack.c.b16 %v2828, %v2827
      %v2835 = vpack.c.b16 %v2830, %v2829
      %v2836 = vpack.c.b16 %v2832, %v2831
      %vm2841 = vcmask 523264
      %v2843 = vsel %vm2841, %v2794, 0
      %v2846 = vsel %vm2841, %v2795, 0
      %v2849 = vsel %vm2841, %v2796, 0
      %v2852 = vsel %vm2841, %v2797, 0
      %v2855 = vsel %vm2841, %v2798, 0
      %v2858 = vsel %vm2841, %v2799, 0
      %v2861 = vsel %vm2841, %v2800, 0
      %v2864 = vsel %vm2841, %v2801, 0
      %2866 = vmatprep.subr.bf16.mxu0 0
      %2867 = vmatpush1.bf16.msra.mxu0 0
      %2868 = vmatprep.subr.bf16.mxu0 0
      %2869 = vmatpush1.bf16.msra.mxu0 0
      %2870 = vmatprep.subr.bf16.mxu0 0
      %2871 = vmatpush1.bf16.msra.mxu0 0
      %2872 = vmatprep.subr.bf16.mxu0 0
      %2873 = vmatpush1.bf16.msra.mxu0 0
      %2874 = vmatprep.subr.bf16.mxu0 0
      %2875 = vmatpush1.bf16.msra.mxu0 %v2836
      %2876 = vmatprep.subr.bf16.mxu0 0
      %2877 = vmatpush1.bf16.msra.mxu0 %v2835
      %2878 = vmatprep.subr.bf16.mxu0 0
      %2879 = vmatpush1.bf16.msra.mxu0 %v2834
      %2880 = vmatprep.subr.bf16.mxu0 0
      %2881 = vmatpush1.bf16.msra.mxu0 %v2833
      %2882 = vmatprep.subr.bf16.mxu0 0
      %2883 = vmatpush2.bf16.msra.mxu0 0
      %2884 = vmatprep.subr.bf16.mxu0 0
      %2885 = vmatpush2.bf16.msra.mxu0 0
      %2886 = vmatprep.subr.bf16.mxu0 0
      %2887 = vmatpush2.bf16.msra.mxu0 0
      %2888 = vmatprep.subr.bf16.mxu0 0
      %2889 = vmatpush2.bf16.msra.mxu0 0
      %2890 = vmatprep.subr.bf16.mxu0 0
      %2891 = vmatpush2.bf16.msra.mxu0 0
      %2892 = vmatprep.subr.bf16.mxu0 0
      %2893 = vmatpush2.bf16.msra.mxu0 0
      %2894 = vmatprep.subr.bf16.mxu0 0
      %2895 = vmatpush2.bf16.msra.mxu0 0
      %2896 = vmatprep.subr.bf16.mxu0 0
      %2897 = vmatpush2.bf16.msra.mxu0 0
      %2898 = vmatprep.mubr.bf16.mxu0 0
      %2899 = vmatmul.mubr.bf16.gmra.mxu0 %v2843
      %v2900 = vpop.f32.mrf.mxu0
      %v2901 = vadd.f32 %v2815, %v2900
      %v2902 = vpop.f32.mrf.mxu0
      %v2903 = vpop.f32.mrf.mxu0
      %v2904 = vadd.f32 %v2815, %v2903
      %v2905 = vpop.f32.mrf.mxu0
      %2906 = vmatprep.mubr.bf16.mxu0 0
      %2907 = vmatmul.mubr.bf16.gmra.mxu0 %v2846
      %v2908 = vpop.f32.mrf.mxu0
      %v2909 = vadd.f32 %v2815, %v2908
      %v2910 = vpop.f32.mrf.mxu0
      %v2911 = vpop.f32.mrf.mxu0
      %v2912 = vadd.f32 %v2815, %v2911
      %v2913 = vpop.f32.mrf.mxu0
      %2914 = vmatprep.mubr.bf16.mxu0 0
      %2915 = vmatmul.mubr.bf16.gmra.mxu0 %v2849
      %v2916 = vpop.f32.mrf.mxu0
      %v2917 = vadd.f32 %v2815, %v2916
      %v2918 = vpop.f32.mrf.mxu0
      %v2919 = vpop.f32.mrf.mxu0
      %v2920 = vadd.f32 %v2815, %v2919
      %v2921 = vpop.f32.mrf.mxu0
      %2922 = vmatprep.mubr.bf16.mxu0 0
      %2923 = vmatmul.mubr.bf16.gmra.mxu0 %v2852
      %v2924 = vpop.f32.mrf.mxu0
      %v2925 = vadd.f32 %v2815, %v2924
      %v2926 = vpop.f32.mrf.mxu0
      %v2927 = vpop.f32.mrf.mxu0
      %v2928 = vadd.f32 %v2815, %v2927
      %v2929 = vpop.f32.mrf.mxu0
      %2930 = vmatprep.mubr.bf16.mxu0 0
      %2931 = vmatmul.mubr.bf16.gmra.mxu0 %v2855
      %v2932 = vpop.f32.mrf.mxu0
      %v2933 = vadd.f32 %v2815, %v2932
      %v2934 = vpop.f32.mrf.mxu0
      %v2935 = vpop.f32.mrf.mxu0
      %v2936 = vadd.f32 %v2815, %v2935
      %v2937 = vpop.f32.mrf.mxu0
      %2938 = vmatprep.mubr.bf16.mxu0 0
      %2939 = vmatmul.mubr.bf16.gmra.mxu0 %v2858
      %v2940 = vpop.f32.mrf.mxu0
      %v2941 = vadd.f32 %v2815, %v2940
      %v2942 = vpop.f32.mrf.mxu0
      %v2943 = vpop.f32.mrf.mxu0
      %v2944 = vadd.f32 %v2815, %v2943
      %v2945 = vpop.f32.mrf.mxu0
      %2946 = vmatprep.mubr.bf16.mxu0 0
      %2947 = vmatmul.mubr.bf16.gmra.mxu0 %v2861
      %v2948 = vpop.f32.mrf.mxu0
      %v2949 = vadd.f32 %v2815, %v2948
      %v2950 = vpop.f32.mrf.mxu0
      %v2951 = vpop.f32.mrf.mxu0
      %v2952 = vadd.f32 %v2815, %v2951
      %v2953 = vpop.f32.mrf.mxu0
      %2954 = vmatprep.mubr.bf16.mxu0 0
      %2955 = vmatmul.mubr.bf16.gmra.mxu0 %v2864
      %v2956 = vpop.f32.mrf.mxu0
      %v2957 = vadd.f32 %v2815, %v2956
      %v2958 = vpop.f32.mrf.mxu0
      %v2959 = vpop.f32.mrf.mxu0
      %v2960 = vadd.f32 %v2815, %v2959
      %v2961 = vpop.f32.mrf.mxu0
      %2962 = vdwg.mxu0
      %v2963 = vmax.f32 %v2901, 0.0
      %v2964 = vmax.f32 %v2904, 0.0
      %v2965 = vmax.f32 %v2909, 0.0
      %v2966 = vmax.f32 %v2912, 0.0
      %v2967 = vmax.f32 %v2917, 0.0
      %v2968 = vmax.f32 %v2920, 0.0
      %v2969 = vmax.f32 %v2925, 0.0
      %v2970 = vmax.f32 %v2928, 0.0
      %v2971 = vmax.f32 %v2933, 0.0
      %v2972 = vmax.f32 %v2936, 0.0
      %v2973 = vmax.f32 %v2941, 0.0
      %v2974 = vmax.f32 %v2944, 0.0
      %v2975 = vmax.f32 %v2949, 0.0
      %v2976 = vmax.f32 %v2952, 0.0
      %v2977 = vmax.f32 %v2957, 0.0
      %v2978 = vmax.f32 %v2960, 0.0
      %v2979 = vld [vmem:[%s7] sm:$0x1]
      %v2981 = vlaneseq
      %v2982 = vshrl.u32 %v2981, 7
      %v2983 = vsub.s32 0, %v2982
      %v2984 = vrot.slane %v2979, %v2983
      %v2986 = vmul.f32 %v2963, %v2984
      %v2987 = vmul.f32 %v2964, %v2984
      %v2988 = vmul.f32 %v2965, %v2984
      %v2989 = vmul.f32 %v2966, %v2984
      %v2990 = vmul.f32 %v2967, %v2984
      %v2991 = vmul.f32 %v2968, %v2984
      %v2992 = vmul.f32 %v2969, %v2984
      %v2993 = vmul.f32 %v2970, %v2984
      %v2994 = vmul.f32 %v2971, %v2984
      %v2995 = vmul.f32 %v2972, %v2984
      %v2996 = vmul.f32 %v2973, %v2984
      %v2997 = vmul.f32 %v2974, %v2984
      %v2998 = vmul.f32 %v2975, %v2984
      %v2999 = vmul.f32 %v2976, %v2984
      %v3000 = vmul.f32 %v2977, %v2984
      %v3001 = vmul.f32 %v2978, %v2984
      %vm3002 = vcmask 261120
      %v3003 = vsel %vm3002, %v2986, 0.0
      %3004 = vadd.xlane.f32.xlu0 %v3003
      %v3005 = vpop.xlane.xlu0 %3004
      %v3006 = vsel %vm3002, %v2987, 0.0
      %3007 = vadd.xlane.f32.xlu0 %v3006
      %v3008 = vpop.xlane.xlu0 %3007
      %v3009 = vsel %vm3002, %v2988, 0.0
      %3010 = vadd.xlane.f32.xlu0 %v3009
      %v3011 = vpop.xlane.xlu0 %3010
      %v3012 = vsel %vm3002, %v2989, 0.0
      %3013 = vadd.xlane.f32.xlu0 %v3012
      %v3014 = vpop.xlane.xlu0 %3013
      %v3015 = vsel %vm3002, %v2990, 0.0
      %3016 = vadd.xlane.f32.xlu0 %v3015
      %v3017 = vpop.xlane.xlu0 %3016
      %v3018 = vsel %vm3002, %v2991, 0.0
      %3019 = vadd.xlane.f32.xlu0 %v3018
      %v3020 = vpop.xlane.xlu0 %3019
      %v3021 = vsel %vm3002, %v2992, 0.0
      %3022 = vadd.xlane.f32.xlu0 %v3021
      %v3023 = vpop.xlane.xlu0 %3022
      %v3024 = vsel %vm3002, %v2993, 0.0
      %3025 = vadd.xlane.f32.xlu0 %v3024
      %v3026 = vpop.xlane.xlu0 %3025
      %v3027 = vsel %vm3002, %v2994, 0.0
      %3028 = vadd.xlane.f32.xlu0 %v3027
      %v3029 = vpop.xlane.xlu0 %3028
      %v3030 = vsel %vm3002, %v2995, 0.0
      %3031 = vadd.xlane.f32.xlu0 %v3030
      %v3032 = vpop.xlane.xlu0 %3031
      %v3033 = vsel %vm3002, %v2996, 0.0
      %3034 = vadd.xlane.f32.xlu0 %v3033
      %v3035 = vpop.xlane.xlu0 %3034
      %v3036 = vsel %vm3002, %v2997, 0.0
      %3037 = vadd.xlane.f32.xlu0 %v3036
      %v3038 = vpop.xlane.xlu0 %3037
      %v3039 = vsel %vm3002, %v2998, 0.0
      %3040 = vadd.xlane.f32.xlu0 %v3039
      %v3041 = vpop.xlane.xlu0 %3040
      %v3042 = vsel %vm3002, %v2999, 0.0
      %3043 = vadd.xlane.f32.xlu0 %v3042
      %v3044 = vpop.xlane.xlu0 %3043
      %v3045 = vsel %vm3002, %v3000, 0.0
      %3046 = vadd.xlane.f32.xlu0 %v3045
      %v3047 = vpop.xlane.xlu0 %3046
      %v3048 = vsel %vm3002, %v3001, 0.0
      %3049 = vadd.xlane.f32.xlu0 %v3048
      %v3050 = vpop.xlane.xlu0 %3049
      %v3051 = vld [vmem:[#allocation2] sm:$0x1]
      %v3053 = vlaneseq
      %v3054 = vshrl.u32 %v3053, 7
      %v3055 = vsub.s32 0, %v3054
      %v3056 = vrot.slane %v3051, %v3055
      %v3058 = vadd.f32 %v3005, %v3056
      %v3059 = vadd.f32 %v3008, %v3056
      %v3060 = vadd.f32 %v3011, %v3056
      %v3061 = vadd.f32 %v3014, %v3056
      %v3062 = vadd.f32 %v3017, %v3056
      %v3063 = vadd.f32 %v3020, %v3056
      %v3064 = vadd.f32 %v3023, %v3056
      %v3065 = vadd.f32 %v3026, %v3056
      %v3066 = vadd.f32 %v3029, %v3056
      %v3067 = vadd.f32 %v3032, %v3056
      %v3068 = vadd.f32 %v3035, %v3056
      %v3069 = vadd.f32 %v3038, %v3056
      %v3070 = vadd.f32 %v3041, %v3056
      %v3071 = vadd.f32 %v3044, %v3056
      %v3072 = vadd.f32 %v3047, %v3056
      %v3073 = vadd.f32 %v3050, %v3056
      %v3074 = vadd.f32 %v2305, %v3058
      %v3075 = vadd.f32 %v2306, %v3059
      %v3076 = vadd.f32 %v2307, %v3060
      %v3077 = vadd.f32 %v2308, %v3061
      %v3078 = vadd.f32 %v2309, %v3062
      %v3079 = vadd.f32 %v2310, %v3063
      %v3080 = vadd.f32 %v2311, %v3064
      %v3081 = vadd.f32 %v2312, %v3065
      %v3082 = vadd.f32 %v2313, %v3066
      %v3083 = vadd.f32 %v2314, %v3067
      %v3084 = vadd.f32 %v2315, %v3068
      %v3085 = vadd.f32 %v2316, %v3069
      %v3086 = vadd.f32 %v2317, %v3070
      %v3087 = vadd.f32 %v2318, %v3071
      %v3088 = vadd.f32 %v2319, %v3072
      %v3089 = vadd.f32 %v2320, %v3073
      %v3090 = vxor.u32 %v3074, 2147483648
      %v3091 = vxor.u32 %v3075, 2147483648
      %v3092 = vxor.u32 %v3076, 2147483648
      %v3093 = vxor.u32 %v3077, 2147483648
      %v3094 = vxor.u32 %v3078, 2147483648
      %v3095 = vxor.u32 %v3079, 2147483648
      %v3096 = vxor.u32 %v3080, 2147483648
      %v3097 = vxor.u32 %v3081, 2147483648
      %v3098 = vxor.u32 %v3082, 2147483648
      %v3099 = vxor.u32 %v3083, 2147483648
      %v3100 = vxor.u32 %v3084, 2147483648
      %v3101 = vxor.u32 %v3085, 2147483648
      %v3102 = vxor.u32 %v3086, 2147483648
      %v3103 = vxor.u32 %v3087, 2147483648
      %v3104 = vxor.u32 %v3088, 2147483648
      %v3105 = vxor.u32 %v3089, 2147483648
      %v3106 = vmul.f32 %v3090, 1.442695
      %v3107 = vpow.pop %v3106
      %v3108 = vmul.f32 %v3091, 1.442695
      %v3109 = vpow.pop %v3108
      %v3110 = vmul.f32 %v3092, 1.442695
      %v3111 = vpow.pop %v3110
      %v3112 = vmul.f32 %v3093, 1.442695
      %v3113 = vpow.pop %v3112
      %v3114 = vmul.f32 %v3094, 1.442695
      %v3115 = vpow.pop %v3114
      %v3116 = vmul.f32 %v3095, 1.442695
      %v3117 = vpow.pop %v3116
      %v3118 = vmul.f32 %v3096, 1.442695
      %v3119 = vpow.pop %v3118
      %v3120 = vmul.f32 %v3097, 1.442695
      %v3121 = vpow.pop %v3120
      %v3122 = vmul.f32 %v3098, 1.442695
      %v3123 = vpow.pop %v3122
      %v3124 = vmul.f32 %v3099, 1.442695
      %v3125 = vpow.pop %v3124
      %v3126 = vmul.f32 %v3100, 1.442695
      %v3127 = vpow.pop %v3126
      %v3128 = vmul.f32 %v3101, 1.442695
      %v3129 = vpow.pop %v3128
      %v3130 = vmul.f32 %v3102, 1.442695
      %v3131 = vpow.pop %v3130
      %v3132 = vmul.f32 %v3103, 1.442695
      %v3133 = vpow.pop %v3132
      %v3134 = vmul.f32 %v3104, 1.442695
      %v3135 = vpow.pop %v3134
      %v3136 = vmul.f32 %v3105, 1.442695
      %v3137 = vpow.pop %v3136
      %v3138 = vadd.f32 %v3107, 1.0
      %v3139 = vadd.f32 %v3109, 1.0
      %v3140 = vadd.f32 %v3111, 1.0
      %v3141 = vadd.f32 %v3113, 1.0
      %v3142 = vadd.f32 %v3115, 1.0
      %v3143 = vadd.f32 %v3117, 1.0
      %v3144 = vadd.f32 %v3119, 1.0
      %v3145 = vadd.f32 %v3121, 1.0
      %v3146 = vadd.f32 %v3123, 1.0
      %v3147 = vadd.f32 %v3125, 1.0
      %v3148 = vadd.f32 %v3127, 1.0
      %v3149 = vadd.f32 %v3129, 1.0
      %v3150 = vadd.f32 %v3131, 1.0
      %v3151 = vadd.f32 %v3133, 1.0
      %v3152 = vadd.f32 %v3135, 1.0
      %v3153 = vadd.f32 %v3137, 1.0
      %v3154 = vrcp.pop %v3138
      %v3155 = vmul.f32 1.0, %v3154
      %v3156 = vrcp.pop %v3139
      %v3157 = vmul.f32 1.0, %v3156
      %v3158 = vrcp.pop %v3140
      %v3159 = vmul.f32 1.0, %v3158
      %v3160 = vrcp.pop %v3141
      %v3161 = vmul.f32 1.0, %v3160
      %v3162 = vrcp.pop %v3142
      %v3163 = vmul.f32 1.0, %v3162
      %v3164 = vrcp.pop %v3143
      %v3165 = vmul.f32 1.0, %v3164
      %v3166 = vrcp.pop %v3144
      %v3167 = vmul.f32 1.0, %v3166
      %v3168 = vrcp.pop %v3145
      %v3169 = vmul.f32 1.0, %v3168
      %v3170 = vrcp.pop %v3146
      %v3171 = vmul.f32 1.0, %v3170
      %v3172 = vrcp.pop %v3147
      %v3173 = vmul.f32 1.0, %v3172
      %v3174 = vrcp.pop %v3148
      %v3175 = vmul.f32 1.0, %v3174
      %v3176 = vrcp.pop %v3149
      %v3177 = vmul.f32 1.0, %v3176
      %v3178 = vrcp.pop %v3150
      %v3179 = vmul.f32 1.0, %v3178
      %v3180 = vrcp.pop %v3151
      %v3181 = vmul.f32 1.0, %v3180
      %v3182 = vrcp.pop %v3152
      %v3183 = vmul.f32 1.0, %v3182
      %v3184 = vrcp.pop %v3153
      %v3185 = vmul.f32 1.0, %v3184
      %vm3186 = vcmask 7168
      %3187 = vst.msk [vmem:[%s336] sm:$0xff] %vm3186, %v3155
      %3188 = vst.msk [vmem:[%s336 + $0x8] sm:$0xff] %vm3186, %v3157
      %3189 = vst.msk [vmem:[%s336 + $0x10] sm:$0xff] %vm3186, %v3159
      %3190 = vst.msk [vmem:[%s336 + $0x18] sm:$0xff] %vm3186, %v3161
      %3191 = vst.msk [vmem:[%s336 + $0x20] sm:$0xff] %vm3186, %v3163
      %3192 = vst.msk [vmem:[%s336 + $0x28] sm:$0xff] %vm3186, %v3165
      %3193 = vst.msk [vmem:[%s336 + $0x30] sm:$0xff] %vm3186, %v3167
      %3194 = vst.msk [vmem:[%s336 + $0x38] sm:$0xff] %vm3186, %v3169
      %3195 = vst.msk [vmem:[%s336 + $0x40] sm:$0xff] %vm3186, %v3171
      %3196 = vst.msk [vmem:[%s336 + $0x48] sm:$0xff] %vm3186, %v3173
      %3197 = vst.msk [vmem:[%s336 + $0x50] sm:$0xff] %vm3186, %v3175
      %3198 = vst.msk [vmem:[%s336 + $0x58] sm:$0xff] %vm3186, %v3177
      %3199 = vst.msk [vmem:[%s336 + $0x60] sm:$0xff] %vm3186, %v3179
      %3200 = vst.msk [vmem:[%s336 + $0x68] sm:$0xff] %vm3186, %v3181
      %3201 = vst.msk [vmem:[%s336 + $0x70] sm:$0xff] %vm3186, %v3183
      %3202 = vst.msk [vmem:[%s336 + $0x78] sm:$0xff] %vm3186, %v3185
      %s3203 = smul.u32 16, %s22
      %p3204 = scmp.lt.s32.totalorder %s3203, 31
      %s3205 = scalar_select %p3204, %s3203, 31
      %s3206 = smul.addr %s3205, 8
      %s3207 = scalar_lea.vmem %s9, %s3206
      // Predicated region
      $region57: #{tpu_custom_call.1} parent=55 // pred_check
        %p3208 = pneg %p234
      $region58: #{tpu_custom_call.1} parent=55 // pred_check_branch
        %3210 = sbr.rel (%p3208) target = $region60
      $region59: #{tpu_custom_call.1} parent=55 // pred_region
        %s3211 = smul.u32 16, %s22
      $region60: #{tpu_custom_call.1} parent=55 // pred_fallthru
        _
    $region56: #{tpu_custom_call.1} parent=5 // pred_fallthru
      _
    %p3212 = scmp.le.s32.totalorder 2, %s17
    // Predicated region
    $region61: #{tpu_custom_call.1} parent=5 // pred_check
      %p3213 = pneg %p3212
    $region62: #{tpu_custom_call.1} parent=5 // pred_check_branch
      %3215 = sbr.rel (%p3213) target = $region64
    $region63: #{tpu_custom_call.1} parent=5 // pred_region
      %s3216 = ssub.s32 %s17, 2
      // Predicated region
      $region65: #{tpu_custom_call.1} parent=63 // pred_check
        %p3217 = pneg %p240
      $region66: #{tpu_custom_call.1} parent=63 // pred_check_branch
        %3219 = sbr.rel (%p3217) target = $region68
      $region67: #{tpu_custom_call.1} parent=63 // pred_region
        %s3220 = smul.u32 16, %s23
        %p3221 = scmp.lt.s32.totalorder %s3220, 31
        %s3222 = scalar_select %p3221, %s3220, 31
        %s3223 = smul.addr %s3222, 8
        %s3224 = scalar_lea.vmem %s9, %s3223
      $region68: #{tpu_custom_call.1} parent=63 // pred_fallthru
        _
    $region64: #{tpu_custom_call.1} parent=5 // pred_fallthru
      _
  $region6: #{tpu_custom_call.1} parent=0 // loop_footer
    %s21 = sadd.s32 1, %s17
  $region7: #{tpu_custom_call.1} parent=0 // loop_footer_branch
    %16 = sbr.rel target = $region3
  $region8: #{tpu_custom_call.1} parent=0 // loop_exit
    _

</llo_original>
